<compile_context>
chip_gen: v7x
topology: tpu7x:2x2x1
jax: 0.10.0
libtpu: 0.0.40
codegen_flags: <defaults>
</compile_context>

<pallas_src>
import functools
import math

import jax
import jax.numpy as jnp
import numpy as np
from jax.experimental import pallas as pl
from jax.experimental.pallas import tpu as pltpu


_EPS = 1e-6
_NEG_INF = -1e18


# --------------------------- in-kernel helpers ------------------------------

def _mm(a, b):
    """2-D MXU matmul: bf16 operands, f32 accumulation."""
    return jnp.dot(a.astype(jnp.bfloat16), b.astype(jnp.bfloat16),
                   preferred_element_type=jnp.float32)


def _bmm_nt(a, b):
    """[B,M,D] x [B,N,D] -> [B,M,N] (contract last dims, batched)."""
    return jax.lax.dot_general(
        a.astype(jnp.bfloat16), b.astype(jnp.bfloat16),
        (((2,), (2,)), ((0,), (0,))), preferred_element_type=jnp.float32)


def _bmm(a, b):
    """[B,M,K] x [B,K,N] -> [B,M,N] (batched)."""
    return jax.lax.dot_general(
        a.astype(jnp.bfloat16), b.astype(jnp.bfloat16),
        (((2,), (1,)), ((0,), (0,))), preferred_element_type=jnp.float32)


def _ln(x, g, b, eps=_EPS):
    """LayerNorm of this repo: unbiased (n-1) std, eps added to std."""
    mean = jnp.mean(x, axis=-1, keepdims=True)
    c = x - mean
    std = jnp.sqrt(jnp.sum(c * c, axis=-1, keepdims=True) / (x.shape[-1] - 1))
    return g * c * pl.reciprocal(std + eps, approx=True) + b


def _softmax(logits):
    mx = jnp.max(logits, axis=-1, keepdims=True)
    e = jnp.exp(logits - mx)
    return e * pl.reciprocal(jnp.sum(e, axis=-1, keepdims=True), approx=True)


# ------------------------------ fused kernel --------------------------------

def _decoder_kernel(inputs_ref, timing_ref, emb_ref,
                    enc_ref, pad_src_ref, pad_trg_ref,
                    wqkv_s_ref, wo_s_ref, wq_c_ref, wkv_c_ref, wo_c_ref,
                    w1_ref, b1_ref, w2_ref, b2_ref,
                    lng_ref, lnb_ref, fing_ref, finb_ref,
                    y_ref, aw_ref, x_sc,
                    *, num_heads, kd, vd, ksz, num_layers):
    l = pl.program_id(1)
    Bb, T, H = x_sc.shape
    S = enc_ref.shape[1]
    BT = Bb * T
    dk = kd // num_heads
    dv = vd // num_heads
    scale = float(dk) ** -0.5

    # ---------- embedding projection + timing signal (first layer only) -----
    @pl.when(l == 0)
    def _():
        E = inputs_ref.shape[-1]
        x0 = _mm(inputs_ref[...].reshape(BT, E), emb_ref[...]).reshape(Bb, T, H)
        x_sc[...] = x0 + timing_ref[...]

    lng = lng_ref[0]                                    # [3, H]: dec, enc, ffn
    lnb = lnb_ref[0]

    # ------------------------------ self attention --------------------------
    x = x_sc[...]                                       # [Bb, T, H] f32
    xn = _ln(x, lng[0:1], lnb[0:1])
    qkv = _mm(xn.reshape(BT, H), wqkv_s_ref[0]).reshape(Bb, T, 2 * kd + vd)

    rows = jax.lax.broadcasted_iota(jnp.int32, (T, T), 0)
    cols = jax.lax.broadcasted_iota(jnp.int32, (T, T), 1)
    dec_mask = jnp.logical_or((cols > rows)[None, :, :],
                              pad_trg_ref[...] > 0.0)   # [Bb, T, T]

    wo_s = wo_s_ref[0]                                  # [vd, H] bf16
    acc = jnp.zeros((BT, H), jnp.float32)
    for h in range(num_heads):                          # static, few heads
        qh = qkv[:, :, h * dk:(h + 1) * dk] * scale
        kh = qkv[:, :, kd + h * dk:kd + (h + 1) * dk]
        vh = qkv[:, :, 2 * kd + h * dv:2 * kd + (h + 1) * dv]
        logits = jnp.where(dec_mask, _NEG_INF, _bmm_nt(qh, kh))     # f32
        ctx = _bmm(_softmax(logits), vh)                # [Bb, T, dv]
        acc = acc + _mm(ctx.reshape(BT, dv), wo_s[h * dv:(h + 1) * dv, :])
    x = x + acc.reshape(Bb, T, H)

    # ------------------------------ cross attention -------------------------
    xn = _ln(x, lng[1:2], lnb[1:2])
    q = _mm(xn.reshape(BT, H), wq_c_ref[0]).reshape(Bb, T, kd)
    enc = enc_ref[...]                                  # [Bb, S, He]
    wkv = wkv_c_ref[0]                                  # [He, kd+vd]
    # batched matmul (avoids an S-unaligned reshape of the encoder block)
    kv = _bmm(enc, jnp.broadcast_to(wkv, (Bb,) + wkv.shape))  # [Bb, S, kd+vd]
    src_mask = jnp.broadcast_to(pad_src_ref[...] > 0.0, (Bb, T, S))

    wo_c = wo_c_ref[0]
    aw = jnp.zeros((Bb, T, S), jnp.float32)
    acc = jnp.zeros((BT, H), jnp.float32)
    for h in range(num_heads):
        qh = q[:, :, h * dk:(h + 1) * dk] * scale
        kh = kv[:, :, h * dk:(h + 1) * dk]
        vh = kv[:, :, kd + h * dv:kd + (h + 1) * dv]
        logits = jnp.where(src_mask, _NEG_INF, _bmm_nt(qh, kh))     # f32
        aw = aw + logits
        ctx = _bmm(_softmax(logits), vh)
        acc = acc + _mm(ctx.reshape(BT, dv), wo_c[h * dv:(h + 1) * dv, :])
    x = x + acc.reshape(Bb, T, H)

    # attn_dist (head-mean of masked logits) only leaves VMEM for last layer.
    @pl.when(l == num_layers - 1)
    def _():
        aw_ref[...] = aw * (1.0 / num_heads)

    # ------------------------- FFN (causal convs, k=ksz) --------------------
    xn = _ln(x, lng[2:3], lnb[2:3])
    t_mod = jax.lax.broadcasted_iota(jnp.int32, (BT, 1), 0) % T

    def shift_down(a2, shift):
        # rows move down by `shift` inside each length-T segment, zeros enter.
        # TODO(synk): could route the shift through pltpu.roll(axis=0)+mask;
        # slice+concat kept for exact jnp semantics at these tiny shapes.
        if shift == 0:
            return a2
        z = jnp.zeros((shift, a2.shape[1]), jnp.float32)
        s = jnp.concatenate([z, a2[:BT - shift, :]], axis=0)
        return jnp.where(t_mod < shift, 0.0, s)

    def causal_conv(a2, w_ref, b_ref):
        # y[t] = sum_k x[t - (ksz-1) + k] @ w[k] + b   (left zero padding)
        out = None
        for k in range(ksz):
            term = _mm(shift_down(a2, ksz - 1 - k), w_ref[0, k])
            out = term if out is None else out + term
        return out + b_ref[0]

    h1 = jnp.maximum(causal_conv(xn.reshape(BT, H), w1_ref, b1_ref), 0.0)
    y_ffn = causal_conv(h1, w2_ref, b2_ref)
    x = x + y_ffn.reshape(Bb, T, H)
    x_sc[...] = x                                       # carry to next layer

    # --------------------------- final LayerNorm -----------------------------
    @pl.when(l == num_layers - 1)
    def _():
        y_ref[...] = _ln(x, fing_ref[...], finb_ref[...])


# ------------------------------ wrapper --------------------------------------

def decoder_forward(params, inputs, encoder_output, mask_src, mask_trg,
                    num_heads, block_b=None):
    """inputs: [B,T,E]; encoder_output: [B,S,He];
    mask_src: [B,1,S]; mask_trg: [B,1,T]  (1.0 == PAD)."""
    B, T, E = inputs.shape
    S, He = encoder_output.shape[1], encoder_output.shape[2]
    H = params['emb_proj'].shape[1]
    L = params['self_wqkv'].shape[0]
    kd = params['cross_wq'].shape[-1]
    vd = params['self_wo'].shape[1]
    K = params['ffn_w1'].shape[1]
    FS = params['ffn_w1'].shape[-1]

    # batch rows per grid step: aim for >=128 matmul rows while dividing B.
    if block_b is None:
        target = max(1, pl.cdiv(128, T))
        block_b = 1
        for cand in range(min(B, target), 0, -1):
            if B % cand == 0:
                block_b = cand
                break
    nb = B // block_b

    timing = params['timing_signal'][:, :T, :]
    fin_g = params['ln_g'].reshape(1, H)
    fin_b = params['ln_b'].reshape(1, H)

    operands = (inputs, timing, params['emb_proj'],
                encoder_output, mask_src, mask_trg,
                params['self_wqkv'], params['self_wo'],
                params['cross_wq'], params['cross_wkv'], params['cross_wo'],
                params['ffn_w1'], params['ffn_b1'],
                params['ffn_w2'], params['ffn_b2'],
                params['ln_g_stack'], params['ln_b_stack'], fin_g, fin_b)

    in_specs = [
        pl.BlockSpec((block_b, T, E), lambda b, l: (b, 0, 0)),       # inputs
        pl.BlockSpec((1, T, H), lambda b, l: (0, 0, 0)),             # timing
        pl.BlockSpec((E, H), lambda b, l: (0, 0)),                   # emb_proj
        pl.BlockSpec((block_b, S, He), lambda b, l: (b, 0, 0)),      # enc out
        pl.BlockSpec((block_b, 1, S), lambda b, l: (b, 0, 0)),       # mask_src
        pl.BlockSpec((block_b, 1, T), lambda b, l: (b, 0, 0)),       # mask_trg
        pl.BlockSpec((1, H, 2 * kd + vd), lambda b, l: (l, 0, 0)),   # self qkv
        pl.BlockSpec((1, vd, H), lambda b, l: (l, 0, 0)),            # self wo
        pl.BlockSpec((1, H, kd), lambda b, l: (l, 0, 0)),            # cross wq
        pl.BlockSpec((1, H, kd + vd), lambda b, l: (l, 0, 0)),       # cross kv
        pl.BlockSpec((1, vd, H), lambda b, l: (l, 0, 0)),            # cross wo
        pl.BlockSpec((1, K, H, FS), lambda b, l: (l, 0, 0, 0)),      # ffn w1
        pl.BlockSpec((1, 1, FS), lambda b, l: (l, 0, 0)),            # ffn b1
        pl.BlockSpec((1, K, FS, H), lambda b, l: (l, 0, 0, 0)),      # ffn w2
        pl.BlockSpec((1, 1, H), lambda b, l: (l, 0, 0)),             # ffn b2
        pl.BlockSpec((1, 3, H), lambda b, l: (l, 0, 0)),             # ln gammas
        pl.BlockSpec((1, 3, H), lambda b, l: (l, 0, 0)),             # ln betas
        pl.BlockSpec((1, H), lambda b, l: (0, 0)),                   # final g
        pl.BlockSpec((1, H), lambda b, l: (0, 0)),                   # final b
    ]
    out_specs = (
        pl.BlockSpec((block_b, T, H), lambda b, l: (b, 0, 0)),
        pl.BlockSpec((block_b, T, S), lambda b, l: (b, 0, 0)),
    )

    # VMEM budget derived from actual block sizes (double-buffered) + scratch,
    # with 4x headroom for in-kernel temporaries; capped well under v7x 64MiB.
    blk_bytes = sum(int(np.prod(spec.block_shape)) * op.dtype.itemsize
                    for op, spec in zip(operands, in_specs))
    blk_bytes += block_b * T * (H + S) * 4                        # outputs
    scratch_bytes = block_b * T * H * 4
    vmem_limit = int(min(max(4 * (2 * blk_bytes + scratch_bytes),
                             16 * 1024 * 1024), 32 * 1024 * 1024))

    kernel = functools.partial(_decoder_kernel, num_heads=num_heads,
                               kd=kd, vd=vd, ksz=K, num_layers=L)
    y, aw = pl.pallas_call(
        kernel,
        out_shape=(jax.ShapeDtypeStruct((B, T, H), jnp.float32),
                   jax.ShapeDtypeStruct((B, T, S), jnp.float32)),
        grid=(nb, L),
        in_specs=in_specs,
        out_specs=out_specs,
        scratch_shapes=[pltpu.VMEM((block_b, T, H), jnp.float32)],
        compiler_params=pltpu.CompilerParams(
            dimension_semantics=("parallel", "arbitrary"),
            vmem_limit_bytes=vmem_limit),
    )(*operands)
    return y, aw


# ------------------------------ initialization ------------------------------

def gen_timing_signal(length, channels, min_timescale=1.0, max_timescale=1.0e4):
    position = np.arange(length)
    num_timescales = channels // 2
    log_timescale_increment = (math.log(float(max_timescale) / float(min_timescale))
                               / (float(num_timescales) - 1))
    inv_timescales = min_timescale * np.exp(
        np.arange(num_timescales).astype(np.float64) * -log_timescale_increment)
    scaled_time = np.expand_dims(position, 1) * np.expand_dims(inv_timescales, 0)
    signal = np.concatenate([np.sin(scaled_time), np.cos(scaled_time)], axis=1)
    signal = np.pad(signal, [[0, 0], [0, channels % 2]], 'constant')
    return jnp.asarray(signal.reshape(1, length, channels), dtype=jnp.float32)


def init_params(key, embedding_size, hidden_size, num_layers, num_heads,
                total_key_depth, total_value_depth, filter_size, max_length,
                conv_ksize=3):
    def nrm(k, shape, scale=0.08):
        return scale * jax.random.normal(k, shape, dtype=jnp.float32)

    H, KD, VD, FS, K = (hidden_size, total_key_depth, total_value_depth,
                        filter_size, conv_ksize)
    keys = iter(jax.random.split(key, 2 + num_layers * 12))
    emb = nrm(next(keys), (embedding_size, H))

    wqkv_l, wo_s_l, wq_c_l, wkv_c_l, wo_c_l = [], [], [], [], []
    w1_l, b1_l, w2_l, b2_l = [], [], [], []
    for _ in range(num_layers):
        wq_s = nrm(next(keys), (H, KD)); wk_s = nrm(next(keys), (H, KD))
        wv_s = nrm(next(keys), (H, VD)); wo_s = nrm(next(keys), (VD, H))
        wq_c = nrm(next(keys), (H, KD)); wk_c = nrm(next(keys), (H, KD))
        wv_c = nrm(next(keys), (H, VD)); wo_c = nrm(next(keys), (VD, H))
        wqkv_l.append(jnp.concatenate([wq_s, wk_s, wv_s], axis=1))
        wo_s_l.append(wo_s)
        wq_c_l.append(wq_c)
        wkv_c_l.append(jnp.concatenate([wk_c, wv_c], axis=1))
        wo_c_l.append(wo_c)
        w1_l.append(nrm(next(keys), (K, H, FS)))
        b1_l.append(nrm(next(keys), (1, FS)))
        w2_l.append(nrm(next(keys), (K, FS, H)))
        b2_l.append(nrm(next(keys), (1, H)))

    bf16 = jnp.bfloat16
    return {
        'emb_proj': emb.astype(bf16),
        'timing_signal': gen_timing_signal(max_length, H),
        'ln_g': jnp.ones((H,), jnp.float32),
        'ln_b': jnp.zeros((H,), jnp.float32),
        # per-layer weights stacked along a leading L axis; matmul weights bf16
        'self_wqkv': jnp.stack(wqkv_l).astype(bf16),
        'self_wo': jnp.stack(wo_s_l).astype(bf16),
        'cross_wq': jnp.stack(wq_c_l).astype(bf16),
        'cross_wkv': jnp.stack(wkv_c_l).astype(bf16),
        'cross_wo': jnp.stack(wo_c_l).astype(bf16),
        'ffn_w1': jnp.stack(w1_l).astype(bf16),
        'ffn_b1': jnp.stack(b1_l),
        'ffn_w2': jnp.stack(w2_l).astype(bf16),
        'ffn_b2': jnp.stack(b2_l),
        'ln_g_stack': jnp.ones((num_layers, 3, H), jnp.float32),
        'ln_b_stack': jnp.zeros((num_layers, 3, H), jnp.float32),
    }


# ------------------------- pure-JAX reference (check) ------------------------

def _ref_ln(x, g, b, eps=_EPS):
    mean = jnp.mean(x, axis=-1, keepdims=True)
    c = x - mean
    std = jnp.sqrt(jnp.sum(c * c, axis=-1, keepdims=True) / (x.shape[-1] - 1))
    return g * c / (std + eps) + b


def _ref_mha(q_in, k_in, v_in, mask, wq, wk, wv, wo, num_heads):
    B, Tq, _ = q_in.shape
    Tk = k_in.shape[1]
    q = q_in @ wq
    k = k_in @ wk
    v = v_in @ wv
    dk = q.shape[-1] // num_heads
    dv = v.shape[-1] // num_heads
    q = q.reshape(B, Tq, num_heads, dk).transpose(0, 2, 1, 3) * (dk ** -0.5)
    k = k.reshape(B, Tk, num_heads, dk).transpose(0, 2, 1, 3)
    v = v.reshape(B, Tk, num_heads, dv).transpose(0, 2, 1, 3)
    logits = jnp.einsum('bhqd,bhkd->bhqk', q, k)
    logits = jnp.where(mask[:, None, :, :], _NEG_INF, logits)
    aw = jnp.sum(logits, axis=1) / num_heads
    w = jax.nn.softmax(logits, axis=-1)
    ctx = jnp.einsum('bhqk,bhkd->bhqd', w, v)
    ctx = ctx.transpose(0, 2, 1, 3).reshape(B, Tq, num_heads * dv)
    return ctx @ wo, aw


def _ref_conv(x, w, b):
    K = w.shape[0]
    T = x.shape[1]
    xp = jnp.pad(x, ((0, 0), (K - 1, 0), (0, 0)))
    return sum(jnp.einsum('btc,cd->btd', xp[:, k:k + T, :], w[k])
               for k in range(K)) + b


def ref_forward(params, inputs, enc_out, mask_src, mask_trg, num_heads):
    f32 = jnp.float32
    B, T, _ = inputs.shape
    S = enc_out.shape[1]
    L = params['self_wqkv'].shape[0]
    kd = params['cross_wq'].shape[-1]
    subsequent = jnp.triu(jnp.ones((1, T, T), f32), k=1)
    dec_mask = (mask_trg + subsequent) > 0
    src_mask = jnp.broadcast_to(mask_src > 0, (B, T, S))
    x = inputs @ params['emb_proj'].astype(f32) + params['timing_signal'][:, :T, :]
    attn = None
    for l in range(L):
        wqkv = params['self_wqkv'][l].astype(f32)
        wq, wk, wv = wqkv[:, :kd], wqkv[:, kd:2 * kd], wqkv[:, 2 * kd:]
        xn = _ref_ln(x, params['ln_g_stack'][l, 0], params['ln_b_stack'][l, 0])
        y, _ = _ref_mha(xn, xn, xn, dec_mask, wq, wk, wv,
                        params['self_wo'][l].astype(f32), num_heads)
        x = x + y

        wkv = params['cross_wkv'][l].astype(f32)
        wk, wv = wkv[:, :kd], wkv[:, kd:]
        xn = _ref_ln(x, params['ln_g_stack'][l, 1], params['ln_b_stack'][l, 1])
        y, attn = _ref_mha(xn, enc_out, enc_out, src_mask,
                           params['cross_wq'][l].astype(f32), wk, wv,
                           params['cross_wo'][l].astype(f32), num_heads)
        x = x + y

        xn = _ref_ln(x, params['ln_g_stack'][l, 2], params['ln_b_stack'][l, 2])
        h = jax.nn.relu(_ref_conv(xn, params['ffn_w1'][l].astype(f32),
                                  params['ffn_b1'][l]))
        y = _ref_conv(h, params['ffn_w2'][l].astype(f32), params['ffn_b2'][l])
        x = x + y
    return _ref_ln(x, params['ln_g'], params['ln_b']), attn


# ---------------------------------- main -------------------------------------

if __name__ == "__main__":
    # Decoder(embedding_size=32, hidden_size=32, num_layers=2, num_heads=2,
    #         total_key_depth=32, total_value_depth=32, filter_size=64)
    E, Hd, L, NH, KD, VD, FS, MAXLEN = 32, 32, 2, 2, 32, 32, 64, 64
    B, T, S = 2, 8, 10

    key = jax.random.PRNGKey(0)
    kp, ki, ke = jax.random.split(key, 3)
    params = init_params(kp, E, Hd, L, NH, KD, VD, FS, MAXLEN)

    inputs = jax.random.normal(ki, (B, T, E), dtype=jnp.float32)
    encoder_output = jax.random.normal(ke, (B, S, Hd), dtype=jnp.float32)
    # padding masks (1.0 = PAD / masked), like `batch.eq(PAD_idx).unsqueeze(1)`
    mask_src = jnp.zeros((B, 1, S), jnp.float32).at[1, 0, 8:].set(1.0)
    mask_trg = jnp.zeros((B, 1, T), jnp.float32).at[1, 0, 6:].set(1.0)

    fwd = jax.jit(functools.partial(decoder_forward, num_heads=NH))
    y, attn_dist = fwd(params, inputs, encoder_output, mask_src, mask_trg)
    y = jax.block_until_ready(y)
    attn_dist = jax.block_until_ready(attn_dist)

    assert y.shape == (B, T, Hd)
    assert attn_dist.shape == (B, T, S)
    assert bool(jnp.all(jnp.isfinite(y)))

    # Kernel matmuls use bf16 operands (weights stored bf16) with f32
    # accumulation; reference uses f32 activations, so tolerance covers
    # bf16 activation rounding (~0.4% rel).
    y_ref, aw_ref = ref_forward(params, inputs, encoder_output,
                                mask_src, mask_trg, NH)
    np.testing.assert_allclose(np.asarray(y), np.asarray(y_ref),
                               rtol=5e-2, atol=5e-2)
    np.testing.assert_allclose(np.asarray(attn_dist), np.asarray(aw_ref),
                               rtol=5e-2, atol=5e-2)

    print("KERNEL_OK")
</pallas_src>

<mosaic_0001>
module attributes {stable_mosaic.version = 11 : i64} {
  func.func @_decoder_kernel(%arg0: i32, %arg1: i32, %arg2: memref<2x8x32xf32, #tpu.memory_space<vmem>>, %arg3: memref<1x8x32xf32, #tpu.memory_space<vmem>>, %arg4: memref<32x32xbf16, #tpu.memory_space<vmem>>, %arg5: memref<2x10x32xf32, #tpu.memory_space<vmem>>, %arg6: memref<2x1x10xf32, #tpu.memory_space<vmem>>, %arg7: memref<2x1x8xf32, #tpu.memory_space<vmem>>, %arg8: memref<1x32x96xbf16, #tpu.memory_space<vmem>>, %arg9: memref<1x32x32xbf16, #tpu.memory_space<vmem>>, %arg10: memref<1x32x32xbf16, #tpu.memory_space<vmem>>, %arg11: memref<1x32x64xbf16, #tpu.memory_space<vmem>>, %arg12: memref<1x32x32xbf16, #tpu.memory_space<vmem>>, %arg13: memref<1x3x32x64xbf16, #tpu.memory_space<vmem>>, %arg14: memref<1x1x64xf32, #tpu.memory_space<vmem>>, %arg15: memref<1x3x64x32xbf16, #tpu.memory_space<vmem>>, %arg16: memref<1x1x32xf32, #tpu.memory_space<vmem>>, %arg17: memref<1x3x32xf32, #tpu.memory_space<vmem>>, %arg18: memref<1x3x32xf32, #tpu.memory_space<vmem>>, %arg19: memref<1x32xf32, #tpu.memory_space<vmem>>, %arg20: memref<1x32xf32, #tpu.memory_space<vmem>>, %arg21: memref<2x8x32xf32, #tpu.memory_space<vmem>>, %arg22: memref<2x8x10xf32, #tpu.memory_space<vmem>>, %arg23: memref<2x8x32xf32, #tpu.memory_space<vmem>>) attributes {dimension_semantics = [#tpu.dimension_semantics<parallel>, #tpu.dimension_semantics<arbitrary>], iteration_bounds = array<i64: 1, 2>, scalar_prefetch = 0 : i64, scratch_operands = 1 : i64, tpu.core_type = #tpu.core_type<tc>, window_params = [{transform_indices = @transform_0, window_bounds = array<i64: 2, 8, 32>}, {pipeline_mode = #tpu.pipeline_mode<synchronous>, transform_indices = @transform_1, window_bounds = array<i64: 1, 8, 32>}, {pipeline_mode = #tpu.pipeline_mode<synchronous>, transform_indices = @transform_2, window_bounds = array<i64: 32, 32>}, {transform_indices = @transform_3, window_bounds = array<i64: 2, 10, 32>}, {transform_indices = @transform_4, window_bounds = array<i64: 2, 1, 10>}, {transform_indices = @transform_5, window_bounds = array<i64: 2, 1, 8>}, {transform_indices = @transform_6, window_bounds = array<i64: 1, 32, 96>}, {transform_indices = @transform_7, window_bounds = array<i64: 1, 32, 32>}, {transform_indices = @transform_8, window_bounds = array<i64: 1, 32, 32>}, {transform_indices = @transform_9, window_bounds = array<i64: 1, 32, 64>}, {transform_indices = @transform_10, window_bounds = array<i64: 1, 32, 32>}, {transform_indices = @transform_11, window_bounds = array<i64: 1, 3, 32, 64>}, {transform_indices = @transform_12, window_bounds = array<i64: 1, 1, 64>}, {transform_indices = @transform_13, window_bounds = array<i64: 1, 3, 64, 32>}, {transform_indices = @transform_14, window_bounds = array<i64: 1, 1, 32>}, {transform_indices = @transform_15, window_bounds = array<i64: 1, 3, 32>}, {transform_indices = @transform_16, window_bounds = array<i64: 1, 3, 32>}, {pipeline_mode = #tpu.pipeline_mode<synchronous>, transform_indices = @transform_17, window_bounds = array<i64: 1, 32>}, {pipeline_mode = #tpu.pipeline_mode<synchronous>, transform_indices = @transform_18, window_bounds = array<i64: 1, 32>}, {transform_indices = @transform_19, window_bounds = array<i64: 2, 8, 32>}, {transform_indices = @transform_20, window_bounds = array<i64: 2, 8, 10>}]} {
    %c0_i32 = arith.constant 0 : i32
    %0 = arith.cmpi eq, %arg1, %c0_i32 : i32
    %1 = arith.extui %0 : i1 to i32
    %c0_i32_0 = arith.constant 0 : i32
    %2 = arith.cmpi ne, %1, %c0_i32_0 : i32
    scf.if %2 {
      %c0_140 = arith.constant 0 : index
      %c0_141 = arith.constant 0 : index
      %c0_142 = arith.constant 0 : index
      %343 = vector.load %arg2[%c0_140, %c0_141, %c0_142] : memref<2x8x32xf32, #tpu.memory_space<vmem>>, vector<2x8x32xf32>
      %344 = vector.shape_cast %343 : vector<2x8x32xf32> to vector<16x32xf32>
      %c0_143 = arith.constant 0 : index
      %c0_144 = arith.constant 0 : index
      %345 = vector.load %arg4[%c0_143, %c0_144] : memref<32x32xbf16, #tpu.memory_space<vmem>>, vector<32x32xbf16>
      %346 = arith.truncf %344 : vector<16x32xf32> to vector<16x32xbf16>
      %cst_145 = arith.constant dense<0.000000e+00> : vector<16x32xf32>
      %347 = tpu.matmul %346, %345, %cst_145 {dimension_numbers = #tpu.dot_dimension_numbers<[1], [0], [0], [1], [0, 0, 1, 1], [], []>} : vector<16x32xbf16>, vector<32x32xbf16>, vector<16x32xf32> -> vector<16x32xf32>
      %348 = vector.shape_cast %347 : vector<16x32xf32> to vector<2x8x32xf32>
      %c0_146 = arith.constant 0 : index
      %c0_147 = arith.constant 0 : index
      %c0_148 = arith.constant 0 : index
      %349 = vector.load %arg3[%c0_146, %c0_147, %c0_148] : memref<1x8x32xf32, #tpu.memory_space<vmem>>, vector<1x8x32xf32>
      %350 = vector.broadcast %349 : vector<1x8x32xf32> to vector<2x8x32xf32>
      %351 = arith.addf %348, %350 : vector<2x8x32xf32>
      %c0_149 = arith.constant 0 : index
      %c0_150 = arith.constant 0 : index
      %c0_151 = arith.constant 0 : index
      %352 = vector.load %arg23[%c0_149, %c0_150, %c0_151] : memref<2x8x32xf32, #tpu.memory_space<vmem>>, vector<2x8x32xf32>
      tpu.vector_store %arg23[%c0_149, %c0_150, %c0_151], %351 {strides = array<i32>} : memref<2x8x32xf32, #tpu.memory_space<vmem>>, vector<2x8x32xf32>,
    } else {
    }
    %c0 = arith.constant 0 : index
    %c0_1 = arith.constant 0 : index
    %c0_2 = arith.constant 0 : index
    %3 = vector.load %arg17[%c0, %c0_1, %c0_2] : memref<1x3x32xf32, #tpu.memory_space<vmem>>, vector<1x3x32xf32>
    %4 = vector.shape_cast %3 : vector<1x3x32xf32> to vector<3x32xf32>
    %c0_3 = arith.constant 0 : index
    %c0_4 = arith.constant 0 : index
    %c0_5 = arith.constant 0 : index
    %5 = vector.load %arg18[%c0_3, %c0_4, %c0_5] : memref<1x3x32xf32, #tpu.memory_space<vmem>>, vector<1x3x32xf32>
    %6 = vector.shape_cast %5 : vector<1x3x32xf32> to vector<3x32xf32>
    %c0_6 = arith.constant 0 : index
    %c0_7 = arith.constant 0 : index
    %c0_8 = arith.constant 0 : index
    %7 = vector.load %arg23[%c0_6, %c0_7, %c0_8] : memref<2x8x32xf32, #tpu.memory_space<vmem>>, vector<2x8x32xf32>
    %8 = vector.extract_strided_slice %4 {offsets = [0, 0], sizes = [1, 32], strides = [1, 1]} : vector<3x32xf32> to vector<1x32xf32>
    %9 = vector.extract_strided_slice %6 {offsets = [0, 0], sizes = [1, 32], strides = [1, 1]} : vector<3x32xf32> to vector<1x32xf32>
    %cst = arith.constant dense<0.000000e+00> : vector<2x8xf32>
    %10 = vector.multi_reduction <add>, %7, %cst [2] : vector<2x8x32xf32> to vector<2x8xf32>
    %11 = vector.shape_cast %10 : vector<2x8xf32> to vector<2x8x1xf32>
    %cst_9 = arith.constant 3.200000e+01 : f32
    %12 = vector.broadcast %cst_9 : f32 to vector<2x8x1xf32>
    %13 = arith.divf %11, %12 : vector<2x8x1xf32>
    %14 = vector.broadcast %13 : vector<2x8x1xf32> to vector<2x8x32xf32>
    %15 = arith.subf %7, %14 : vector<2x8x32xf32>
    %16 = arith.mulf %15, %15 : vector<2x8x32xf32>
    %cst_10 = arith.constant dense<0.000000e+00> : vector<2x8xf32>
    %17 = vector.multi_reduction <add>, %16, %cst_10 [2] : vector<2x8x32xf32> to vector<2x8xf32>
    %18 = vector.shape_cast %17 : vector<2x8xf32> to vector<2x8x1xf32>
    %cst_11 = arith.constant 3.100000e+01 : f32
    %19 = vector.broadcast %cst_11 : f32 to vector<2x8x1xf32>
    %20 = arith.divf %18, %19 : vector<2x8x1xf32>
    %21 = math.sqrt %20 : vector<2x8x1xf32>
    %22 = vector.shape_cast %8 : vector<1x32xf32> to vector<1x1x32xf32>
    %23 = vector.broadcast %22 : vector<1x1x32xf32> to vector<2x8x32xf32>
    %24 = arith.mulf %23, %15 : vector<2x8x32xf32>
    %cst_12 = arith.constant 9.99999997E-7 : f32
    %25 = vector.broadcast %cst_12 : f32 to vector<2x8x1xf32>
    %26 = arith.addf %21, %25 : vector<2x8x1xf32>
    %27 = tpu.reciprocal %26 {approx = true} : vector<2x8x1xf32> -> vector<2x8x1xf32>
    %28 = vector.broadcast %27 : vector<2x8x1xf32> to vector<2x8x32xf32>
    %29 = arith.mulf %24, %28 : vector<2x8x32xf32>
    %30 = vector.shape_cast %9 : vector<1x32xf32> to vector<1x1x32xf32>
    %31 = vector.broadcast %30 : vector<1x1x32xf32> to vector<2x8x32xf32>
    %32 = arith.addf %29, %31 : vector<2x8x32xf32>
    %33 = vector.shape_cast %32 : vector<2x8x32xf32> to vector<16x32xf32>
    %c0_13 = arith.constant 0 : index
    %c0_14 = arith.constant 0 : index
    %c0_15 = arith.constant 0 : index
    %34 = vector.load %arg8[%c0_13, %c0_14, %c0_15] : memref<1x32x96xbf16, #tpu.memory_space<vmem>>, vector<1x32x96xbf16>
    %35 = vector.shape_cast %34 : vector<1x32x96xbf16> to vector<32x96xbf16>
    %36 = arith.truncf %33 : vector<16x32xf32> to vector<16x32xbf16>
    %cst_16 = arith.constant dense<0.000000e+00> : vector<16x96xf32>
    %37 = tpu.matmul %36, %35, %cst_16 {dimension_numbers = #tpu.dot_dimension_numbers<[1], [0], [0], [1], [0, 0, 1, 1], [], []>} : vector<16x32xbf16>, vector<32x96xbf16>, vector<16x96xf32> -> vector<16x96xf32>
    %38 = vector.shape_cast %37 : vector<16x96xf32> to vector<2x8x96xf32>
    %39 = tpu.iota {dimensions = array<i32: 0>} : vector<8x8xi32>
    %40 = tpu.iota {dimensions = array<i32: 1>} : vector<8x8xi32>
    %41 = arith.cmpi sgt, %40, %39 : vector<8x8xi32>
    %42 = vector.shape_cast %41 : vector<8x8xi1> to vector<1x8x8xi1>
    %c0_17 = arith.constant 0 : index
    %c0_18 = arith.constant 0 : index
    %c0_19 = arith.constant 0 : index
    %43 = vector.load %arg7[%c0_17, %c0_18, %c0_19] : memref<2x1x8xf32, #tpu.memory_space<vmem>>, vector<2x1x8xf32>
    %cst_20 = arith.constant 0.000000e+00 : f32
    %44 = vector.broadcast %cst_20 : f32 to vector<2x1x8xf32>
    %45 = arith.cmpf ogt, %43, %44 : vector<2x1x8xf32>
    %46 = vector.broadcast %42 : vector<1x8x8xi1> to vector<2x8x8xi1>
    %47 = vector.broadcast %45 : vector<2x1x8xi1> to vector<2x8x8xi1>
    %48 = arith.ori %46, %47 : vector<2x8x8xi1>
    %c0_21 = arith.constant 0 : index
    %c0_22 = arith.constant 0 : index
    %c0_23 = arith.constant 0 : index
    %49 = vector.load %arg9[%c0_21, %c0_22, %c0_23] : memref<1x32x32xbf16, #tpu.memory_space<vmem>>, vector<1x32x32xbf16>
    %50 = vector.shape_cast %49 : vector<1x32x32xbf16> to vector<32x32xbf16>
    %cst_24 = arith.constant 0.000000e+00 : f32
    %51 = vector.broadcast %cst_24 : f32 to vector<16x32xf32>
    %52 = vector.extract_strided_slice %38 {offsets = [0, 0, 0], sizes = [2, 8, 16], strides = [1, 1, 1]} : vector<2x8x96xf32> to vector<2x8x16xf32>
    %cst_25 = arith.constant 2.500000e-01 : f32
    %53 = vector.broadcast %cst_25 : f32 to vector<2x8x16xf32>
    %54 = arith.mulf %52, %53 : vector<2x8x16xf32>
    %55 = vector.extract_strided_slice %38 {offsets = [0, 0, 32], sizes = [2, 8, 16], strides = [1, 1, 1]} : vector<2x8x96xf32> to vector<2x8x16xf32>
    %56 = vector.extract_strided_slice %38 {offsets = [0, 0, 64], sizes = [2, 8, 16], strides = [1, 1, 1]} : vector<2x8x96xf32> to vector<2x8x16xf32>
    %57 = arith.truncf %54 : vector<2x8x16xf32> to vector<2x8x16xbf16>
    %58 = arith.truncf %55 : vector<2x8x16xf32> to vector<2x8x16xbf16>
    %cst_26 = arith.constant dense<0.000000e+00> : vector<2x8x8xf32>
    %59 = tpu.matmul %57, %58, %cst_26 {dimension_numbers = #tpu.dot_dimension_numbers<[2], [2], [1], [1], [0, 0, 0, 1, 1, 1], [0], [0]>} : vector<2x8x16xbf16>, vector<2x8x16xbf16>, vector<2x8x8xf32> -> vector<2x8x8xf32>
    %cst_27 = arith.constant -9.99999984E+17 : f32
    %60 = vector.broadcast %cst_27 : f32 to vector<2x8x8xf32>
    %61 = arith.select %48, %60, %59 : vector<2x8x8xi1>, vector<2x8x8xf32>
    %cst_28 = arith.constant dense<0xFF800000> : vector<2x8xf32>
    %62 = vector.multi_reduction <maximumf>, %61, %cst_28 [2] : vector<2x8x8xf32> to vector<2x8xf32>
    %63 = vector.shape_cast %62 : vector<2x8xf32> to vector<2x8x1xf32>
    %64 = vector.broadcast %63 : vector<2x8x1xf32> to vector<2x8x8xf32>
    %65 = arith.subf %61, %64 : vector<2x8x8xf32>
    %66 = math.exp %65 : vector<2x8x8xf32>
    %cst_29 = arith.constant dense<0.000000e+00> : vector<2x8xf32>
    %67 = vector.multi_reduction <add>, %66, %cst_29 [2] : vector<2x8x8xf32> to vector<2x8xf32>
    %68 = vector.shape_cast %67 : vector<2x8xf32> to vector<2x8x1xf32>
    %69 = tpu.reciprocal %68 {approx = true} : vector<2x8x1xf32> -> vector<2x8x1xf32>
    %70 = vector.broadcast %69 : vector<2x8x1xf32> to vector<2x8x8xf32>
    %71 = arith.mulf %66, %70 : vector<2x8x8xf32>
    %72 = arith.truncf %71 : vector<2x8x8xf32> to vector<2x8x8xbf16>
    %73 = arith.truncf %56 : vector<2x8x16xf32> to vector<2x8x16xbf16>
    %cst_30 = arith.constant dense<0.000000e+00> : vector<2x8x16xf32>
    %74 = tpu.matmul %72, %73, %cst_30 {dimension_numbers = #tpu.dot_dimension_numbers<[2], [1], [1], [2], [0, 0, 0, 1, 1, 2], [0], [0]>} : vector<2x8x8xbf16>, vector<2x8x16xbf16>, vector<2x8x16xf32> -> vector<2x8x16xf32>
    %75 = vector.shape_cast %74 : vector<2x8x16xf32> to vector<16x16xf32>
    %76 = vector.extract_strided_slice %50 {offsets = [0, 0], sizes = [16, 32], strides = [1, 1]} : vector<32x32xbf16> to vector<16x32xbf16>
    %77 = arith.truncf %75 : vector<16x16xf32> to vector<16x16xbf16>
    %cst_31 = arith.constant dense<0.000000e+00> : vector<16x32xf32>
    %78 = tpu.matmul %77, %76, %cst_31 {dimension_numbers = #tpu.dot_dimension_numbers<[1], [0], [0], [1], [0, 0, 1, 1], [], []>} : vector<16x16xbf16>, vector<16x32xbf16>, vector<16x32xf32> -> vector<16x32xf32>
    %79 = arith.addf %51, %78 : vector<16x32xf32>
    %80 = vector.extract_strided_slice %38 {offsets = [0, 0, 16], sizes = [2, 8, 16], strides = [1, 1, 1]} : vector<2x8x96xf32> to vector<2x8x16xf32>
    %cst_32 = arith.constant 2.500000e-01 : f32
    %81 = vector.broadcast %cst_32 : f32 to vector<2x8x16xf32>
    %82 = arith.mulf %80, %81 : vector<2x8x16xf32>
    %83 = vector.extract_strided_slice %38 {offsets = [0, 0, 48], sizes = [2, 8, 16], strides = [1, 1, 1]} : vector<2x8x96xf32> to vector<2x8x16xf32>
    %84 = vector.extract_strided_slice %38 {offsets = [0, 0, 80], sizes = [2, 8, 16], strides = [1, 1, 1]} : vector<2x8x96xf32> to vector<2x8x16xf32>
    %85 = arith.truncf %82 : vector<2x8x16xf32> to vector<2x8x16xbf16>
    %86 = arith.truncf %83 : vector<2x8x16xf32> to vector<2x8x16xbf16>
    %cst_33 = arith.constant dense<0.000000e+00> : vector<2x8x8xf32>
    %87 = tpu.matmul %85, %86, %cst_33 {dimension_numbers = #tpu.dot_dimension_numbers<[2], [2], [1], [1], [0, 0, 0, 1, 1, 1], [0], [0]>} : vector<2x8x16xbf16>, vector<2x8x16xbf16>, vector<2x8x8xf32> -> vector<2x8x8xf32>
    %cst_34 = arith.constant -9.99999984E+17 : f32
    %88 = vector.broadcast %cst_34 : f32 to vector<2x8x8xf32>
    %89 = arith.select %48, %88, %87 : vector<2x8x8xi1>, vector<2x8x8xf32>
    %cst_35 = arith.constant dense<0xFF800000> : vector<2x8xf32>
    %90 = vector.multi_reduction <maximumf>, %89, %cst_35 [2] : vector<2x8x8xf32> to vector<2x8xf32>
    %91 = vector.shape_cast %90 : vector<2x8xf32> to vector<2x8x1xf32>
    %92 = vector.broadcast %91 : vector<2x8x1xf32> to vector<2x8x8xf32>
    %93 = arith.subf %89, %92 : vector<2x8x8xf32>
    %94 = math.exp %93 : vector<2x8x8xf32>
    %cst_36 = arith.constant dense<0.000000e+00> : vector<2x8xf32>
    %95 = vector.multi_reduction <add>, %94, %cst_36 [2] : vector<2x8x8xf32> to vector<2x8xf32>
    %96 = vector.shape_cast %95 : vector<2x8xf32> to vector<2x8x1xf32>
    %97 = tpu.reciprocal %96 {approx = true} : vector<2x8x1xf32> -> vector<2x8x1xf32>
    %98 = vector.broadcast %97 : vector<2x8x1xf32> to vector<2x8x8xf32>
    %99 = arith.mulf %94, %98 : vector<2x8x8xf32>
    %100 = arith.truncf %99 : vector<2x8x8xf32> to vector<2x8x8xbf16>
    %101 = arith.truncf %84 : vector<2x8x16xf32> to vector<2x8x16xbf16>
    %cst_37 = arith.constant dense<0.000000e+00> : vector<2x8x16xf32>
    %102 = tpu.matmul %100, %101, %cst_37 {dimension_numbers = #tpu.dot_dimension_numbers<[2], [1], [1], [2], [0, 0, 0, 1, 1, 2], [0], [0]>} : vector<2x8x8xbf16>, vector<2x8x16xbf16>, vector<2x8x16xf32> -> vector<2x8x16xf32>
    %103 = vector.shape_cast %102 : vector<2x8x16xf32> to vector<16x16xf32>
    %104 = vector.extract_strided_slice %50 {offsets = [16, 0], sizes = [16, 32], strides = [1, 1]} : vector<32x32xbf16> to vector<16x32xbf16>
    %105 = arith.truncf %103 : vector<16x16xf32> to vector<16x16xbf16>
    %cst_38 = arith.constant dense<0.000000e+00> : vector<16x32xf32>
    %106 = tpu.matmul %105, %104, %cst_38 {dimension_numbers = #tpu.dot_dimension_numbers<[1], [0], [0], [1], [0, 0, 1, 1], [], []>} : vector<16x16xbf16>, vector<16x32xbf16>, vector<16x32xf32> -> vector<16x32xf32>
    %107 = arith.addf %79, %106 : vector<16x32xf32>
    %108 = vector.shape_cast %107 : vector<16x32xf32> to vector<2x8x32xf32>
    %109 = arith.addf %7, %108 : vector<2x8x32xf32>
    %110 = vector.extract_strided_slice %4 {offsets = [1, 0], sizes = [1, 32], strides = [1, 1]} : vector<3x32xf32> to vector<1x32xf32>
    %111 = vector.extract_strided_slice %6 {offsets = [1, 0], sizes = [1, 32], strides = [1, 1]} : vector<3x32xf32> to vector<1x32xf32>
    %cst_39 = arith.constant dense<0.000000e+00> : vector<2x8xf32>
    %112 = vector.multi_reduction <add>, %109, %cst_39 [2] : vector<2x8x32xf32> to vector<2x8xf32>
    %113 = vector.shape_cast %112 : vector<2x8xf32> to vector<2x8x1xf32>
    %cst_40 = arith.constant 3.200000e+01 : f32
    %114 = vector.broadcast %cst_40 : f32 to vector<2x8x1xf32>
    %115 = arith.divf %113, %114 : vector<2x8x1xf32>
    %116 = vector.broadcast %115 : vector<2x8x1xf32> to vector<2x8x32xf32>
    %117 = arith.subf %109, %116 : vector<2x8x32xf32>
    %118 = arith.mulf %117, %117 : vector<2x8x32xf32>
    %cst_41 = arith.constant dense<0.000000e+00> : vector<2x8xf32>
    %119 = vector.multi_reduction <add>, %118, %cst_41 [2] : vector<2x8x32xf32> to vector<2x8xf32>
    %120 = vector.shape_cast %119 : vector<2x8xf32> to vector<2x8x1xf32>
    %cst_42 = arith.constant 3.100000e+01 : f32
    %121 = vector.broadcast %cst_42 : f32 to vector<2x8x1xf32>
    %122 = arith.divf %120, %121 : vector<2x8x1xf32>
    %123 = math.sqrt %122 : vector<2x8x1xf32>
    %124 = vector.shape_cast %110 : vector<1x32xf32> to vector<1x1x32xf32>
    %125 = vector.broadcast %124 : vector<1x1x32xf32> to vector<2x8x32xf32>
    %126 = arith.mulf %125, %117 : vector<2x8x32xf32>
    %cst_43 = arith.constant 9.99999997E-7 : f32
    %127 = vector.broadcast %cst_43 : f32 to vector<2x8x1xf32>
    %128 = arith.addf %123, %127 : vector<2x8x1xf32>
    %129 = tpu.reciprocal %128 {approx = true} : vector<2x8x1xf32> -> vector<2x8x1xf32>
    %130 = vector.broadcast %129 : vector<2x8x1xf32> to vector<2x8x32xf32>
    %131 = arith.mulf %126, %130 : vector<2x8x32xf32>
    %132 = vector.shape_cast %111 : vector<1x32xf32> to vector<1x1x32xf32>
    %133 = vector.broadcast %132 : vector<1x1x32xf32> to vector<2x8x32xf32>
    %134 = arith.addf %131, %133 : vector<2x8x32xf32>
    %135 = vector.shape_cast %134 : vector<2x8x32xf32> to vector<16x32xf32>
    %c0_44 = arith.constant 0 : index
    %c0_45 = arith.constant 0 : index
    %c0_46 = arith.constant 0 : index
    %136 = vector.load %arg10[%c0_44, %c0_45, %c0_46] : memref<1x32x32xbf16, #tpu.memory_space<vmem>>, vector<1x32x32xbf16>
    %137 = vector.shape_cast %136 : vector<1x32x32xbf16> to vector<32x32xbf16>
    %138 = arith.truncf %135 : vector<16x32xf32> to vector<16x32xbf16>
    %cst_47 = arith.constant dense<0.000000e+00> : vector<16x32xf32>
    %139 = tpu.matmul %138, %137, %cst_47 {dimension_numbers = #tpu.dot_dimension_numbers<[1], [0], [0], [1], [0, 0, 1, 1], [], []>} : vector<16x32xbf16>, vector<32x32xbf16>, vector<16x32xf32> -> vector<16x32xf32>
    %140 = vector.shape_cast %139 : vector<16x32xf32> to vector<2x8x32xf32>
    %c0_48 = arith.constant 0 : index
    %c0_49 = arith.constant 0 : index
    %c0_50 = arith.constant 0 : index
    %141 = vector.load %arg5[%c0_48, %c0_49, %c0_50] : memref<2x10x32xf32, #tpu.memory_space<vmem>>, vector<2x10x32xf32>
    %c0_51 = arith.constant 0 : index
    %c0_52 = arith.constant 0 : index
    %c0_53 = arith.constant 0 : index
    %142 = vector.load %arg11[%c0_51, %c0_52, %c0_53] : memref<1x32x64xbf16, #tpu.memory_space<vmem>>, vector<1x32x64xbf16>
    %143 = vector.shape_cast %142 : vector<1x32x64xbf16> to vector<32x64xbf16>
    %144 = vector.shape_cast %143 : vector<32x64xbf16> to vector<1x32x64xbf16>
    %145 = vector.broadcast %144 : vector<1x32x64xbf16> to vector<2x32x64xbf16>
    %146 = arith.truncf %141 : vector<2x10x32xf32> to vector<2x10x32xbf16>
    %cst_54 = arith.constant dense<0.000000e+00> : vector<2x10x64xf32>
    %147 = tpu.matmul %146, %145, %cst_54 {dimension_numbers = #tpu.dot_dimension_numbers<[2], [1], [1], [2], [0, 0, 0, 1, 1, 2], [0], [0]>} : vector<2x10x32xbf16>, vector<2x32x64xbf16>, vector<2x10x64xf32> -> vector<2x10x64xf32>
    %c0_55 = arith.constant 0 : index
    %c0_56 = arith.constant 0 : index
    %c0_57 = arith.constant 0 : index
    %148 = vector.load %arg6[%c0_55, %c0_56, %c0_57] : memref<2x1x10xf32, #tpu.memory_space<vmem>>, vector<2x1x10xf32>
    %cst_58 = arith.constant 0.000000e+00 : f32
    %149 = vector.broadcast %cst_58 : f32 to vector<2x1x10xf32>
    %150 = arith.cmpf ogt, %148, %149 : vector<2x1x10xf32>
    %151 = vector.shape_cast %150 : vector<2x1x10xi1> to vector<2x1x10xi1>
    %152 = vector.broadcast %151 : vector<2x1x10xi1> to vector<2x8x10xi1>
    %c0_59 = arith.constant 0 : index
    %c0_60 = arith.constant 0 : index
    %c0_61 = arith.constant 0 : index
    %153 = vector.load %arg12[%c0_59, %c0_60, %c0_61] : memref<1x32x32xbf16, #tpu.memory_space<vmem>>, vector<1x32x32xbf16>
    %154 = vector.shape_cast %153 : vector<1x32x32xbf16> to vector<32x32xbf16>
    %cst_62 = arith.constant 0.000000e+00 : f32
    %155 = vector.broadcast %cst_62 : f32 to vector<2x8x10xf32>
    %cst_63 = arith.constant 0.000000e+00 : f32
    %156 = vector.broadcast %cst_63 : f32 to vector<16x32xf32>
    %157 = vector.extract_strided_slice %140 {offsets = [0, 0, 0], sizes = [2, 8, 16], strides = [1, 1, 1]} : vector<2x8x32xf32> to vector<2x8x16xf32>
    %cst_64 = arith.constant 2.500000e-01 : f32
    %158 = vector.broadcast %cst_64 : f32 to vector<2x8x16xf32>
    %159 = arith.mulf %157, %158 : vector<2x8x16xf32>
    %160 = vector.extract_strided_slice %147 {offsets = [0, 0, 0], sizes = [2, 10, 16], strides = [1, 1, 1]} : vector<2x10x64xf32> to vector<2x10x16xf32>
    %161 = vector.extract_strided_slice %147 {offsets = [0, 0, 32], sizes = [2, 10, 16], strides = [1, 1, 1]} : vector<2x10x64xf32> to vector<2x10x16xf32>
    %162 = arith.truncf %159 : vector<2x8x16xf32> to vector<2x8x16xbf16>
    %163 = arith.truncf %160 : vector<2x10x16xf32> to vector<2x10x16xbf16>
    %cst_65 = arith.constant dense<0.000000e+00> : vector<2x8x10xf32>
    %164 = tpu.matmul %162, %163, %cst_65 {dimension_numbers = #tpu.dot_dimension_numbers<[2], [2], [1], [1], [0, 0, 0, 1, 1, 1], [0], [0]>} : vector<2x8x16xbf16>, vector<2x10x16xbf16>, vector<2x8x10xf32> -> vector<2x8x10xf32>
    %cst_66 = arith.constant -9.99999984E+17 : f32
    %165 = vector.broadcast %cst_66 : f32 to vector<2x8x10xf32>
    %166 = arith.select %152, %165, %164 : vector<2x8x10xi1>, vector<2x8x10xf32>
    %167 = arith.addf %155, %166 : vector<2x8x10xf32>
    %cst_67 = arith.constant dense<0xFF800000> : vector<2x8xf32>
    %168 = vector.multi_reduction <maximumf>, %166, %cst_67 [2] : vector<2x8x10xf32> to vector<2x8xf32>
    %169 = vector.shape_cast %168 : vector<2x8xf32> to vector<2x8x1xf32>
    %170 = vector.broadcast %169 : vector<2x8x1xf32> to vector<2x8x10xf32>
    %171 = arith.subf %166, %170 : vector<2x8x10xf32>
    %172 = math.exp %171 : vector<2x8x10xf32>
    %cst_68 = arith.constant dense<0.000000e+00> : vector<2x8xf32>
    %173 = vector.multi_reduction <add>, %172, %cst_68 [2] : vector<2x8x10xf32> to vector<2x8xf32>
    %174 = vector.shape_cast %173 : vector<2x8xf32> to vector<2x8x1xf32>
    %175 = tpu.reciprocal %174 {approx = true} : vector<2x8x1xf32> -> vector<2x8x1xf32>
    %176 = vector.broadcast %175 : vector<2x8x1xf32> to vector<2x8x10xf32>
    %177 = arith.mulf %172, %176 : vector<2x8x10xf32>
    %178 = arith.truncf %177 : vector<2x8x10xf32> to vector<2x8x10xbf16>
    %179 = arith.truncf %161 : vector<2x10x16xf32> to vector<2x10x16xbf16>
    %cst_69 = arith.constant dense<0.000000e+00> : vector<2x8x16xf32>
    %180 = tpu.matmul %178, %179, %cst_69 {dimension_numbers = #tpu.dot_dimension_numbers<[2], [1], [1], [2], [0, 0, 0, 1, 1, 2], [0], [0]>} : vector<2x8x10xbf16>, vector<2x10x16xbf16>, vector<2x8x16xf32> -> vector<2x8x16xf32>
    %181 = vector.shape_cast %180 : vector<2x8x16xf32> to vector<16x16xf32>
    %182 = vector.extract_strided_slice %154 {offsets = [0, 0], sizes = [16, 32], strides = [1, 1]} : vector<32x32xbf16> to vector<16x32xbf16>
    %183 = arith.truncf %181 : vector<16x16xf32> to vector<16x16xbf16>
    %cst_70 = arith.constant dense<0.000000e+00> : vector<16x32xf32>
    %184 = tpu.matmul %183, %182, %cst_70 {dimension_numbers = #tpu.dot_dimension_numbers<[1], [0], [0], [1], [0, 0, 1, 1], [], []>} : vector<16x16xbf16>, vector<16x32xbf16>, vector<16x32xf32> -> vector<16x32xf32>
    %185 = arith.addf %156, %184 : vector<16x32xf32>
    %186 = vector.extract_strided_slice %140 {offsets = [0, 0, 16], sizes = [2, 8, 16], strides = [1, 1, 1]} : vector<2x8x32xf32> to vector<2x8x16xf32>
    %cst_71 = arith.constant 2.500000e-01 : f32
    %187 = vector.broadcast %cst_71 : f32 to vector<2x8x16xf32>
    %188 = arith.mulf %186, %187 : vector<2x8x16xf32>
    %189 = vector.extract_strided_slice %147 {offsets = [0, 0, 16], sizes = [2, 10, 16], strides = [1, 1, 1]} : vector<2x10x64xf32> to vector<2x10x16xf32>
    %190 = vector.extract_strided_slice %147 {offsets = [0, 0, 48], sizes = [2, 10, 16], strides = [1, 1, 1]} : vector<2x10x64xf32> to vector<2x10x16xf32>
    %191 = arith.truncf %188 : vector<2x8x16xf32> to vector<2x8x16xbf16>
    %192 = arith.truncf %189 : vector<2x10x16xf32> to vector<2x10x16xbf16>
    %cst_72 = arith.constant dense<0.000000e+00> : vector<2x8x10xf32>
    %193 = tpu.matmul %191, %192, %cst_72 {dimension_numbers = #tpu.dot_dimension_numbers<[2], [2], [1], [1], [0, 0, 0, 1, 1, 1], [0], [0]>} : vector<2x8x16xbf16>, vector<2x10x16xbf16>, vector<2x8x10xf32> -> vector<2x8x10xf32>
    %cst_73 = arith.constant -9.99999984E+17 : f32
    %194 = vector.broadcast %cst_73 : f32 to vector<2x8x10xf32>
    %195 = arith.select %152, %194, %193 : vector<2x8x10xi1>, vector<2x8x10xf32>
    %196 = arith.addf %167, %195 : vector<2x8x10xf32>
    %cst_74 = arith.constant dense<0xFF800000> : vector<2x8xf32>
    %197 = vector.multi_reduction <maximumf>, %195, %cst_74 [2] : vector<2x8x10xf32> to vector<2x8xf32>
    %198 = vector.shape_cast %197 : vector<2x8xf32> to vector<2x8x1xf32>
    %199 = vector.broadcast %198 : vector<2x8x1xf32> to vector<2x8x10xf32>
    %200 = arith.subf %195, %199 : vector<2x8x10xf32>
    %201 = math.exp %200 : vector<2x8x10xf32>
    %cst_75 = arith.constant dense<0.000000e+00> : vector<2x8xf32>
    %202 = vector.multi_reduction <add>, %201, %cst_75 [2] : vector<2x8x10xf32> to vector<2x8xf32>
    %203 = vector.shape_cast %202 : vector<2x8xf32> to vector<2x8x1xf32>
    %204 = tpu.reciprocal %203 {approx = true} : vector<2x8x1xf32> -> vector<2x8x1xf32>
    %205 = vector.broadcast %204 : vector<2x8x1xf32> to vector<2x8x10xf32>
    %206 = arith.mulf %201, %205 : vector<2x8x10xf32>
    %207 = arith.truncf %206 : vector<2x8x10xf32> to vector<2x8x10xbf16>
    %208 = arith.truncf %190 : vector<2x10x16xf32> to vector<2x10x16xbf16>
    %cst_76 = arith.constant dense<0.000000e+00> : vector<2x8x16xf32>
    %209 = tpu.matmul %207, %208, %cst_76 {dimension_numbers = #tpu.dot_dimension_numbers<[2], [1], [1], [2], [0, 0, 0, 1, 1, 2], [0], [0]>} : vector<2x8x10xbf16>, vector<2x10x16xbf16>, vector<2x8x16xf32> -> vector<2x8x16xf32>
    %210 = vector.shape_cast %209 : vector<2x8x16xf32> to vector<16x16xf32>
    %211 = vector.extract_strided_slice %154 {offsets = [16, 0], sizes = [16, 32], strides = [1, 1]} : vector<32x32xbf16> to vector<16x32xbf16>
    %212 = arith.truncf %210 : vector<16x16xf32> to vector<16x16xbf16>
    %cst_77 = arith.constant dense<0.000000e+00> : vector<16x32xf32>
    %213 = tpu.matmul %212, %211, %cst_77 {dimension_numbers = #tpu.dot_dimension_numbers<[1], [0], [0], [1], [0, 0, 1, 1], [], []>} : vector<16x16xbf16>, vector<16x32xbf16>, vector<16x32xf32> -> vector<16x32xf32>
    %214 = arith.addf %185, %213 : vector<16x32xf32>
    %215 = vector.shape_cast %214 : vector<16x32xf32> to vector<2x8x32xf32>
    %216 = arith.addf %109, %215 : vector<2x8x32xf32>
    %c1_i32 = arith.constant 1 : i32
    %217 = arith.cmpi eq, %arg1, %c1_i32 : i32
    %218 = arith.extui %217 : i1 to i32
    %c0_i32_78 = arith.constant 0 : i32
    %219 = arith.cmpi ne, %218, %c0_i32_78 : i32
    scf.if %219 {
      %cst_140 = arith.constant 5.000000e-01 : f32
      %343 = vector.broadcast %cst_140 : f32 to vector<2x8x10xf32>
      %344 = arith.mulf %196, %343 : vector<2x8x10xf32>
      %c0_141 = arith.constant 0 : index
      %c0_142 = arith.constant 0 : index
      %c0_143 = arith.constant 0 : index
      %345 = vector.load %arg22[%c0_141, %c0_142, %c0_143] : memref<2x8x10xf32, #tpu.memory_space<vmem>>, vector<2x8x10xf32>
      tpu.vector_store %arg22[%c0_141, %c0_142, %c0_143], %344 {strides = array<i32>} : memref<2x8x10xf32, #tpu.memory_space<vmem>>, vector<2x8x10xf32>,
    } else {
    }
    %220 = vector.extract_strided_slice %4 {offsets = [2, 0], sizes = [1, 32], strides = [1, 1]} : vector<3x32xf32> to vector<1x32xf32>
    %221 = vector.extract_strided_slice %6 {offsets = [2, 0], sizes = [1, 32], strides = [1, 1]} : vector<3x32xf32> to vector<1x32xf32>
    %cst_79 = arith.constant dense<0.000000e+00> : vector<2x8xf32>
    %222 = vector.multi_reduction <add>, %216, %cst_79 [2] : vector<2x8x32xf32> to vector<2x8xf32>
    %223 = vector.shape_cast %222 : vector<2x8xf32> to vector<2x8x1xf32>
    %cst_80 = arith.constant 3.200000e+01 : f32
    %224 = vector.broadcast %cst_80 : f32 to vector<2x8x1xf32>
    %225 = arith.divf %223, %224 : vector<2x8x1xf32>
    %226 = vector.broadcast %225 : vector<2x8x1xf32> to vector<2x8x32xf32>
    %227 = arith.subf %216, %226 : vector<2x8x32xf32>
    %228 = arith.mulf %227, %227 : vector<2x8x32xf32>
    %cst_81 = arith.constant dense<0.000000e+00> : vector<2x8xf32>
    %229 = vector.multi_reduction <add>, %228, %cst_81 [2] : vector<2x8x32xf32> to vector<2x8xf32>
    %230 = vector.shape_cast %229 : vector<2x8xf32> to vector<2x8x1xf32>
    %cst_82 = arith.constant 3.100000e+01 : f32
    %231 = vector.broadcast %cst_82 : f32 to vector<2x8x1xf32>
    %232 = arith.divf %230, %231 : vector<2x8x1xf32>
    %233 = math.sqrt %232 : vector<2x8x1xf32>
    %234 = vector.shape_cast %220 : vector<1x32xf32> to vector<1x1x32xf32>
    %235 = vector.broadcast %234 : vector<1x1x32xf32> to vector<2x8x32xf32>
    %236 = arith.mulf %235, %227 : vector<2x8x32xf32>
    %cst_83 = arith.constant 9.99999997E-7 : f32
    %237 = vector.broadcast %cst_83 : f32 to vector<2x8x1xf32>
    %238 = arith.addf %233, %237 : vector<2x8x1xf32>
    %239 = tpu.reciprocal %238 {approx = true} : vector<2x8x1xf32> -> vector<2x8x1xf32>
    %240 = vector.broadcast %239 : vector<2x8x1xf32> to vector<2x8x32xf32>
    %241 = arith.mulf %236, %240 : vector<2x8x32xf32>
    %242 = vector.shape_cast %221 : vector<1x32xf32> to vector<1x1x32xf32>
    %243 = vector.broadcast %242 : vector<1x1x32xf32> to vector<2x8x32xf32>
    %244 = arith.addf %241, %243 : vector<2x8x32xf32>
    %245 = tpu.iota {dimensions = array<i32: 0>} : vector<16x1xi32>
    %c8_i32 = arith.constant 8 : i32
    %c0_i32_84 = arith.constant 0 : i32
    %246 = arith.cmpi eq, %c8_i32, %c0_i32_84 : i32
    %c1_i32_85 = arith.constant 1 : i32
    %247 = arith.select %246, %c1_i32_85, %c8_i32 : i32
    %248 = vector.broadcast %247 : i32 to vector<16x1xi32>
    %249 = arith.remsi %245, %248 : vector<16x1xi32>
    %c0_i32_86 = arith.constant 0 : i32
    %250 = vector.broadcast %c0_i32_86 : i32 to vector<16x1xi32>
    %251 = arith.cmpi ne, %249, %250 : vector<16x1xi32>
    %c0_i32_87 = arith.constant 0 : i32
    %252 = vector.broadcast %c0_i32_87 : i32 to vector<16x1xi32>
    %253 = arith.cmpi slt, %249, %252 : vector<16x1xi32>
    %c0_i32_88 = arith.constant 0 : i32
    %254 = arith.cmpi slt, %247, %c0_i32_88 : i32
    %255 = vector.broadcast %254 : i1 to vector<16x1xi1>
    %256 = vector.broadcast %255 : vector<16x1xi1> to vector<16x1xi1>
    %257 = arith.xori %253, %256 : vector<16x1xi1>
    %258 = arith.andi %257, %251 : vector<16x1xi1>
    %259 = vector.broadcast %247 : i32 to vector<16x1xi32>
    %260 = arith.addi %249, %259 : vector<16x1xi32>
    %261 = arith.select %258, %260, %249 : vector<16x1xi1>, vector<16x1xi32>
    %262 = vector.shape_cast %244 : vector<2x8x32xf32> to vector<16x32xf32>
    %cst_89 = arith.constant 0.000000e+00 : f32
    %263 = vector.broadcast %cst_89 : f32 to vector<2x32xf32>
    %264 = vector.extract_strided_slice %262 {offsets = [0, 0], sizes = [14, 32], strides = [1, 1]} : vector<16x32xf32> to vector<14x32xf32>
    %265 = tpu.concatenate %263, %264 in 0 : vector<2x32xf32>, vector<14x32xf32> -> vector<16x32xf32>
    %c2_i32 = arith.constant 2 : i32
    %266 = vector.broadcast %c2_i32 : i32 to vector<16x1xi32>
    %267 = arith.cmpi slt, %261, %266 : vector<16x1xi32>
    %cst_90 = arith.constant 0.000000e+00 : f32
    %268 = vector.shape_cast %267 : vector<16x1xi1> to vector<16x1xi1>
    %269 = vector.broadcast %268 : vector<16x1xi1> to vector<16x32xi1>
    %270 = vector.broadcast %cst_90 : f32 to vector<16x32xf32>
    %271 = arith.select %269, %270, %265 : vector<16x32xi1>, vector<16x32xf32>
    %c0_91 = arith.constant 0 : index
    %c0_92 = arith.constant 0 : index
    %c0_93 = arith.constant 0 : index
    %c0_94 = arith.constant 0 : index
    %272 = vector.load %arg13[%c0_91, %c0_92, %c0_93, %c0_94] : memref<1x3x32x64xbf16, #tpu.memory_space<vmem>>, vector<1x1x32x64xbf16>
    %273 = vector.shape_cast %272 : vector<1x1x32x64xbf16> to vector<32x64xbf16>
    %274 = arith.truncf %271 : vector<16x32xf32> to vector<16x32xbf16>
    %cst_95 = arith.constant dense<0.000000e+00> : vector<16x64xf32>
    %275 = tpu.matmul %274, %273, %cst_95 {dimension_numbers = #tpu.dot_dimension_numbers<[1], [0], [0], [1], [0, 0, 1, 1], [], []>} : vector<16x32xbf16>, vector<32x64xbf16>, vector<16x64xf32> -> vector<16x64xf32>
    %cst_96 = arith.constant 0.000000e+00 : f32
    %276 = vector.broadcast %cst_96 : f32 to vector<1x32xf32>
    %277 = vector.extract_strided_slice %262 {offsets = [0, 0], sizes = [15, 32], strides = [1, 1]} : vector<16x32xf32> to vector<15x32xf32>
    %278 = tpu.concatenate %276, %277 in 0 : vector<1x32xf32>, vector<15x32xf32> -> vector<16x32xf32>
    %c1_i32_97 = arith.constant 1 : i32
    %279 = vector.broadcast %c1_i32_97 : i32 to vector<16x1xi32>
    %280 = arith.cmpi slt, %261, %279 : vector<16x1xi32>
    %cst_98 = arith.constant 0.000000e+00 : f32
    %281 = vector.shape_cast %280 : vector<16x1xi1> to vector<16x1xi1>
    %282 = vector.broadcast %281 : vector<16x1xi1> to vector<16x32xi1>
    %283 = vector.broadcast %cst_98 : f32 to vector<16x32xf32>
    %284 = arith.select %282, %283, %278 : vector<16x32xi1>, vector<16x32xf32>
    %c0_99 = arith.constant 0 : index
    %c1 = arith.constant 1 : index
    %c0_100 = arith.constant 0 : index
    %c0_101 = arith.constant 0 : index
    %285 = vector.load %arg13[%c0_99, %c1, %c0_100, %c0_101] : memref<1x3x32x64xbf16, #tpu.memory_space<vmem>>, vector<1x1x32x64xbf16>
    %286 = vector.shape_cast %285 : vector<1x1x32x64xbf16> to vector<32x64xbf16>
    %287 = arith.truncf %284 : vector<16x32xf32> to vector<16x32xbf16>
    %cst_102 = arith.constant dense<0.000000e+00> : vector<16x64xf32>
    %288 = tpu.matmul %287, %286, %cst_102 {dimension_numbers = #tpu.dot_dimension_numbers<[1], [0], [0], [1], [0, 0, 1, 1], [], []>} : vector<16x32xbf16>, vector<32x64xbf16>, vector<16x64xf32> -> vector<16x64xf32>
    %289 = arith.addf %275, %288 : vector<16x64xf32>
    %c0_103 = arith.constant 0 : index
    %c2 = arith.constant 2 : index
    %c0_104 = arith.constant 0 : index
    %c0_105 = arith.constant 0 : index
    %290 = vector.load %arg13[%c0_103, %c2, %c0_104, %c0_105] : memref<1x3x32x64xbf16, #tpu.memory_space<vmem>>, vector<1x1x32x64xbf16>
    %291 = vector.shape_cast %290 : vector<1x1x32x64xbf16> to vector<32x64xbf16>
    %292 = arith.truncf %262 : vector<16x32xf32> to vector<16x32xbf16>
    %cst_106 = arith.constant dense<0.000000e+00> : vector<16x64xf32>
    %293 = tpu.matmul %292, %291, %cst_106 {dimension_numbers = #tpu.dot_dimension_numbers<[1], [0], [0], [1], [0, 0, 1, 1], [], []>} : vector<16x32xbf16>, vector<32x64xbf16>, vector<16x64xf32> -> vector<16x64xf32>
    %294 = arith.addf %289, %293 : vector<16x64xf32>
    %c0_107 = arith.constant 0 : index
    %c0_108 = arith.constant 0 : index
    %c0_109 = arith.constant 0 : index
    %295 = vector.load %arg14[%c0_107, %c0_108, %c0_109] : memref<1x1x64xf32, #tpu.memory_space<vmem>>, vector<1x1x64xf32>
    %296 = vector.shape_cast %295 : vector<1x1x64xf32> to vector<1x64xf32>
    %297 = vector.broadcast %296 : vector<1x64xf32> to vector<16x64xf32>
    %298 = arith.addf %294, %297 : vector<16x64xf32>
    %cst_110 = arith.constant 0.000000e+00 : f32
    %299 = vector.broadcast %cst_110 : f32 to vector<16x64xf32>
    %300 = arith.maximumf %298, %299 : vector<16x64xf32>
    %cst_111 = arith.constant 0.000000e+00 : f32
    %301 = vector.broadcast %cst_111 : f32 to vector<2x64xf32>
    %302 = vector.extract_strided_slice %300 {offsets = [0, 0], sizes = [14, 64], strides = [1, 1]} : vector<16x64xf32> to vector<14x64xf32>
    %303 = tpu.concatenate %301, %302 in 0 : vector<2x64xf32>, vector<14x64xf32> -> vector<16x64xf32>
    %c2_i32_112 = arith.constant 2 : i32
    %304 = vector.broadcast %c2_i32_112 : i32 to vector<16x1xi32>
    %305 = arith.cmpi slt, %261, %304 : vector<16x1xi32>
    %cst_113 = arith.constant 0.000000e+00 : f32
    %306 = vector.shape_cast %305 : vector<16x1xi1> to vector<16x1xi1>
    %307 = vector.broadcast %306 : vector<16x1xi1> to vector<16x64xi1>
    %308 = vector.broadcast %cst_113 : f32 to vector<16x64xf32>
    %309 = arith.select %307, %308, %303 : vector<16x64xi1>, vector<16x64xf32>
    %c0_114 = arith.constant 0 : index
    %c0_115 = arith.constant 0 : index
    %c0_116 = arith.constant 0 : index
    %c0_117 = arith.constant 0 : index
    %310 = vector.load %arg15[%c0_114, %c0_115, %c0_116, %c0_117] : memref<1x3x64x32xbf16, #tpu.memory_space<vmem>>, vector<1x1x64x32xbf16>
    %311 = vector.shape_cast %310 : vector<1x1x64x32xbf16> to vector<64x32xbf16>
    %312 = arith.truncf %309 : vector<16x64xf32> to vector<16x64xbf16>
    %cst_118 = arith.constant dense<0.000000e+00> : vector<16x32xf32>
    %313 = tpu.matmul %312, %311, %cst_118 {dimension_numbers = #tpu.dot_dimension_numbers<[1], [0], [0], [1], [0, 0, 1, 1], [], []>} : vector<16x64xbf16>, vector<64x32xbf16>, vector<16x32xf32> -> vector<16x32xf32>
    %cst_119 = arith.constant 0.000000e+00 : f32
    %314 = vector.broadcast %cst_119 : f32 to vector<1x64xf32>
    %315 = vector.extract_strided_slice %300 {offsets = [0, 0], sizes = [15, 64], strides = [1, 1]} : vector<16x64xf32> to vector<15x64xf32>
    %316 = tpu.concatenate %314, %315 in 0 : vector<1x64xf32>, vector<15x64xf32> -> vector<16x64xf32>
    %c1_i32_120 = arith.constant 1 : i32
    %317 = vector.broadcast %c1_i32_120 : i32 to vector<16x1xi32>
    %318 = arith.cmpi slt, %261, %317 : vector<16x1xi32>
    %cst_121 = arith.constant 0.000000e+00 : f32
    %319 = vector.shape_cast %318 : vector<16x1xi1> to vector<16x1xi1>
    %320 = vector.broadcast %319 : vector<16x1xi1> to vector<16x64xi1>
    %321 = vector.broadcast %cst_121 : f32 to vector<16x64xf32>
    %322 = arith.select %320, %321, %316 : vector<16x64xi1>, vector<16x64xf32>
    %c0_122 = arith.constant 0 : index
    %c1_123 = arith.constant 1 : index
    %c0_124 = arith.constant 0 : index
    %c0_125 = arith.constant 0 : index
    %323 = vector.load %arg15[%c0_122, %c1_123, %c0_124, %c0_125] : memref<1x3x64x32xbf16, #tpu.memory_space<vmem>>, vector<1x1x64x32xbf16>
    %324 = vector.shape_cast %323 : vector<1x1x64x32xbf16> to vector<64x32xbf16>
    %325 = arith.truncf %322 : vector<16x64xf32> to vector<16x64xbf16>
    %cst_126 = arith.constant dense<0.000000e+00> : vector<16x32xf32>
    %326 = tpu.matmul %325, %324, %cst_126 {dimension_numbers = #tpu.dot_dimension_numbers<[1], [0], [0], [1], [0, 0, 1, 1], [], []>} : vector<16x64xbf16>, vector<64x32xbf16>, vector<16x32xf32> -> vector<16x32xf32>
    %327 = arith.addf %313, %326 : vector<16x32xf32>
    %c0_127 = arith.constant 0 : index
    %c2_128 = arith.constant 2 : index
    %c0_129 = arith.constant 0 : index
    %c0_130 = arith.constant 0 : index
    %328 = vector.load %arg15[%c0_127, %c2_128, %c0_129, %c0_130] : memref<1x3x64x32xbf16, #tpu.memory_space<vmem>>, vector<1x1x64x32xbf16>
    %329 = vector.shape_cast %328 : vector<1x1x64x32xbf16> to vector<64x32xbf16>
    %330 = arith.truncf %300 : vector<16x64xf32> to vector<16x64xbf16>
    %cst_131 = arith.constant dense<0.000000e+00> : vector<16x32xf32>
    %331 = tpu.matmul %330, %329, %cst_131 {dimension_numbers = #tpu.dot_dimension_numbers<[1], [0], [0], [1], [0, 0, 1, 1], [], []>} : vector<16x64xbf16>, vector<64x32xbf16>, vector<16x32xf32> -> vector<16x32xf32>
    %332 = arith.addf %327, %331 : vector<16x32xf32>
    %c0_132 = arith.constant 0 : index
    %c0_133 = arith.constant 0 : index
    %c0_134 = arith.constant 0 : index
    %333 = vector.load %arg16[%c0_132, %c0_133, %c0_134] : memref<1x1x32xf32, #tpu.memory_space<vmem>>, vector<1x1x32xf32>
    %334 = vector.shape_cast %333 : vector<1x1x32xf32> to vector<1x32xf32>
    %335 = vector.broadcast %334 : vector<1x32xf32> to vector<16x32xf32>
    %336 = arith.addf %332, %335 : vector<16x32xf32>
    %337 = vector.shape_cast %336 : vector<16x32xf32> to vector<2x8x32xf32>
    %338 = arith.addf %216, %337 : vector<2x8x32xf32>
    %c0_135 = arith.constant 0 : index
    %c0_136 = arith.constant 0 : index
    %c0_137 = arith.constant 0 : index
    %339 = vector.load %arg23[%c0_135, %c0_136, %c0_137] : memref<2x8x32xf32, #tpu.memory_space<vmem>>, vector<2x8x32xf32>
    tpu.vector_store %arg23[%c0_135, %c0_136, %c0_137], %338 {strides = array<i32>} : memref<2x8x32xf32, #tpu.memory_space<vmem>>, vector<2x8x32xf32>,
    %c1_i32_138 = arith.constant 1 : i32
    %340 = arith.cmpi eq, %arg1, %c1_i32_138 : i32
    %341 = arith.extui %340 : i1 to i32
    %c0_i32_139 = arith.constant 0 : i32
    %342 = arith.cmpi ne, %341, %c0_i32_139 : i32
    scf.if %342 {
      %c0_140 = arith.constant 0 : index
      %c0_141 = arith.constant 0 : index
      %343 = vector.load %arg19[%c0_140, %c0_141] : memref<1x32xf32, #tpu.memory_space<vmem>>, vector<1x32xf32>
      %c0_142 = arith.constant 0 : index
      %c0_143 = arith.constant 0 : index
      %344 = vector.load %arg20[%c0_142, %c0_143] : memref<1x32xf32, #tpu.memory_space<vmem>>, vector<1x32xf32>
      %cst_144 = arith.constant dense<0.000000e+00> : vector<2x8xf32>
      %345 = vector.multi_reduction <add>, %338, %cst_144 [2] : vector<2x8x32xf32> to vector<2x8xf32>
      %346 = vector.shape_cast %345 : vector<2x8xf32> to vector<2x8x1xf32>
      %cst_145 = arith.constant 3.200000e+01 : f32
      %347 = vector.broadcast %cst_145 : f32 to vector<2x8x1xf32>
      %348 = arith.divf %346, %347 : vector<2x8x1xf32>
      %349 = vector.broadcast %348 : vector<2x8x1xf32> to vector<2x8x32xf32>
      %350 = arith.subf %338, %349 : vector<2x8x32xf32>
      %351 = arith.mulf %350, %350 : vector<2x8x32xf32>
      %cst_146 = arith.constant dense<0.000000e+00> : vector<2x8xf32>
      %352 = vector.multi_reduction <add>, %351, %cst_146 [2] : vector<2x8x32xf32> to vector<2x8xf32>
      %353 = vector.shape_cast %352 : vector<2x8xf32> to vector<2x8x1xf32>
      %cst_147 = arith.constant 3.100000e+01 : f32
      %354 = vector.broadcast %cst_147 : f32 to vector<2x8x1xf32>
      %355 = arith.divf %353, %354 : vector<2x8x1xf32>
      %356 = math.sqrt %355 : vector<2x8x1xf32>
      %357 = vector.shape_cast %343 : vector<1x32xf32> to vector<1x1x32xf32>
      %358 = vector.broadcast %357 : vector<1x1x32xf32> to vector<2x8x32xf32>
      %359 = arith.mulf %358, %350 : vector<2x8x32xf32>
      %cst_148 = arith.constant 9.99999997E-7 : f32
      %360 = vector.broadcast %cst_148 : f32 to vector<2x8x1xf32>
      %361 = arith.addf %356, %360 : vector<2x8x1xf32>
      %362 = tpu.reciprocal %361 {approx = true} : vector<2x8x1xf32> -> vector<2x8x1xf32>
      %363 = vector.broadcast %362 : vector<2x8x1xf32> to vector<2x8x32xf32>
      %364 = arith.mulf %359, %363 : vector<2x8x32xf32>
      %365 = vector.shape_cast %344 : vector<1x32xf32> to vector<1x1x32xf32>
      %366 = vector.broadcast %365 : vector<1x1x32xf32> to vector<2x8x32xf32>
      %367 = arith.addf %364, %366 : vector<2x8x32xf32>
      %c0_149 = arith.constant 0 : index
      %c0_150 = arith.constant 0 : index
      %c0_151 = arith.constant 0 : index
      %368 = vector.load %arg21[%c0_149, %c0_150, %c0_151] : memref<2x8x32xf32, #tpu.memory_space<vmem>>, vector<2x8x32xf32>
      tpu.vector_store %arg21[%c0_149, %c0_150, %c0_151], %367 {strides = array<i32>} : memref<2x8x32xf32, #tpu.memory_space<vmem>>, vector<2x8x32xf32>,
    } else {
    }
    return
  }
  func.func @transform_0(%arg0: i32, %arg1: i32) -> (i32, i32, i32) {
    %c0_i32 = arith.constant 0 : i32
    %c0_i32_0 = arith.constant 0 : i32
    %c0_i32_1 = arith.constant 0 : i32
    return %arg0, %c0_i32, %c0_i32_0 : i32, i32, i32
  }
  func.func @transform_1(%arg0: i32, %arg1: i32) -> (i32, i32, i32) {
    %c0_i32 = arith.constant 0 : i32
    %c0_i32_0 = arith.constant 0 : i32
    %c0_i32_1 = arith.constant 0 : i32
    %c0_i32_2 = arith.constant 0 : i32
    return %c0_i32, %c0_i32_0, %c0_i32_1 : i32, i32, i32
  }
  func.func @transform_2(%arg0: i32, %arg1: i32) -> (i32, i32) {
    %c0_i32 = arith.constant 0 : i32
    %c0_i32_0 = arith.constant 0 : i32
    %c0_i32_1 = arith.constant 0 : i32
    return %c0_i32, %c0_i32_0 : i32, i32
  }
  func.func @transform_3(%arg0: i32, %arg1: i32) -> (i32, i32, i32) {
    %c0_i32 = arith.constant 0 : i32
    %c0_i32_0 = arith.constant 0 : i32
    %c0_i32_1 = arith.constant 0 : i32
    return %arg0, %c0_i32, %c0_i32_0 : i32, i32, i32
  }
  func.func @transform_4(%arg0: i32, %arg1: i32) -> (i32, i32, i32) {
    %c0_i32 = arith.constant 0 : i32
    %c0_i32_0 = arith.constant 0 : i32
    %c0_i32_1 = arith.constant 0 : i32
    return %arg0, %c0_i32, %c0_i32_0 : i32, i32, i32
  }
  func.func @transform_5(%arg0: i32, %arg1: i32) -> (i32, i32, i32) {
    %c0_i32 = arith.constant 0 : i32
    %c0_i32_0 = arith.constant 0 : i32
    %c0_i32_1 = arith.constant 0 : i32
    return %arg0, %c0_i32, %c0_i32_0 : i32, i32, i32
  }
  func.func @transform_6(%arg0: i32, %arg1: i32) -> (i32, i32, i32) {
    %c0_i32 = arith.constant 0 : i32
    %c0_i32_0 = arith.constant 0 : i32
    %c0_i32_1 = arith.constant 0 : i32
    return %arg1, %c0_i32, %c0_i32_0 : i32, i32, i32
  }
  func.func @transform_7(%arg0: i32, %arg1: i32) -> (i32, i32, i32) {
    %c0_i32 = arith.constant 0 : i32
    %c0_i32_0 = arith.constant 0 : i32
    %c0_i32_1 = arith.constant 0 : i32
    return %arg1, %c0_i32, %c0_i32_0 : i32, i32, i32
  }
  func.func @transform_8(%arg0: i32, %arg1: i32) -> (i32, i32, i32) {
    %c0_i32 = arith.constant 0 : i32
    %c0_i32_0 = arith.constant 0 : i32
    %c0_i32_1 = arith.constant 0 : i32
    return %arg1, %c0_i32, %c0_i32_0 : i32, i32, i32
  }
  func.func @transform_9(%arg0: i32, %arg1: i32) -> (i32, i32, i32) {
    %c0_i32 = arith.constant 0 : i32
    %c0_i32_0 = arith.constant 0 : i32
    %c0_i32_1 = arith.constant 0 : i32
    return %arg1, %c0_i32, %c0_i32_0 : i32, i32, i32
  }
  func.func @transform_10(%arg0: i32, %arg1: i32) -> (i32, i32, i32) {
    %c0_i32 = arith.constant 0 : i32
    %c0_i32_0 = arith.constant 0 : i32
    %c0_i32_1 = arith.constant 0 : i32
    return %arg1, %c0_i32, %c0_i32_0 : i32, i32, i32
  }
  func.func @transform_11(%arg0: i32, %arg1: i32) -> (i32, i32, i32, i32) {
    %c0_i32 = arith.constant 0 : i32
    %c0_i32_0 = arith.constant 0 : i32
    %c0_i32_1 = arith.constant 0 : i32
    %c0_i32_2 = arith.constant 0 : i32
    return %arg1, %c0_i32, %c0_i32_0, %c0_i32_1 : i32, i32, i32, i32
  }
  func.func @transform_12(%arg0: i32, %arg1: i32) -> (i32, i32, i32) {
    %c0_i32 = arith.constant 0 : i32
    %c0_i32_0 = arith.constant 0 : i32
    %c0_i32_1 = arith.constant 0 : i32
    return %arg1, %c0_i32, %c0_i32_0 : i32, i32, i32
  }
  func.func @transform_13(%arg0: i32, %arg1: i32) -> (i32, i32, i32, i32) {
    %c0_i32 = arith.constant 0 : i32
    %c0_i32_0 = arith.constant 0 : i32
    %c0_i32_1 = arith.constant 0 : i32
    %c0_i32_2 = arith.constant 0 : i32
    return %arg1, %c0_i32, %c0_i32_0, %c0_i32_1 : i32, i32, i32, i32
  }
  func.func @transform_14(%arg0: i32, %arg1: i32) -> (i32, i32, i32) {
    %c0_i32 = arith.constant 0 : i32
    %c0_i32_0 = arith.constant 0 : i32
    %c0_i32_1 = arith.constant 0 : i32
    return %arg1, %c0_i32, %c0_i32_0 : i32, i32, i32
  }
  func.func @transform_15(%arg0: i32, %arg1: i32) -> (i32, i32, i32) {
    %c0_i32 = arith.constant 0 : i32
    %c0_i32_0 = arith.constant 0 : i32
    %c0_i32_1 = arith.constant 0 : i32
    return %arg1, %c0_i32, %c0_i32_0 : i32, i32, i32
  }
  func.func @transform_16(%arg0: i32, %arg1: i32) -> (i32, i32, i32) {
    %c0_i32 = arith.constant 0 : i32
    %c0_i32_0 = arith.constant 0 : i32
    %c0_i32_1 = arith.constant 0 : i32
    return %arg1, %c0_i32, %c0_i32_0 : i32, i32, i32
  }
  func.func @transform_17(%arg0: i32, %arg1: i32) -> (i32, i32) {
    %c0_i32 = arith.constant 0 : i32
    %c0_i32_0 = arith.constant 0 : i32
    %c0_i32_1 = arith.constant 0 : i32
    return %c0_i32, %c0_i32_0 : i32, i32
  }
  func.func @transform_18(%arg0: i32, %arg1: i32) -> (i32, i32) {
    %c0_i32 = arith.constant 0 : i32
    %c0_i32_0 = arith.constant 0 : i32
    %c0_i32_1 = arith.constant 0 : i32
    return %c0_i32, %c0_i32_0 : i32, i32
  }
  func.func @transform_19(%arg0: i32, %arg1: i32) -> (i32, i32, i32) {
    %c0_i32 = arith.constant 0 : i32
    %c0_i32_0 = arith.constant 0 : i32
    %c0_i32_1 = arith.constant 0 : i32
    return %arg0, %c0_i32, %c0_i32_0 : i32, i32, i32
  }
  func.func @transform_20(%arg0: i32, %arg1: i32) -> (i32, i32, i32) {
    %c0_i32 = arith.constant 0 : i32
    %c0_i32_0 = arith.constant 0 : i32
    %c0_i32_1 = arith.constant 0 : i32
    return %arg0, %c0_i32, %c0_i32_0 : i32, i32, i32
  }
}

</mosaic_0001>

<llo_original>
// kernel: decoder_forward.1
$region0: #{decoder_forward.1}
  #allocation0 [shape = 'u32[]', space=smem, size = 0x4, offset = 0x4, fixed_abs, tag = 'smem constant byte address 0x4 - core index']
  #allocation1 [shape = 'u32[144,128]{1,0:T(1,128)}', space=vmem, size = 0x12000, scoped, tag = 'internal scratch']
  #allocation2 [shape = 'f32[2,8,32]{2,1,0:T(8,128)}', space=vmem, size = 0x2000, scoped, tag = 'scratch operand']
  %s0 = inlined_call_operand.vmem [shape: f32[2,8,32], index: 0, kind: input, shape index: {}]
  %s1 = inlined_call_operand.vmem [shape: f32[1,8,32], index: 1, kind: input, shape index: {}]
  %s2 = inlined_call_operand.vmem [shape: bf16[32,32], index: 2, kind: input, shape index: {}]
  %s3 = inlined_call_operand.vmem [shape: f32[2,10,32], index: 3, kind: input, shape index: {}]
  %s4 = inlined_call_operand.vmem [shape: f32[2,1,10], index: 4, kind: input, shape index: {}]
  %s5 = inlined_call_operand.vmem [shape: f32[2,1,8], index: 5, kind: input, shape index: {}]
  %s6 = inlined_call_operand.vmem [shape: bf16[2,32,96], index: 6, kind: input, shape index: {}]
  %s7 = inlined_call_operand.vmem [shape: bf16[2,32,32], index: 7, kind: input, shape index: {}]
  %s8 = inlined_call_operand.vmem [shape: bf16[2,32,32], index: 8, kind: input, shape index: {}]
  %s9 = inlined_call_operand.vmem [shape: bf16[2,32,64], index: 9, kind: input, shape index: {}]
  %s10 = inlined_call_operand.vmem [shape: bf16[2,32,32], index: 10, kind: input, shape index: {}]
  %s11 = inlined_call_operand.vmem [shape: bf16[2,3,32,64], index: 11, kind: input, shape index: {}]
  %s12 = inlined_call_operand.hbm [shape: f32[2,1,64], index: 12, kind: input, shape index: {}]
  %s13 = inlined_call_operand.vmem [shape: bf16[2,3,64,32], index: 13, kind: input, shape index: {}]
  %s14 = inlined_call_operand.hbm [shape: f32[2,1,32], index: 14, kind: input, shape index: {}]
  %s15 = inlined_call_operand.vmem [shape: f32[2,3,32], index: 15, kind: input, shape index: {}]
  %s16 = inlined_call_operand.vmem [shape: f32[2,3,32], index: 16, kind: input, shape index: {}]
  %s17 = inlined_call_operand.vmem [shape: f32[1,32], index: 17, kind: input, shape index: {}]
  %s18 = inlined_call_operand.hbm [shape: f32[1,32], index: 18, kind: input, shape index: {}]
  %s19 = inlined_call_operand.hbm [shape: f32[2,8,32], index: 19, kind: output, shape index: {0}]
  %s20 = inlined_call_operand.hbm [shape: f32[2,8,10], index: 20, kind: output, shape index: {1}]
  %21 = xla_tuple %s19, %s20
  %s22 = sld [smem:[#allocation0]]
  $region141: #{decoder_forward.1} parent=0
    _
  %s24 = ssub.s32 1, %s22
  %s25 = scalar_select 0, %s24, %s22
  $region1: #{decoder_forward.1} parent=0
    #allocation3 [shape = 'u8[1024]{0}', space=vmem, size = 0x400, scoped, tag = 'input window, operand 12']
    #allocation4 [shape = 's32[2]{0}', space=sflag, size = 0x8, scoped, tag = 'scoped memory for decoder_forward.1']
    #allocation5 [shape = 's32[2]{0}', space=sflag, size = 0x8, scoped, tag = 'scoped memory for decoder_forward.1']
    #allocation6 [shape = 'u8[1024]{0}', space=vmem, size = 0x400, scoped, tag = 'input window, operand 14']
    #allocation7 [shape = 's32[2]{0}', space=sflag, size = 0x8, scoped, tag = 'scoped memory for decoder_forward.1']
    #allocation8 [shape = 'u8[512]{0}', space=vmem, size = 0x400, scoped, tag = 'input window, operand 18, single buffered']
    #allocation9 [shape = 'u8[8192]{0}', space=vmem, size = 0x2000, scoped, tag = 'output window, operand 0, single buffered']
    #allocation10 [shape = 'u8[8192]{0}', space=vmem, size = 0x2000, scoped, tag = 'output window, operand 1, single buffered']
    #allocation11 [shape = 's32[1]{0}', space=sflag, size = 0x4, scoped, tag = 'scoped memory for decoder_forward.1']
    %26 = vsyncpa [#allocation4], 0
    %s27 = scalar_lea.sflag [#allocation4], 1
    %28 = vsyncpa %s27, 0
    %29 = vsyncpa [#allocation7], 0
    %s30 = scalar_lea.sflag [#allocation7], 1
    %31 = vsyncpa %s30, 0
    %32 = vsyncpa [#allocation5], 0
    %33 = vsyncpa [#allocation11], 0
    loop: start=0, step=1, limit=4
    $region2: #{decoder_forward.1} parent=1 // loop_pre_header
      _
    $region3: #{decoder_forward.1} parent=1 // loop_header
      %s35 = sphi 0, %s39
      %p36 = scmp.ge.s32.totalorder %s35, 4
      %s42 = sphi 0, %s54
      %s43 = sphi 0, %s50
      %s44 = sphi 0, %s42
      %s45 = sphi 0, %s43
      %s46 = sphi 0, %s44
      %s47 = sphi 0, %s45
      %s57 = sphi 0, %s59
      %s60 = sphi 0, %s57
      %s61 = sphi 0, %s60
      %s77 = sphi 0, %s61
      %s81 = sphi 0, %s81
      %s83 = sphi 0, %s81
      %s84 = sphi 0, %s83
      %s98 = sphi 0, %s84
      %s102 = sphi 0, %s102
      %s104 = sphi 0, %s102
      %s105 = sphi 0, %s104
      %s119 = sphi 0, %s105
      %s125 = sphi 0, %s127
      %s128 = sphi 0, %s125
      %s129 = sphi 0, %s128
      %s145 = sphi 0, %s129
      %s151 = sphi 0, %s153
      %s154 = sphi 0, %s151
      %s155 = sphi 0, %s154
      %s171 = sphi 0, %s155
      %s177 = sphi 0, %s179
      %s180 = sphi 0, %s177
      %s181 = sphi 0, %s180
      %s197 = sphi 0, %s181
      %s203 = sphi 0, %s205
      %s206 = sphi 0, %s203
      %s207 = sphi 0, %s206
      %s223 = sphi 0, %s207
      %s229 = sphi 0, %s231
      %s232 = sphi 0, %s229
      %s233 = sphi 0, %s232
      %s249 = sphi 0, %s233
      %s255 = sphi 0, %s257
      %s258 = sphi 0, %s255
      %s259 = sphi 0, %s258
      %s275 = sphi 0, %s259
      %s281 = sphi 0, %s283
      %s284 = sphi 0, %s281
      %s285 = sphi 0, %s284
      %s301 = sphi 0, %s285
      %s307 = sphi 0, %s309
      %s310 = sphi 0, %s307
      %s311 = sphi 0, %s310
      %s327 = sphi 0, %s311
      %s333 = sphi 0, %s335
      %s336 = sphi 0, %s333
      %s337 = sphi 0, %s336
      %s353 = sphi 0, %s337
      %s359 = sphi 0, %s361
      %s362 = sphi 0, %s359
      %s363 = sphi 0, %s362
      %s379 = sphi 0, %s363
      %s385 = sphi 0, %s387
      %s388 = sphi 0, %s385
      %s389 = sphi 0, %s388
      %s405 = sphi 0, %s389
      %s411 = sphi 0, %s413
      %s414 = sphi 0, %s411
      %s415 = sphi 0, %s414
      %s431 = sphi 0, %s415
      %s437 = sphi 0, %s439
      %s440 = sphi 0, %s437
      %s441 = sphi 0, %s440
      %s457 = sphi 0, %s441
      %s463 = sphi 0, %s465
      %s466 = sphi 0, %s463
      %s467 = sphi 0, %s466
      %s483 = sphi 0, %s467
      %s487 = sphi 0, %s487
      %s489 = sphi 0, %s487
      %s490 = sphi 0, %s489
      %s504 = sphi 0, %s490
      %s508 = sphi 0, %s508
      %s510 = sphi 0, %s508
      %s511 = sphi 0, %s510
      %s525 = sphi 0, %s511
      %s531 = sphi 0, %s533
      %s534 = sphi 0, %s531
      %s535 = sphi 0, %s534
      %s551 = sphi 0, %s535
      %s557 = sphi 0, %s559
      %s560 = sphi 0, %s557
      %s561 = sphi 0, %s560
      %s577 = sphi 0, %s561
    $region4: #{decoder_forward.1} parent=1 // loop_header_branch
      %38 = sbr.rel (%p36) target = $region8
    $region5: #{decoder_forward.1} parent=1 // loop_body
      %s40 = ssub.s32 %s35, 1
      %s41 = ssub.s32 %s35, 2
      %s48 = sadd.s32 1, %s43
      %p49 = scmp.ge.s32.totalorder %s48, 2
      %s50 = scalar_select %p49, 0, %s48
      %s51 = sadd.s32 1, %s42
      %s52 = scalar_select %p49, %s51, %s42
      %p53 = scmp.ge.s32.totalorder %s52, 1
      %s54 = scalar_select %p53, 0, %s52
      %s55 = ssub.s32 %s42, %s54
      %p56 = scmp.eq.s32.totalorder %s55, 0
      %s58 = sadd.s32 %s57, 1
      %s59 = scalar_select %p56, %s57, %s58
      %p62 = pneg %p56
      %p63 = scmp.eq.s32.totalorder %s35, 1
      %p64 = por %p62, %p63
      %p65 = scmp.ne.s32.totalorder %s57, %s60
      %p66 = scmp.eq.s32.totalorder %s35, 0
      %p67 = por %p65, %p66
      %p68 = scmp.ne.s32.totalorder %s57, %s60
      %p69 = scmp.eq.s32.totalorder %s40, 1
      %p70 = por %p68, %p69
      %p71 = scmp.ne.s32.totalorder %s60, %s61
      %p72 = scmp.eq.s32.totalorder %s40, 0
      %p73 = por %p71, %p72
      %p74 = scmp.ne.s32.totalorder %s60, %s61
      %p75 = scmp.eq.s32.totalorder %s41, 1
      %p76 = por %p74, %p75
      %p78 = scmp.ne.s32.totalorder %s61, %s77
      %p79 = scmp.eq.s32.totalorder %s41, 0
      %p80 = por %p78, %p79
      %s82 = sadd.s32 %s81, 1
      %p85 = scmp.eq.s32.totalorder %s35, 1
      %p86 = scmp.ne.s32.totalorder %s81, %s83
      %p87 = scmp.eq.s32.totalorder %s35, 0
      %p88 = por %p86, %p87
      %p89 = scmp.ne.s32.totalorder %s81, %s83
      %p90 = scmp.eq.s32.totalorder %s40, 1
      %p91 = por %p89, %p90
      %p92 = scmp.ne.s32.totalorder %s83, %s84
      %p93 = scmp.eq.s32.totalorder %s40, 0
      %p94 = por %p92, %p93
      %p95 = scmp.ne.s32.totalorder %s83, %s84
      %p96 = scmp.eq.s32.totalorder %s41, 1
      %p97 = por %p95, %p96
      %p99 = scmp.ne.s32.totalorder %s84, %s98
      %p100 = scmp.eq.s32.totalorder %s41, 0
      %p101 = por %p99, %p100
      %s103 = sadd.s32 %s102, 1
      %p106 = scmp.eq.s32.totalorder %s35, 1
      %p107 = scmp.ne.s32.totalorder %s102, %s104
      %p108 = scmp.eq.s32.totalorder %s35, 0
      %p109 = por %p107, %p108
      %p110 = scmp.ne.s32.totalorder %s102, %s104
      %p111 = scmp.eq.s32.totalorder %s40, 1
      %p112 = por %p110, %p111
      %p113 = scmp.ne.s32.totalorder %s104, %s105
      %p114 = scmp.eq.s32.totalorder %s40, 0
      %p115 = por %p113, %p114
      %p116 = scmp.ne.s32.totalorder %s104, %s105
      %p117 = scmp.eq.s32.totalorder %s41, 1
      %p118 = por %p116, %p117
      %p120 = scmp.ne.s32.totalorder %s105, %s119
      %p121 = scmp.eq.s32.totalorder %s41, 0
      %p122 = por %p120, %p121
      %s123 = ssub.s32 %s42, %s54
      %p124 = scmp.eq.s32.totalorder %s123, 0
      %s126 = sadd.s32 %s125, 1
      %s127 = scalar_select %p124, %s125, %s126
      %p130 = pneg %p124
      %p131 = scmp.eq.s32.totalorder %s35, 1
      %p132 = por %p130, %p131
      %p133 = scmp.ne.s32.totalorder %s125, %s128
      %p134 = scmp.eq.s32.totalorder %s35, 0
      %p135 = por %p133, %p134
      %p136 = scmp.ne.s32.totalorder %s125, %s128
      %p137 = scmp.eq.s32.totalorder %s40, 1
      %p138 = por %p136, %p137
      %p139 = scmp.ne.s32.totalorder %s128, %s129
      %p140 = scmp.eq.s32.totalorder %s40, 0
      %p141 = por %p139, %p140
      %p142 = scmp.ne.s32.totalorder %s128, %s129
      %p143 = scmp.eq.s32.totalorder %s41, 1
      %p144 = por %p142, %p143
      %p146 = scmp.ne.s32.totalorder %s129, %s145
      %p147 = scmp.eq.s32.totalorder %s41, 0
      %p148 = por %p146, %p147
      %s149 = ssub.s32 %s42, %s54
      %p150 = scmp.eq.s32.totalorder %s149, 0
      %s152 = sadd.s32 %s151, 1
      %s153 = scalar_select %p150, %s151, %s152
      %p156 = pneg %p150
      %p157 = scmp.eq.s32.totalorder %s35, 1
      %p158 = por %p156, %p157
      %p159 = scmp.ne.s32.totalorder %s151, %s154
      %p160 = scmp.eq.s32.totalorder %s35, 0
      %p161 = por %p159, %p160
      %p162 = scmp.ne.s32.totalorder %s151, %s154
      %p163 = scmp.eq.s32.totalorder %s40, 1
      %p164 = por %p162, %p163
      %p165 = scmp.ne.s32.totalorder %s154, %s155
      %p166 = scmp.eq.s32.totalorder %s40, 0
      %p167 = por %p165, %p166
      %p168 = scmp.ne.s32.totalorder %s154, %s155
      %p169 = scmp.eq.s32.totalorder %s41, 1
      %p170 = por %p168, %p169
      %p172 = scmp.ne.s32.totalorder %s155, %s171
      %p173 = scmp.eq.s32.totalorder %s41, 0
      %p174 = por %p172, %p173
      %s175 = ssub.s32 %s42, %s54
      %p176 = scmp.eq.s32.totalorder %s175, 0
      %s178 = sadd.s32 %s177, 1
      %s179 = scalar_select %p176, %s177, %s178
      %p182 = pneg %p176
      %p183 = scmp.eq.s32.totalorder %s35, 1
      %p184 = por %p182, %p183
      %p185 = scmp.ne.s32.totalorder %s177, %s180
      %p186 = scmp.eq.s32.totalorder %s35, 0
      %p187 = por %p185, %p186
      %p188 = scmp.ne.s32.totalorder %s177, %s180
      %p189 = scmp.eq.s32.totalorder %s40, 1
      %p190 = por %p188, %p189
      %p191 = scmp.ne.s32.totalorder %s180, %s181
      %p192 = scmp.eq.s32.totalorder %s40, 0
      %p193 = por %p191, %p192
      %p194 = scmp.ne.s32.totalorder %s180, %s181
      %p195 = scmp.eq.s32.totalorder %s41, 1
      %p196 = por %p194, %p195
      %p198 = scmp.ne.s32.totalorder %s181, %s197
      %p199 = scmp.eq.s32.totalorder %s41, 0
      %p200 = por %p198, %p199
      %s201 = ssub.s32 %s43, %s50
      %p202 = scmp.eq.s32.totalorder %s201, 0
      %s204 = sadd.s32 %s203, 1
      %s205 = scalar_select %p202, %s203, %s204
      %p208 = pneg %p202
      %p209 = scmp.eq.s32.totalorder %s35, 1
      %p210 = por %p208, %p209
      %p211 = scmp.ne.s32.totalorder %s203, %s206
      %p212 = scmp.eq.s32.totalorder %s35, 0
      %p213 = por %p211, %p212
      %p214 = scmp.ne.s32.totalorder %s203, %s206
      %p215 = scmp.eq.s32.totalorder %s40, 1
      %p216 = por %p214, %p215
      %p217 = scmp.ne.s32.totalorder %s206, %s207
      %p218 = scmp.eq.s32.totalorder %s40, 0
      %p219 = por %p217, %p218
      %p220 = scmp.ne.s32.totalorder %s206, %s207
      %p221 = scmp.eq.s32.totalorder %s41, 1
      %p222 = por %p220, %p221
      %p224 = scmp.ne.s32.totalorder %s207, %s223
      %p225 = scmp.eq.s32.totalorder %s41, 0
      %p226 = por %p224, %p225
      %s227 = ssub.s32 %s43, %s50
      %p228 = scmp.eq.s32.totalorder %s227, 0
      %s230 = sadd.s32 %s229, 1
      %s231 = scalar_select %p228, %s229, %s230
      %p234 = pneg %p228
      %p235 = scmp.eq.s32.totalorder %s35, 1
      %p236 = por %p234, %p235
      %p237 = scmp.ne.s32.totalorder %s229, %s232
      %p238 = scmp.eq.s32.totalorder %s35, 0
      %p239 = por %p237, %p238
      %p240 = scmp.ne.s32.totalorder %s229, %s232
      %p241 = scmp.eq.s32.totalorder %s40, 1
      %p242 = por %p240, %p241
      %p243 = scmp.ne.s32.totalorder %s232, %s233
      %p244 = scmp.eq.s32.totalorder %s40, 0
      %p245 = por %p243, %p244
      %p246 = scmp.ne.s32.totalorder %s232, %s233
      %p247 = scmp.eq.s32.totalorder %s41, 1
      %p248 = por %p246, %p247
      %p250 = scmp.ne.s32.totalorder %s233, %s249
      %p251 = scmp.eq.s32.totalorder %s41, 0
      %p252 = por %p250, %p251
      %s253 = ssub.s32 %s43, %s50
      %p254 = scmp.eq.s32.totalorder %s253, 0
      %s256 = sadd.s32 %s255, 1
      %s257 = scalar_select %p254, %s255, %s256
      %p260 = pneg %p254
      %p261 = scmp.eq.s32.totalorder %s35, 1
      %p262 = por %p260, %p261
      %p263 = scmp.ne.s32.totalorder %s255, %s258
      %p264 = scmp.eq.s32.totalorder %s35, 0
      %p265 = por %p263, %p264
      %p266 = scmp.ne.s32.totalorder %s255, %s258
      %p267 = scmp.eq.s32.totalorder %s40, 1
      %p268 = por %p266, %p267
      %p269 = scmp.ne.s32.totalorder %s258, %s259
      %p270 = scmp.eq.s32.totalorder %s40, 0
      %p271 = por %p269, %p270
      %p272 = scmp.ne.s32.totalorder %s258, %s259
      %p273 = scmp.eq.s32.totalorder %s41, 1
      %p274 = por %p272, %p273
      %p276 = scmp.ne.s32.totalorder %s259, %s275
      %p277 = scmp.eq.s32.totalorder %s41, 0
      %p278 = por %p276, %p277
      %s279 = ssub.s32 %s43, %s50
      %p280 = scmp.eq.s32.totalorder %s279, 0
      %s282 = sadd.s32 %s281, 1
      %s283 = scalar_select %p280, %s281, %s282
      %p286 = pneg %p280
      %p287 = scmp.eq.s32.totalorder %s35, 1
      %p288 = por %p286, %p287
      %p289 = scmp.ne.s32.totalorder %s281, %s284
      %p290 = scmp.eq.s32.totalorder %s35, 0
      %p291 = por %p289, %p290
      %p292 = scmp.ne.s32.totalorder %s281, %s284
      %p293 = scmp.eq.s32.totalorder %s40, 1
      %p294 = por %p292, %p293
      %p295 = scmp.ne.s32.totalorder %s284, %s285
      %p296 = scmp.eq.s32.totalorder %s40, 0
      %p297 = por %p295, %p296
      %p298 = scmp.ne.s32.totalorder %s284, %s285
      %p299 = scmp.eq.s32.totalorder %s41, 1
      %p300 = por %p298, %p299
      %p302 = scmp.ne.s32.totalorder %s285, %s301
      %p303 = scmp.eq.s32.totalorder %s41, 0
      %p304 = por %p302, %p303
      %s305 = ssub.s32 %s43, %s50
      %p306 = scmp.eq.s32.totalorder %s305, 0
      %s308 = sadd.s32 %s307, 1
      %s309 = scalar_select %p306, %s307, %s308
      %p312 = pneg %p306
      %p313 = scmp.eq.s32.totalorder %s35, 1
      %p314 = por %p312, %p313
      %p315 = scmp.ne.s32.totalorder %s307, %s310
      %p316 = scmp.eq.s32.totalorder %s35, 0
      %p317 = por %p315, %p316
      %p318 = scmp.ne.s32.totalorder %s307, %s310
      %p319 = scmp.eq.s32.totalorder %s40, 1
      %p320 = por %p318, %p319
      %p321 = scmp.ne.s32.totalorder %s310, %s311
      %p322 = scmp.eq.s32.totalorder %s40, 0
      %p323 = por %p321, %p322
      %p324 = scmp.ne.s32.totalorder %s310, %s311
      %p325 = scmp.eq.s32.totalorder %s41, 1
      %p326 = por %p324, %p325
      %p328 = scmp.ne.s32.totalorder %s311, %s327
      %p329 = scmp.eq.s32.totalorder %s41, 0
      %p330 = por %p328, %p329
      %s331 = ssub.s32 %s43, %s50
      %p332 = scmp.eq.s32.totalorder %s331, 0
      %s334 = sadd.s32 %s333, 1
      %s335 = scalar_select %p332, %s333, %s334
      %p338 = pneg %p332
      %p339 = scmp.eq.s32.totalorder %s35, 1
      %p340 = por %p338, %p339
      %p341 = scmp.ne.s32.totalorder %s333, %s336
      %p342 = scmp.eq.s32.totalorder %s35, 0
      %p343 = por %p341, %p342
      %p344 = scmp.ne.s32.totalorder %s333, %s336
      %p345 = scmp.eq.s32.totalorder %s40, 1
      %p346 = por %p344, %p345
      %p347 = scmp.ne.s32.totalorder %s336, %s337
      %p348 = scmp.eq.s32.totalorder %s40, 0
      %p349 = por %p347, %p348
      %p350 = scmp.ne.s32.totalorder %s336, %s337
      %p351 = scmp.eq.s32.totalorder %s41, 1
      %p352 = por %p350, %p351
      %p354 = scmp.ne.s32.totalorder %s337, %s353
      %p355 = scmp.eq.s32.totalorder %s41, 0
      %p356 = por %p354, %p355
      %s357 = ssub.s32 %s43, %s50
      %p358 = scmp.eq.s32.totalorder %s357, 0
      %s360 = sadd.s32 %s359, 1
      %s361 = scalar_select %p358, %s359, %s360
      %p364 = pneg %p358
      %p365 = scmp.eq.s32.totalorder %s35, 1
      %p366 = por %p364, %p365
      %p367 = scmp.ne.s32.totalorder %s359, %s362
      %p368 = scmp.eq.s32.totalorder %s35, 0
      %p369 = por %p367, %p368
      %p370 = scmp.ne.s32.totalorder %s359, %s362
      %p371 = scmp.eq.s32.totalorder %s40, 1
      %p372 = por %p370, %p371
      %p373 = scmp.ne.s32.totalorder %s362, %s363
      %p374 = scmp.eq.s32.totalorder %s40, 0
      %p375 = por %p373, %p374
      %p376 = scmp.ne.s32.totalorder %s362, %s363
      %p377 = scmp.eq.s32.totalorder %s41, 1
      %p378 = por %p376, %p377
      %p380 = scmp.ne.s32.totalorder %s363, %s379
      %p381 = scmp.eq.s32.totalorder %s41, 0
      %p382 = por %p380, %p381
      %s383 = ssub.s32 %s43, %s50
      %p384 = scmp.eq.s32.totalorder %s383, 0
      %s386 = sadd.s32 %s385, 1
      %s387 = scalar_select %p384, %s385, %s386
      %p390 = pneg %p384
      %p391 = scmp.eq.s32.totalorder %s35, 1
      %p392 = por %p390, %p391
      %p393 = scmp.ne.s32.totalorder %s385, %s388
      %p394 = scmp.eq.s32.totalorder %s35, 0
      %p395 = por %p393, %p394
      %p396 = scmp.ne.s32.totalorder %s385, %s388
      %p397 = scmp.eq.s32.totalorder %s40, 1
      %p398 = por %p396, %p397
      %p399 = scmp.ne.s32.totalorder %s388, %s389
      %p400 = scmp.eq.s32.totalorder %s40, 0
      %p401 = por %p399, %p400
      %p402 = scmp.ne.s32.totalorder %s388, %s389
      %p403 = scmp.eq.s32.totalorder %s41, 1
      %p404 = por %p402, %p403
      %p406 = scmp.ne.s32.totalorder %s389, %s405
      %p407 = scmp.eq.s32.totalorder %s41, 0
      %p408 = por %p406, %p407
      %s409 = ssub.s32 %s43, %s50
      %p410 = scmp.eq.s32.totalorder %s409, 0
      %s412 = sadd.s32 %s411, 1
      %s413 = scalar_select %p410, %s411, %s412
      %p416 = pneg %p410
      %p417 = scmp.eq.s32.totalorder %s35, 1
      %p418 = por %p416, %p417
      %p419 = scmp.ne.s32.totalorder %s411, %s414
      %p420 = scmp.eq.s32.totalorder %s35, 0
      %p421 = por %p419, %p420
      %p422 = scmp.ne.s32.totalorder %s411, %s414
      %p423 = scmp.eq.s32.totalorder %s40, 1
      %p424 = por %p422, %p423
      %p425 = scmp.ne.s32.totalorder %s414, %s415
      %p426 = scmp.eq.s32.totalorder %s40, 0
      %p427 = por %p425, %p426
      %p428 = scmp.ne.s32.totalorder %s414, %s415
      %p429 = scmp.eq.s32.totalorder %s41, 1
      %p430 = por %p428, %p429
      %p432 = scmp.ne.s32.totalorder %s415, %s431
      %p433 = scmp.eq.s32.totalorder %s41, 0
      %p434 = por %p432, %p433
      %s435 = ssub.s32 %s43, %s50
      %p436 = scmp.eq.s32.totalorder %s435, 0
      %s438 = sadd.s32 %s437, 1
      %s439 = scalar_select %p436, %s437, %s438
      %p442 = pneg %p436
      %p443 = scmp.eq.s32.totalorder %s35, 1
      %p444 = por %p442, %p443
      %p445 = scmp.ne.s32.totalorder %s437, %s440
      %p446 = scmp.eq.s32.totalorder %s35, 0
      %p447 = por %p445, %p446
      %p448 = scmp.ne.s32.totalorder %s437, %s440
      %p449 = scmp.eq.s32.totalorder %s40, 1
      %p450 = por %p448, %p449
      %p451 = scmp.ne.s32.totalorder %s440, %s441
      %p452 = scmp.eq.s32.totalorder %s40, 0
      %p453 = por %p451, %p452
      %p454 = scmp.ne.s32.totalorder %s440, %s441
      %p455 = scmp.eq.s32.totalorder %s41, 1
      %p456 = por %p454, %p455
      %p458 = scmp.ne.s32.totalorder %s441, %s457
      %p459 = scmp.eq.s32.totalorder %s41, 0
      %p460 = por %p458, %p459
      %s461 = ssub.s32 %s43, %s50
      %p462 = scmp.eq.s32.totalorder %s461, 0
      %s464 = sadd.s32 %s463, 1
      %s465 = scalar_select %p462, %s463, %s464
      %p468 = pneg %p462
      %p469 = scmp.eq.s32.totalorder %s35, 1
      %p470 = por %p468, %p469
      %p471 = scmp.ne.s32.totalorder %s463, %s466
      %p472 = scmp.eq.s32.totalorder %s35, 0
      %p473 = por %p471, %p472
      %p474 = scmp.ne.s32.totalorder %s463, %s466
      %p475 = scmp.eq.s32.totalorder %s40, 1
      %p476 = por %p474, %p475
      %p477 = scmp.ne.s32.totalorder %s466, %s467
      %p478 = scmp.eq.s32.totalorder %s40, 0
      %p479 = por %p477, %p478
      %p480 = scmp.ne.s32.totalorder %s466, %s467
      %p481 = scmp.eq.s32.totalorder %s41, 1
      %p482 = por %p480, %p481
      %p484 = scmp.ne.s32.totalorder %s467, %s483
      %p485 = scmp.eq.s32.totalorder %s41, 0
      %p486 = por %p484, %p485
      %s488 = sadd.s32 %s487, 1
      %p491 = scmp.eq.s32.totalorder %s35, 1
      %p492 = scmp.ne.s32.totalorder %s487, %s489
      %p493 = scmp.eq.s32.totalorder %s35, 0
      %p494 = por %p492, %p493
      %p495 = scmp.ne.s32.totalorder %s487, %s489
      %p496 = scmp.eq.s32.totalorder %s40, 1
      %p497 = por %p495, %p496
      %p498 = scmp.ne.s32.totalorder %s489, %s490
      %p499 = scmp.eq.s32.totalorder %s40, 0
      %p500 = por %p498, %p499
      %p501 = scmp.ne.s32.totalorder %s489, %s490
      %p502 = scmp.eq.s32.totalorder %s41, 1
      %p503 = por %p501, %p502
      %p505 = scmp.ne.s32.totalorder %s490, %s504
      %p506 = scmp.eq.s32.totalorder %s41, 0
      %p507 = por %p505, %p506
      %s509 = sadd.s32 %s508, 1
      %p512 = scmp.eq.s32.totalorder %s35, 1
      %p513 = scmp.ne.s32.totalorder %s508, %s510
      %p514 = scmp.eq.s32.totalorder %s35, 0
      %p515 = por %p513, %p514
      %p516 = scmp.ne.s32.totalorder %s508, %s510
      %p517 = scmp.eq.s32.totalorder %s40, 1
      %p518 = por %p516, %p517
      %p519 = scmp.ne.s32.totalorder %s510, %s511
      %p520 = scmp.eq.s32.totalorder %s40, 0
      %p521 = por %p519, %p520
      %p522 = scmp.ne.s32.totalorder %s510, %s511
      %p523 = scmp.eq.s32.totalorder %s41, 1
      %p524 = por %p522, %p523
      %p526 = scmp.ne.s32.totalorder %s511, %s525
      %p527 = scmp.eq.s32.totalorder %s41, 0
      %p528 = por %p526, %p527
      %s529 = ssub.s32 %s42, %s54
      %p530 = scmp.eq.s32.totalorder %s529, 0
      %s532 = sadd.s32 %s531, 1
      %s533 = scalar_select %p530, %s531, %s532
      %p536 = pneg %p530
      %p537 = scmp.eq.s32.totalorder %s35, 1
      %p538 = por %p536, %p537
      %p539 = scmp.ne.s32.totalorder %s531, %s534
      %p540 = scmp.eq.s32.totalorder %s35, 0
      %p541 = por %p539, %p540
      %p542 = scmp.ne.s32.totalorder %s531, %s534
      %p543 = scmp.eq.s32.totalorder %s40, 1
      %p544 = por %p542, %p543
      %p545 = scmp.ne.s32.totalorder %s534, %s535
      %p546 = scmp.eq.s32.totalorder %s40, 0
      %p547 = por %p545, %p546
      %p548 = scmp.ne.s32.totalorder %s534, %s535
      %p549 = scmp.eq.s32.totalorder %s41, 1
      %p550 = por %p548, %p549
      %p552 = scmp.ne.s32.totalorder %s535, %s551
      %p553 = scmp.eq.s32.totalorder %s41, 0
      %p554 = por %p552, %p553
      %s555 = ssub.s32 %s42, %s54
      %p556 = scmp.eq.s32.totalorder %s555, 0
      %s558 = sadd.s32 %s557, 1
      %s559 = scalar_select %p556, %s557, %s558
      %p562 = pneg %p556
      %p563 = scmp.eq.s32.totalorder %s35, 1
      %p564 = por %p562, %p563
      %p565 = scmp.ne.s32.totalorder %s557, %s560
      %p566 = scmp.eq.s32.totalorder %s35, 0
      %p567 = por %p565, %p566
      %p568 = scmp.ne.s32.totalorder %s557, %s560
      %p569 = scmp.eq.s32.totalorder %s40, 1
      %p570 = por %p568, %p569
      %p571 = scmp.ne.s32.totalorder %s560, %s561
      %p572 = scmp.eq.s32.totalorder %s40, 0
      %p573 = por %p571, %p572
      %p574 = scmp.ne.s32.totalorder %s560, %s561
      %p575 = scmp.eq.s32.totalorder %s41, 1
      %p576 = por %p574, %p575
      %p578 = scmp.ne.s32.totalorder %s561, %s577
      %p579 = scmp.eq.s32.totalorder %s41, 0
      %p580 = por %p578, %p579
      %p581 = scmp.le.s32.totalorder 1, %s35
      %p582 = scmp.lt.s32.totalorder %s35, 3
      %p583 = pnand %p581, %p582
      %p584 = pneg %p583
      // Predicated region
      $region9: #{decoder_forward.1} parent=5 // pred_check
        _
      $region10: #{decoder_forward.1} parent=5 // pred_check_branch
        %586 = sbr.rel (%p583) target = $region12
      $region11: #{decoder_forward.1} parent=5 // pred_region
        %s587 = ssub.s32 %s35, 1
        // Predicated region
        $region13: #{decoder_forward.1} parent=11 // pred_check
          %p588 = pneg %p73
        $region14: #{decoder_forward.1} parent=11 // pred_check_branch
          %590 = sbr.rel (%p588) target = $region16
        $region15: #{decoder_forward.1} parent=11 // pred_region
          %s591 = smul.u32 2, %s44
          %p592 = scmp.lt.s32.totalorder %s591, 1
          %s593 = scalar_select %p592, %s591, 1
          %s594 = smul.addr %s593, 8
          %s595 = scalar_lea.vmem %s0, %s594
          %s596 = smul.u32 2, %s44
        $region16: #{decoder_forward.1} parent=11 // pred_fallthru
          _
        // Predicated region
        $region17: #{decoder_forward.1} parent=11 // pred_check
          %p597 = pneg %p94
        $region18: #{decoder_forward.1} parent=11 // pred_check_branch
          %599 = sbr.rel (%p597) target = $region20
        $region19: #{decoder_forward.1} parent=11 // pred_region
          _
        $region20: #{decoder_forward.1} parent=11 // pred_fallthru
          _
        // Predicated region
        $region21: #{decoder_forward.1} parent=11 // pred_check
          %p600 = pneg %p115
        $region22: #{decoder_forward.1} parent=11 // pred_check_branch
          %602 = sbr.rel (%p600) target = $region24
        $region23: #{decoder_forward.1} parent=11 // pred_region
          _
        $region24: #{decoder_forward.1} parent=11 // pred_fallthru
          _
        // Predicated region
        $region25: #{decoder_forward.1} parent=11 // pred_check
          %p603 = pneg %p141
        $region26: #{decoder_forward.1} parent=11 // pred_check_branch
          %605 = sbr.rel (%p603) target = $region28
        $region27: #{decoder_forward.1} parent=11 // pred_region
          %s606 = smul.u32 2, %s44
          %p607 = scmp.lt.s32.totalorder %s606, 1
          %s608 = scalar_select %p607, %s606, 1
          %s609 = smul.addr %s608, 2
          %s610 = smul.addr %s609, 8
          %s611 = scalar_lea.vmem %s3, %s610
          %s612 = smul.u32 2, %s44
        $region28: #{decoder_forward.1} parent=11 // pred_fallthru
          _
        // Predicated region
        $region29: #{decoder_forward.1} parent=11 // pred_check
          %p613 = pneg %p167
        $region30: #{decoder_forward.1} parent=11 // pred_check_branch
          %615 = sbr.rel (%p613) target = $region32
        $region31: #{decoder_forward.1} parent=11 // pred_region
          %s616 = smul.u32 2, %s44
          %p617 = scmp.lt.s32.totalorder %s616, 1
          %s618 = scalar_select %p617, %s616, 1
          %s619 = scalar_lea.vmem %s4, %s618
          %s620 = smul.u32 2, %s44
        $region32: #{decoder_forward.1} parent=11 // pred_fallthru
          _
        // Predicated region
        $region33: #{decoder_forward.1} parent=11 // pred_check
          %p621 = pneg %p193
        $region34: #{decoder_forward.1} parent=11 // pred_check_branch
          %623 = sbr.rel (%p621) target = $region36
        $region35: #{decoder_forward.1} parent=11 // pred_region
          %s624 = smul.u32 2, %s44
          %p625 = scmp.lt.s32.totalorder %s624, 1
          %s626 = scalar_select %p625, %s624, 1
          %s627 = scalar_lea.vmem %s5, %s626
          %s628 = smul.u32 2, %s44
        $region36: #{decoder_forward.1} parent=11 // pred_fallthru
          _
        // Predicated region
        $region37: #{decoder_forward.1} parent=11 // pred_check
          %p629 = pneg %p500
        $region38: #{decoder_forward.1} parent=11 // pred_check_branch
          %631 = sbr.rel (%p629) target = $region40
        $region39: #{decoder_forward.1} parent=11 // pred_region
          _
        $region40: #{decoder_forward.1} parent=11 // pred_fallthru
          _
        // Predicated region
        $region41: #{decoder_forward.1} parent=11 // pred_check
          %p632 = pneg %p521
        $region42: #{decoder_forward.1} parent=11 // pred_check_branch
          %634 = sbr.rel (%p632) target = $region44
        $region43: #{decoder_forward.1} parent=11 // pred_region
          %s636 = ssub.s32 16, 16
          %637 = vsyncadd [#allocation7], %s636
          %s639 = sshll.u32 [#allocation8], 4
          %s640 = int_to_ptr.vmem [resolvable:$true] %s639
          %642 = dma.hbm_to_vmem [thread:$0]  %s18, 16, %s640, [#allocation7]
        $region44: #{decoder_forward.1} parent=11 // pred_fallthru
          _
      $region12: #{decoder_forward.1} parent=5 // pred_fallthru
        _
      %p643 = scmp.lt.s32.totalorder %s35, 2
      // Predicated region
      $region45: #{decoder_forward.1} parent=5 // pred_check
        %p644 = pneg %p643
      $region46: #{decoder_forward.1} parent=5 // pred_check_branch
        %646 = sbr.rel (%p644) target = $region48
      $region47: #{decoder_forward.1} parent=5 // pred_region
        // Predicated region
        $region49: #{decoder_forward.1} parent=47 // pred_check
          %p647 = pneg %p213
        $region50: #{decoder_forward.1} parent=47 // pred_check_branch
          %649 = sbr.rel (%p647) target = $region52
        $region51: #{decoder_forward.1} parent=47 // pred_region
          %p650 = scmp.lt.s32.totalorder %s43, 1
          %s651 = scalar_select %p650, %s43, 1
          %s652 = smul.addr %s651, 4
          %s653 = smul.addr %s652, 4
          %s654 = scalar_lea.vmem %s6, %s653
        $region52: #{decoder_forward.1} parent=47 // pred_fallthru
          _
        // Predicated region
        $region53: #{decoder_forward.1} parent=47 // pred_check
          %p655 = pneg %p239
        $region54: #{decoder_forward.1} parent=47 // pred_check_branch
          %657 = sbr.rel (%p655) target = $region56
        $region55: #{decoder_forward.1} parent=47 // pred_region
          %p658 = scmp.lt.s32.totalorder %s43, 1
          %s659 = scalar_select %p658, %s43, 1
          %s660 = smul.addr %s659, 4
          %s661 = smul.addr %s660, 4
          %s662 = scalar_lea.vmem %s7, %s661
        $region56: #{decoder_forward.1} parent=47 // pred_fallthru
          _
        // Predicated region
        $region57: #{decoder_forward.1} parent=47 // pred_check
          %p663 = pneg %p265
        $region58: #{decoder_forward.1} parent=47 // pred_check_branch
          %665 = sbr.rel (%p663) target = $region60
        $region59: #{decoder_forward.1} parent=47 // pred_region
          %p666 = scmp.lt.s32.totalorder %s43, 1
          %s667 = scalar_select %p666, %s43, 1
          %s668 = smul.addr %s667, 4
          %s669 = smul.addr %s668, 4
          %s670 = scalar_lea.vmem %s8, %s669
        $region60: #{decoder_forward.1} parent=47 // pred_fallthru
          _
        // Predicated region
        $region61: #{decoder_forward.1} parent=47 // pred_check
          %p671 = pneg %p291
        $region62: #{decoder_forward.1} parent=47 // pred_check_branch
          %673 = sbr.rel (%p671) target = $region64
        $region63: #{decoder_forward.1} parent=47 // pred_region
          %p674 = scmp.lt.s32.totalorder %s43, 1
          %s675 = scalar_select %p674, %s43, 1
          %s676 = smul.addr %s675, 4
          %s677 = smul.addr %s676, 4
          %s678 = scalar_lea.vmem %s9, %s677
        $region64: #{decoder_forward.1} parent=47 // pred_fallthru
          _
        // Predicated region
        $region65: #{decoder_forward.1} parent=47 // pred_check
          %p679 = pneg %p317
        $region66: #{decoder_forward.1} parent=47 // pred_check_branch
          %681 = sbr.rel (%p679) target = $region68
        $region67: #{decoder_forward.1} parent=47 // pred_region
          %p682 = scmp.lt.s32.totalorder %s43, 1
          %s683 = scalar_select %p682, %s43, 1
          %s684 = smul.addr %s683, 4
          %s685 = smul.addr %s684, 4
          %s686 = scalar_lea.vmem %s10, %s685
        $region68: #{decoder_forward.1} parent=47 // pred_fallthru
          _
        // Predicated region
        $region69: #{decoder_forward.1} parent=47 // pred_check
          %p687 = pneg %p343
        $region70: #{decoder_forward.1} parent=47 // pred_check_branch
          %689 = sbr.rel (%p687) target = $region72
        $region71: #{decoder_forward.1} parent=47 // pred_region
          %p690 = scmp.lt.s32.totalorder %s43, 1
          %s691 = scalar_select %p690, %s43, 1
          %s692 = smul.addr %s691, 12
          %s693 = smul.addr %s692, 4
          %s694 = scalar_lea.vmem %s11, %s693
        $region72: #{decoder_forward.1} parent=47 // pred_fallthru
          _
        // Predicated region
        $region73: #{decoder_forward.1} parent=47 // pred_check
          %p695 = pneg %p369
        $region74: #{decoder_forward.1} parent=47 // pred_check_branch
          %697 = sbr.rel (%p695) target = $region76
        $region75: #{decoder_forward.1} parent=47 // pred_region
          %s698 = sand.u32 %s359, 1
          %s699 = scalar_lea.sflag [#allocation4], %s698
          %s700 = sand.u32 %s359, 1
          %s701 = scalar_lea.vmem [#allocation3], %s700
          %s703 = ssub.s32 16, 16
          %704 = vsyncadd %s699, %s703
          %s705 = smul.addr %s43, 16
          %s706 = scalar_lea.hbm %s12, %s705
          %s708 = sshll.u32 %s701, 4
          %s709 = int_to_ptr.vmem [resolvable:$true] %s708
          %711 = dma.hbm_to_vmem [thread:$0]  %s706, 16, %s709, %s699
        $region76: #{decoder_forward.1} parent=47 // pred_fallthru
          _
        // Predicated region
        $region77: #{decoder_forward.1} parent=47 // pred_check
          %p712 = pneg %p395
        $region78: #{decoder_forward.1} parent=47 // pred_check_branch
          %714 = sbr.rel (%p712) target = $region80
        $region79: #{decoder_forward.1} parent=47 // pred_region
          %p715 = scmp.lt.s32.totalorder %s43, 1
          %s716 = scalar_select %p715, %s43, 1
          %s717 = smul.addr %s716, 24
          %s718 = smul.addr %s717, 4
          %s719 = scalar_lea.vmem %s13, %s718
        $region80: #{decoder_forward.1} parent=47 // pred_fallthru
          _
        // Predicated region
        $region81: #{decoder_forward.1} parent=47 // pred_check
          %p720 = pneg %p421
        $region82: #{decoder_forward.1} parent=47 // pred_check_branch
          %722 = sbr.rel (%p720) target = $region84
        $region83: #{decoder_forward.1} parent=47 // pred_region
          %s723 = sand.u32 %s35, 1
          %s724 = scalar_lea.sflag [#allocation7], %s723
          %s725 = sand.u32 %s411, 1
          %s726 = scalar_lea.vmem [#allocation6], %s725
          %s728 = ssub.s32 16, 16
          %729 = vsyncadd %s724, %s728
          %s730 = smul.addr %s43, 16
          %s731 = scalar_lea.hbm %s14, %s730
          %s733 = sshll.u32 %s726, 4
          %s734 = int_to_ptr.vmem [resolvable:$true] %s733
          %736 = dma.hbm_to_vmem [thread:$0]  %s731, 16, %s734, %s724
        $region84: #{decoder_forward.1} parent=47 // pred_fallthru
          _
        // Predicated region
        $region85: #{decoder_forward.1} parent=47 // pred_check
          %p737 = pneg %p447
        $region86: #{decoder_forward.1} parent=47 // pred_check_branch
          %739 = sbr.rel (%p737) target = $region88
        $region87: #{decoder_forward.1} parent=47 // pred_region
          %p740 = scmp.lt.s32.totalorder %s43, 1
          %s741 = scalar_select %p740, %s43, 1
          %s742 = smul.addr %s741, 4
          %s743 = scalar_lea.vmem %s15, %s742
        $region88: #{decoder_forward.1} parent=47 // pred_fallthru
          _
        // Predicated region
        $region89: #{decoder_forward.1} parent=47 // pred_check
          %p744 = pneg %p473
        $region90: #{decoder_forward.1} parent=47 // pred_check_branch
          %746 = sbr.rel (%p744) target = $region92
        $region91: #{decoder_forward.1} parent=47 // pred_region
          %p747 = scmp.lt.s32.totalorder %s43, 1
          %s748 = scalar_select %p747, %s43, 1
          %s749 = smul.addr %s748, 4
          %s750 = scalar_lea.vmem %s16, %s749
        $region92: #{decoder_forward.1} parent=47 // pred_fallthru
          _
      $region48: #{decoder_forward.1} parent=5 // pred_fallthru
        _
      %p751 = scmp.le.s32.totalorder 1, %s35
      %p752 = scmp.lt.s32.totalorder %s35, 3
      %p753 = pnand %p751, %p752
      %p754 = pneg %p753
      // Predicated region
      $region93: #{decoder_forward.1} parent=5 // pred_check
        _
      $region94: #{decoder_forward.1} parent=5 // pred_check_branch
        %756 = sbr.rel (%p753) target = $region96
      $region95: #{decoder_forward.1} parent=5 // pred_region
        %s757 = ssub.s32 %s35, 1
        %s758 = sand.u32 %s362, 1
        %s759 = scalar_lea.sflag [#allocation4], %s758
        %s760 = sand.u32 %s362, 1
        %s761 = scalar_lea.vmem [#allocation3], %s760
        // Predicated region
        $region97: #{decoder_forward.1} parent=95 // pred_check
          %p762 = pneg %p375
        $region98: #{decoder_forward.1} parent=95 // pred_check_branch
          %764 = sbr.rel (%p762) target = $region100
        $region99: #{decoder_forward.1} parent=95 // pred_region
          %765 = dma.done %s759, 16
        $region100: #{decoder_forward.1} parent=95 // pred_fallthru
          _
        %s766 = sand.u32 %s40, 1
        %s767 = scalar_lea.sflag [#allocation7], %s766
        %s768 = sand.u32 %s414, 1
        %s769 = scalar_lea.vmem [#allocation6], %s768
        // Predicated region
        $region101: #{decoder_forward.1} parent=95 // pred_check
          %p770 = pneg %p427
        $region102: #{decoder_forward.1} parent=95 // pred_check_branch
          %772 = sbr.rel (%p770) target = $region104
        $region103: #{decoder_forward.1} parent=95 // pred_region
          %773 = dma.done %s767, 16
        $region104: #{decoder_forward.1} parent=95 // pred_fallthru
          _
        // Predicated region
        $region105: #{decoder_forward.1} parent=95 // pred_check
          %p774 = pneg %p521
        $region106: #{decoder_forward.1} parent=95 // pred_check_branch
          %776 = sbr.rel (%p774) target = $region108
        $region107: #{decoder_forward.1} parent=95 // pred_region
          %777 = dma.done [#allocation7], 16
        $region108: #{decoder_forward.1} parent=95 // pred_fallthru
          _
        %s778 = smul.u32 2, %s44
        %p779 = scmp.lt.s32.totalorder %s778, 1
        %s780 = scalar_select %p779, %s778, 1
        %s781 = smul.addr %s780, 8
        %s782 = scalar_lea.vmem %s0, %s781
        %p783 = pneg %p73
        %p784 = pneg %p70
        %p785 = pneg %p94
        %p786 = pneg %p91
        %p787 = pneg %p115
        %p788 = pneg %p112
        %s789 = smul.u32 2, %s44
        %p790 = scmp.lt.s32.totalorder %s789, 1
        %s791 = scalar_select %p790, %s789, 1
        %s792 = smul.addr %s791, 2
        %s793 = smul.addr %s792, 8
        %s794 = scalar_lea.vmem %s3, %s793
        %p795 = pneg %p141
        %p796 = pneg %p138
        %s797 = smul.u32 2, %s44
        %p798 = scmp.lt.s32.totalorder %s797, 1
        %s799 = scalar_select %p798, %s797, 1
        %s800 = scalar_lea.vmem %s4, %s799
        %p801 = pneg %p167
        %p802 = pneg %p164
        %s803 = smul.u32 2, %s44
        %p804 = scmp.lt.s32.totalorder %s803, 1
        %s805 = scalar_select %p804, %s803, 1
        %s806 = scalar_lea.vmem %s5, %s805
        %p807 = pneg %p193
        %p808 = pneg %p190
        %p809 = scmp.lt.s32.totalorder %s45, 1
        %s810 = scalar_select %p809, %s45, 1
        %s811 = smul.addr %s810, 4
        %s812 = smul.addr %s811, 4
        %s813 = scalar_lea.vmem %s6, %s812
        %p814 = pneg %p219
        %p815 = pneg %p216
        %p816 = scmp.lt.s32.totalorder %s45, 1
        %s817 = scalar_select %p816, %s45, 1
        %s818 = smul.addr %s817, 4
        %s819 = smul.addr %s818, 4
        %s820 = scalar_lea.vmem %s7, %s819
        %p821 = pneg %p245
        %p822 = pneg %p242
        %p823 = scmp.lt.s32.totalorder %s45, 1
        %s824 = scalar_select %p823, %s45, 1
        %s825 = smul.addr %s824, 4
        %s826 = smul.addr %s825, 4
        %s827 = scalar_lea.vmem %s8, %s826
        %p828 = pneg %p271
        %p829 = pneg %p268
        %p830 = scmp.lt.s32.totalorder %s45, 1
        %s831 = scalar_select %p830, %s45, 1
        %s832 = smul.addr %s831, 4
        %s833 = smul.addr %s832, 4
        %s834 = scalar_lea.vmem %s9, %s833
        %p835 = pneg %p297
        %p836 = pneg %p294
        %p837 = scmp.lt.s32.totalorder %s45, 1
        %s838 = scalar_select %p837, %s45, 1
        %s839 = smul.addr %s838, 4
        %s840 = smul.addr %s839, 4
        %s841 = scalar_lea.vmem %s10, %s840
        %p842 = pneg %p323
        %p843 = pneg %p320
        %p844 = scmp.lt.s32.totalorder %s45, 1
        %s845 = scalar_select %p844, %s45, 1
        %s846 = smul.addr %s845, 12
        %s847 = smul.addr %s846, 4
        %s848 = scalar_lea.vmem %s11, %s847
        %p849 = pneg %p349
        %p850 = pneg %p346
        %s851 = sand.u32 %s362, 1
        %s852 = scalar_lea.sflag [#allocation4], %s851
        %s853 = sand.u32 %s362, 1
        %s854 = scalar_lea.vmem [#allocation3], %s853
        %p855 = pneg %p375
        %p856 = pneg %p372
        %p857 = scmp.lt.s32.totalorder %s45, 1
        %s858 = scalar_select %p857, %s45, 1
        %s859 = smul.addr %s858, 24
        %s860 = smul.addr %s859, 4
        %s861 = scalar_lea.vmem %s13, %s860
        %p862 = pneg %p401
        %p863 = pneg %p398
        %s864 = sand.u32 %s40, 1
        %s865 = scalar_lea.sflag [#allocation7], %s864
        %s866 = sand.u32 %s414, 1
        %s867 = scalar_lea.vmem [#allocation6], %s866
        %p868 = pneg %p427
        %p869 = pneg %p424
        %p870 = scmp.lt.s32.totalorder %s45, 1
        %s871 = scalar_select %p870, %s45, 1
        %s872 = smul.addr %s871, 4
        %s873 = scalar_lea.vmem %s15, %s872
        %p874 = pneg %p453
        %p875 = pneg %p450
        %p876 = scmp.lt.s32.totalorder %s45, 1
        %s877 = scalar_select %p876, %s45, 1
        %s878 = smul.addr %s877, 4
        %s879 = scalar_lea.vmem %s16, %s878
        %p880 = pneg %p479
        %p881 = pneg %p476
        %p882 = pneg %p500
        %p883 = pneg %p497
        %p884 = pneg %p521
        %p885 = pneg %p518
        %p886 = pneg %p547
        %p887 = pneg %p544
        %p888 = pneg %p573
        %p889 = pneg %p570
        %s890 = smul.u32 2, %s44
        %p891 = scmp.lt.s32.totalorder %s890, 1
        %s892 = scalar_select %p891, %s890, 1
        %s893 = smul.addr %s892, 8
        %s894 = scalar_lea.vmem %s0, %s893
        %s895 = smul.u32 2, %s44
        %s896 = smul.u32 2, %s44
        %p897 = scmp.lt.s32.totalorder %s896, 1
        %s898 = scalar_select %p897, %s896, 1
        %s899 = smul.addr %s898, 2
        %s900 = smul.addr %s899, 8
        %s901 = scalar_lea.vmem %s3, %s900
        %s902 = smul.u32 2, %s44
        %s903 = smul.u32 2, %s44
        %p904 = scmp.lt.s32.totalorder %s903, 1
        %s905 = scalar_select %p904, %s903, 1
        %s906 = scalar_lea.vmem %s4, %s905
        %s907 = smul.u32 2, %s44
        %s908 = smul.u32 2, %s44
        %p909 = scmp.lt.s32.totalorder %s908, 1
        %s910 = scalar_select %p909, %s908, 1
        %s911 = scalar_lea.vmem %s5, %s910
        %s912 = smul.u32 2, %s44
        %p913 = scmp.lt.s32.totalorder %s45, 1
        %s914 = scalar_select %p913, %s45, 1
        %s915 = smul.addr %s914, 4
        %s916 = smul.addr %s915, 4
        %s917 = scalar_lea.vmem %s6, %s916
        %p918 = scmp.lt.s32.totalorder %s45, 1
        %s919 = scalar_select %p918, %s45, 1
        %s920 = smul.addr %s919, 4
        %s921 = smul.addr %s920, 4
        %s922 = scalar_lea.vmem %s7, %s921
        %p923 = scmp.lt.s32.totalorder %s45, 1
        %s924 = scalar_select %p923, %s45, 1
        %s925 = smul.addr %s924, 4
        %s926 = smul.addr %s925, 4
        %s927 = scalar_lea.vmem %s8, %s926
        %p928 = scmp.lt.s32.totalorder %s45, 1
        %s929 = scalar_select %p928, %s45, 1
        %s930 = smul.addr %s929, 4
        %s931 = smul.addr %s930, 4
        %s932 = scalar_lea.vmem %s9, %s931
        %p933 = scmp.lt.s32.totalorder %s45, 1
        %s934 = scalar_select %p933, %s45, 1
        %s935 = smul.addr %s934, 4
        %s936 = smul.addr %s935, 4
        %s937 = scalar_lea.vmem %s10, %s936
        %p938 = scmp.lt.s32.totalorder %s45, 1
        %s939 = scalar_select %p938, %s45, 1
        %s940 = smul.addr %s939, 12
        %s941 = smul.addr %s940, 4
        %s942 = scalar_lea.vmem %s11, %s941
        %p943 = scmp.lt.s32.totalorder %s45, 1
        %s944 = scalar_select %p943, %s45, 1
        %s945 = smul.addr %s944, 24
        %s946 = smul.addr %s945, 4
        %s947 = scalar_lea.vmem %s13, %s946
        %p948 = scmp.lt.s32.totalorder %s45, 1
        %s949 = scalar_select %p948, %s45, 1
        %s950 = smul.addr %s949, 4
        %s951 = scalar_lea.vmem %s15, %s950
        %p952 = scmp.lt.s32.totalorder %s45, 1
        %s953 = scalar_select %p952, %s45, 1
        %s954 = smul.addr %s953, 4
        %s955 = scalar_lea.vmem %s16, %s954
        %s956 = smul.u32 2, %s44
        %s957 = smul.u32 2, %s44
        %p959 = scmp.eq.s32.totalorder %s45, 0
        // Predicated region
        $region109: #{decoder_forward.1} parent=95 // pred_check
          %p960 = pneg %p959
        $region110: #{decoder_forward.1} parent=95 // pred_check_branch
          %962 = sbr.rel (%p960) target = $region112
        $region111: #{decoder_forward.1} parent=95 // pred_region
          %v963 = vld [vmem:[%s894] sm:$0xff]
          %v964 = vld [vmem:[%s894 + $0x8] sm:$0xff]
          %v965 = vld [vmem:[%s2] sm:$0xf]
          %v966 = vld [vmem:[%s2 + $0x4] sm:$0xf]
          %v967 = vld [vmem:[%s2 + $0x8] sm:$0xf]
          %v968 = vld [vmem:[%s2 + $0xc] sm:$0xf]
          %v969 = vpack.c.bf16 %v964, %v963
          %v974 = vunpack.c.l.b16 %v965
          %v975 = vunpack.c.l.b16 %v966
          %v976 = vunpack.c.l.b16 %v967
          %v977 = vunpack.c.l.b16 %v968
          %v978 = vpack.c.b16 %v975, %v974
          %v979 = vpack.c.b16 %v977, %v976
          %vm982 = vcmask 261120
          %v984 = vsel %vm982, %v969, 0
          %986 = vmatprep.subr.bf16.mxu0 0
          %987 = vmatpush1.bf16.msra.mxu0 %v978
          %988 = vmatprep.subr.bf16.mxu0 0
          %989 = vmatpush1.bf16.msra.mxu0 %v979
          %990 = vmatprep.subr.bf16.mxu0 0
          %991 = vmatpush1.bf16.msra.mxu0 0
          %992 = vmatprep.subr.bf16.mxu0 0
          %993 = vmatpush1.bf16.msra.mxu0 0
          %994 = vmatprep.subr.bf16.mxu0 0
          %995 = vmatpush1.bf16.msra.mxu0 0
          %996 = vmatprep.subr.bf16.mxu0 0
          %997 = vmatpush1.bf16.msra.mxu0 0
          %998 = vmatprep.subr.bf16.mxu0 0
          %999 = vmatpush1.bf16.msra.mxu0 0
          %1000 = vmatprep.subr.bf16.mxu0 0
          %1001 = vmatpush1.bf16.msra.mxu0 0
          %1002 = vmatprep.subr.bf16.mxu0 0
          %1003 = vmatpush1.bf16.msra.mxu0 0
          %1004 = vmatprep.subr.bf16.mxu0 0
          %1005 = vmatpush1.bf16.msra.mxu0 0
          %1006 = vmatprep.subr.bf16.mxu0 0
          %1007 = vmatpush1.bf16.msra.mxu0 0
          %1008 = vmatprep.subr.bf16.mxu0 0
          %1009 = vmatpush1.bf16.msra.mxu0 0
          %1010 = vmatprep.subr.bf16.mxu0 0
          %1011 = vmatpush1.bf16.msra.mxu0 0
          %1012 = vmatprep.subr.bf16.mxu0 0
          %1013 = vmatpush1.bf16.msra.mxu0 0
          %1014 = vmatprep.subr.bf16.mxu0 0
          %1015 = vmatpush1.bf16.msra.mxu0 0
          %1016 = vmatprep.subr.bf16.mxu0 0
          %1017 = vmatpush1.bf16.msra.mxu0 0
          %1018 = vmatprep.mubr.bf16.mxu0 0
          %1019 = vmatmul.mubr.bf16.gmra.mrb[0].mxu0 %v984
          %v1020 = vpop.f32.mrb[0].mxu0
          %v1021 = vadd.f32 0.0, %v1020
          %v1022 = vpop.f32.mrb[0].mxu0
          %v1023 = vpop.f32.mrb[0].mxu0
          %v1024 = vadd.f32 0.0, %v1023
          %v1025 = vpop.f32.mrb[0].mxu0
          %1026 = vdwg.mxu0
          %v1027 = vld [vmem:[%s1] sm:$0xff]
          %v1028 = vadd.f32 %v1021, %v1027
          %v1029 = vadd.f32 %v1024, %v1027
          %1030 = vst.msk [vmem:[#allocation2] sm:$0xff] %vm982, %v1028
          %1031 = vst.msk [vmem:[#allocation2 + $0x8] sm:$0xff] %vm982, %v1029
        $region112: #{decoder_forward.1} parent=95 // pred_fallthru
          _
        %v1032 = vld [vmem:[%s951] sm:$0x7]
        %v1033 = vld [vmem:[%s955] sm:$0x7]
        %v1034 = vld [vmem:[#allocation2] sm:$0xff]
        %v1035 = vld [vmem:[#allocation2 + $0x8] sm:$0xff]
        %vm1036 = vcmask 261120
        %v1037 = vsel %vm1036, %v1034, 0.0
        %1038 = vadd.xlane.f32.xlu0 %v1037
        %v1039 = vpop.xlane.xlu0 %1038
        %v1040 = vsel %vm1036, %v1035, 0.0
        %1041 = vadd.xlane.f32.xlu0 %v1040
        %v1042 = vpop.xlane.xlu0 %1041
        %v1043 = vrcp.pop 32.0
        %v1044 = vmul.f32 %v1039, %v1043
        %v1045 = vmul.f32 %v1042, %v1043
        %v1046 = vsub.f32 %v1034, %v1044
        %v1047 = vsub.f32 %v1035, %v1045
        %v1048 = vmul.f32 %v1046, %v1046
        %v1049 = vmul.f32 %v1047, %v1047
        %v1050 = vsel %vm1036, %v1048, 0.0
        %1051 = vadd.xlane.f32.xlu0 %v1050
        %v1052 = vpop.xlane.xlu0 %1051
        %v1053 = vsel %vm1036, %v1049, 0.0
        %1054 = vadd.xlane.f32.xlu0 %v1053
        %v1055 = vpop.xlane.xlu0 %1054
        %v1056 = vrcp.pop 31.0
        %v1057 = vmul.f32 %v1052, %v1056
        %v1058 = vmul.f32 %v1055, %v1056
        %v1059 = vrsqrt.pop %v1057
        %v1060 = vmul.f32 %v1057, %v1059
        %vm1061 = vcmp.eq.f32.partialorder %v1057, inf
        %v1062 = vsel %vm1061, %v1057, %v1060
        %vm1063 = vcmp.eq.f32.partialorder %v1057, 0.0
        %v1064 = vand.u32 %v1057, 2147483648
        %v1065 = vsel %vm1063, %v1064, %v1062
        %v1066 = vrsqrt.pop %v1058
        %v1067 = vmul.f32 %v1058, %v1066
        %vm1068 = vcmp.eq.f32.partialorder %v1058, inf
        %v1069 = vsel %vm1068, %v1058, %v1067
        %vm1070 = vcmp.eq.f32.partialorder %v1058, 0.0
        %v1071 = vand.u32 %v1058, 2147483648
        %v1072 = vsel %vm1070, %v1071, %v1069
        %v1073 = vlaneseq
        %v1074 = vshrl.u32 %v1073, 7
        %v1075 = vsub.s32 0, %v1074
        %v1076 = vrot.slane %v1032, %v1075
        %v1077 = vmul.f32 %v1076, %v1046
        %v1078 = vmul.f32 %v1076, %v1047
        %v1079 = vadd.f32 %v1065, 1e-06
        %v1080 = vadd.f32 %v1072, 1e-06
        %v1081 = vrcp.pop %v1079
        %v1082 = vrcp.pop %v1080
        %v1083 = vmul.f32 %v1077, %v1081
        %v1084 = vmul.f32 %v1078, %v1082
        %v1085 = vlaneseq
        %v1086 = vshrl.u32 %v1085, 7
        %v1087 = vsub.s32 0, %v1086
        %v1088 = vrot.slane %v1033, %v1087
        %v1089 = vadd.f32 %v1083, %v1088
        %v1090 = vadd.f32 %v1084, %v1088
        %v1091 = vld [vmem:[%s917] sm:$0xf]
        %v1092 = vld [vmem:[%s917 + $0x4] sm:$0xf]
        %v1093 = vld [vmem:[%s917 + $0x8] sm:$0xf]
        %v1094 = vld [vmem:[%s917 + $0xc] sm:$0xf]
        %v1095 = vpack.c.bf16 %v1090, %v1089
        %v1100 = vunpack.c.l.b16 %v1091
        %v1101 = vunpack.c.l.b16 %v1092
        %v1102 = vunpack.c.l.b16 %v1093
        %v1103 = vunpack.c.l.b16 %v1094
        %v1104 = vpack.c.b16 %v1101, %v1100
        %v1105 = vpack.c.b16 %v1103, %v1102
        %v1109 = vsel %vm1036, %v1095, 0
        %1111 = vmatprep.subr.bf16.mxu0 0
        %1112 = vmatpush1.bf16.msra.mxu0 %v1104
        %1113 = vmatprep.subr.bf16.mxu0 0
        %1114 = vmatpush1.bf16.msra.mxu0 %v1105
        %1115 = vmatprep.subr.bf16.mxu0 0
        %1116 = vmatpush1.bf16.msra.mxu0 0
        %1117 = vmatprep.subr.bf16.mxu0 0
        %1118 = vmatpush1.bf16.msra.mxu0 0
        %1119 = vmatprep.subr.bf16.mxu0 0
        %1120 = vmatpush1.bf16.msra.mxu0 0
        %1121 = vmatprep.subr.bf16.mxu0 0
        %1122 = vmatpush1.bf16.msra.mxu0 0
        %1123 = vmatprep.subr.bf16.mxu0 0
        %1124 = vmatpush1.bf16.msra.mxu0 0
        %1125 = vmatprep.subr.bf16.mxu0 0
        %1126 = vmatpush1.bf16.msra.mxu0 0
        %1127 = vmatprep.subr.bf16.mxu0 0
        %1128 = vmatpush1.bf16.msra.mxu0 0
        %1129 = vmatprep.subr.bf16.mxu0 0
        %1130 = vmatpush1.bf16.msra.mxu0 0
        %1131 = vmatprep.subr.bf16.mxu0 0
        %1132 = vmatpush1.bf16.msra.mxu0 0
        %1133 = vmatprep.subr.bf16.mxu0 0
        %1134 = vmatpush1.bf16.msra.mxu0 0
        %1135 = vmatprep.subr.bf16.mxu0 0
        %1136 = vmatpush1.bf16.msra.mxu0 0
        %1137 = vmatprep.subr.bf16.mxu0 0
        %1138 = vmatpush1.bf16.msra.mxu0 0
        %1139 = vmatprep.subr.bf16.mxu0 0
        %1140 = vmatpush1.bf16.msra.mxu0 0
        %1141 = vmatprep.subr.bf16.mxu0 0
        %1142 = vmatpush1.bf16.msra.mxu0 0
        %1143 = vmatprep.mubr.bf16.mxu0 0
        %1144 = vmatmul.mubr.bf16.gmra.mrb[0].mxu0 %v1109
        %v1145 = vpop.f32.mrb[0].mxu0
        %v1146 = vadd.f32 0.0, %v1145
        %v1147 = vpop.f32.mrb[0].mxu0
        %v1148 = vpop.f32.mrb[0].mxu0
        %v1149 = vadd.f32 0.0, %v1148
        %v1150 = vpop.f32.mrb[0].mxu0
        %1151 = vdwg.mxu0
        %v1152 = vlaneseq
        %v1153 = vshrl.u32 %v1152, 7
        %v1154 = vlaneseq
        %v1155 = vand.u32 %v1154, 127
        %vm1156 = vcmp.gt.s32.totalorder %v1155, %v1153
        %v1157 = vld [vmem:[%s911] sm:$0x1]
        %v1158 = vld [vmem:[%s911 + $0x1] sm:$0x1]
        %vm1159 = vcmp.gt.f32.partialorder %v1157, 0.0
        %vm1160 = vcmp.gt.f32.partialorder %v1158, 0.0
        %v1161 = vsel %vm1156, 1, 0
        %vm1162 = vcmp.eq.s32.totalorder %v1161, 1
        %v1163 = vsel %vm1159, 1, 0
        %v1164 = vsel %vm1160, 1, 0
        %v1165 = vlaneseq
        %v1166 = vshrl.u32 %v1165, 7
        %v1167 = vsub.s32 0, %v1166
        %v1168 = vrot.slane %v1163, %v1167
        %v1169 = vlaneseq
        %v1170 = vshrl.u32 %v1169, 7
        %v1171 = vsub.s32 0, %v1170
        %v1172 = vrot.slane %v1164, %v1171
        %vm1173 = vcmp.eq.s32.totalorder %v1168, 1
        %vm1174 = vcmp.eq.s32.totalorder %v1172, 1
        %vm1175 = vmor %vm1162, %vm1173
        %vm1176 = vmor %vm1162, %vm1174
        %v1177 = vld [vmem:[%s922] sm:$0xf]
        %v1178 = vld [vmem:[%s922 + $0x4] sm:$0xf]
        %v1179 = vld [vmem:[%s922 + $0x8] sm:$0xf]
        %v1180 = vld [vmem:[%s922 + $0xc] sm:$0xf]
        %v1181 = vmul.f32 %v1146, 0.25
        %v1182 = vmul.f32 %v1149, 0.25
        %v1183 = vpack.c.bf16 %v1181, %v1181
        %v1184 = vpack.c.bf16 %v1182, %v1182
        %v1185 = vpack.c.bf16 %v1146, %v1146
        %v1186 = vpack.c.bf16 %v1149, %v1149
        %1188 = vrot.lane.b32.xlu0 %v1185, 96
        %v1189 = vpop.permute.xlu0 %1188
        %vm1190 = vcmask 130048
        %v1192 = vsel %vm1190, %v1183, 0
        %v1195 = vsel %vm1190, %v1189, 0
        %1197 = vmatprep.subr.bf16.mxu0 0
        %1198 = vmatpush1.bf16.xpose.msra.mxu0 %v1195
        %1199 = vmatprep.subr.bf16.mxu0 0
        %1200 = vmatpush1.bf16.xpose.msra.mxu0 0
        %1201 = vmatprep.subr.bf16.mxu0 0
        %1202 = vmatpush1.bf16.xpose.msra.mxu0 0
        %1203 = vmatprep.subr.bf16.mxu0 0
        %1204 = vmatpush1.bf16.xpose.msra.mxu0 0
        %1205 = vmatprep.subr.bf16.mxu0 0
        %1206 = vmatpush1.bf16.xpose.msra.mxu0 0
        %1207 = vmatprep.subr.bf16.mxu0 0
        %1208 = vmatpush1.bf16.xpose.msra.mxu0 0
        %1209 = vmatprep.subr.bf16.mxu0 0
        %1210 = vmatpush1.bf16.xpose.msra.mxu0 0
        %1211 = vmatprep.subr.bf16.mxu0 0
        %1212 = vmatpush1.bf16.xpose.msra.mxu0 0
        %1213 = vmatprep.subr.bf16.mxu0 0
        %1214 = vmatpush1.bf16.xpose.msra.mxu0 0
        %1215 = vmatprep.subr.bf16.mxu0 0
        %1216 = vmatpush1.bf16.xpose.msra.mxu0 0
        %1217 = vmatprep.subr.bf16.mxu0 0
        %1218 = vmatpush1.bf16.xpose.msra.mxu0 0
        %1219 = vmatprep.subr.bf16.mxu0 0
        %1220 = vmatpush1.bf16.xpose.msra.mxu0 0
        %1221 = vmatprep.subr.bf16.mxu0 0
        %1222 = vmatpush1.bf16.xpose.msra.mxu0 0
        %1223 = vmatprep.subr.bf16.mxu0 0
        %1224 = vmatpush1.bf16.xpose.msra.mxu0 0
        %1225 = vmatprep.subr.bf16.mxu0 0
        %1226 = vmatpush1.bf16.xpose.msra.mxu0 0
        %1227 = vmatprep.subr.bf16.mxu0 0
        %1228 = vmatpush1.bf16.xpose.msra.mxu0 0
        %1229 = vmatprep.mubr.bf16.mxu0 0
        %1230 = vmatmul.mubr.bf16.gmra.mrb[0].mxu0 %v1192
        %v1231 = vpop.f32.mrb[0].mxu0
        %v1232 = vadd.f32 0.0, %v1231
        %v1233 = vpop.f32.mrb[0].mxu0
        %v1234 = vpop.f32.mrb[0].mxu0
        %v1235 = vpop.f32.mrb[0].mxu0
        %1236 = vdwg.mxu0
        %1238 = vrot.lane.b32.xlu0 %v1186, 96
        %v1239 = vpop.permute.xlu0 %1238
        %v1241 = vsel %vm1190, %v1184, 0
        %v1244 = vsel %vm1190, %v1239, 0
        %1246 = vmatprep.subr.bf16.mxu0 0
        %1247 = vmatpush1.bf16.xpose.msra.mxu0 %v1244
        %1248 = vmatprep.subr.bf16.mxu0 0
        %1249 = vmatpush1.bf16.xpose.msra.mxu0 0
        %1250 = vmatprep.subr.bf16.mxu0 0
        %1251 = vmatpush1.bf16.xpose.msra.mxu0 0
        %1252 = vmatprep.subr.bf16.mxu0 0
        %1253 = vmatpush1.bf16.xpose.msra.mxu0 0
        %1254 = vmatprep.subr.bf16.mxu0 0
        %1255 = vmatpush1.bf16.xpose.msra.mxu0 0
        %1256 = vmatprep.subr.bf16.mxu0 0
        %1257 = vmatpush1.bf16.xpose.msra.mxu0 0
        %1258 = vmatprep.subr.bf16.mxu0 0
        %1259 = vmatpush1.bf16.xpose.msra.mxu0 0
        %1260 = vmatprep.subr.bf16.mxu0 0
        %1261 = vmatpush1.bf16.xpose.msra.mxu0 0
        %1262 = vmatprep.subr.bf16.mxu0 0
        %1263 = vmatpush1.bf16.xpose.msra.mxu0 0
        %1264 = vmatprep.subr.bf16.mxu0 0
        %1265 = vmatpush1.bf16.xpose.msra.mxu0 0
        %1266 = vmatprep.subr.bf16.mxu0 0
        %1267 = vmatpush1.bf16.xpose.msra.mxu0 0
        %1268 = vmatprep.subr.bf16.mxu0 0
        %1269 = vmatpush1.bf16.xpose.msra.mxu0 0
        %1270 = vmatprep.subr.bf16.mxu0 0
        %1271 = vmatpush1.bf16.xpose.msra.mxu0 0
        %1272 = vmatprep.subr.bf16.mxu0 0
        %1273 = vmatpush1.bf16.xpose.msra.mxu0 0
        %1274 = vmatprep.subr.bf16.mxu0 0
        %1275 = vmatpush1.bf16.xpose.msra.mxu0 0
        %1276 = vmatprep.subr.bf16.mxu0 0
        %1277 = vmatpush1.bf16.xpose.msra.mxu0 0
        %1278 = vmatprep.mubr.bf16.mxu0 0
        %1279 = vmatmul.mubr.bf16.gmra.mrb[0].mxu0 %v1241
        %v1280 = vpop.f32.mrb[0].mxu0
        %v1281 = vadd.f32 0.0, %v1280
        %v1282 = vpop.f32.mrb[0].mxu0
        %v1283 = vpop.f32.mrb[0].mxu0
        %v1284 = vpop.f32.mrb[0].mxu0
        %1285 = vdwg.mxu0
        %v1286 = vsel %vm1175, -1e+18, %v1232
        %v1287 = vsel %vm1176, -1e+18, %v1281
        %vm1288 = vcmask 64512
        %v1289 = vsel %vm1288, %v1286, -inf
        %1290 = vmax.xlane.f32.xlu0 %v1289
        %v1291 = vpop.xlane.xlu0 %1290
        %v1292 = vsel %vm1288, %v1287, -inf
        %1293 = vmax.xlane.f32.xlu0 %v1292
        %v1294 = vpop.xlane.xlu0 %1293
        %v1295 = vsub.f32 %v1286, %v1291
        %v1296 = vsub.f32 %v1287, %v1294
        %v1297 = vmul.f32 %v1295, 1.442695
        %v1298 = vpow.pop %v1297
        %v1299 = vmul.f32 %v1296, 1.442695
        %v1300 = vpow.pop %v1299
        %v1301 = vsel %vm1288, %v1298, 0.0
        %1302 = vadd.xlane.f32.xlu0 %v1301
        %v1303 = vpop.xlane.xlu0 %1302
        %v1304 = vsel %vm1288, %v1300, 0.0
        %1305 = vadd.xlane.f32.xlu0 %v1304
        %v1306 = vpop.xlane.xlu0 %1305
        %v1307 = vrcp.pop %v1303
        %v1308 = vrcp.pop %v1306
        %v1309 = vmul.f32 %v1298, %v1307
        %v1310 = vmul.f32 %v1300, %v1308
        %v1311 = vpack.c.bf16 %v1309, %v1309
        %v1312 = vpack.c.bf16 %v1310, %v1310
        %1313 = vrot.lane.b32.xlu0 %v1185, 64
        %v1314 = vpop.permute.xlu0 %1313
        %v1316 = vsel %vm1288, %v1311, 0
        %vm1318 = vcmask 1043456
        %v1320 = vsel %vm1318, %v1314, 0
        %1322 = vmatprep.subr.bf16.mxu0 0
        %1323 = vmatpush1.bf16.msra.mxu0 %v1320
        %1324 = vmatprep.subr.bf16.mxu0 0
        %1325 = vmatpush1.bf16.msra.mxu0 0
        %1326 = vmatprep.subr.bf16.mxu0 0
        %1327 = vmatpush1.bf16.msra.mxu0 0
        %1328 = vmatprep.subr.bf16.mxu0 0
        %1329 = vmatpush1.bf16.msra.mxu0 0
        %1330 = vmatprep.subr.bf16.mxu0 0
        %1331 = vmatpush1.bf16.msra.mxu0 0
        %1332 = vmatprep.subr.bf16.mxu0 0
        %1333 = vmatpush1.bf16.msra.mxu0 0
        %1334 = vmatprep.subr.bf16.mxu0 0
        %1335 = vmatpush1.bf16.msra.mxu0 0
        %1336 = vmatprep.subr.bf16.mxu0 0
        %1337 = vmatpush1.bf16.msra.mxu0 0
        %1338 = vmatprep.subr.bf16.mxu0 0
        %1339 = vmatpush1.bf16.msra.mxu0 0
        %1340 = vmatprep.subr.bf16.mxu0 0
        %1341 = vmatpush1.bf16.msra.mxu0 0
        %1342 = vmatprep.subr.bf16.mxu0 0
        %1343 = vmatpush1.bf16.msra.mxu0 0
        %1344 = vmatprep.subr.bf16.mxu0 0
        %1345 = vmatpush1.bf16.msra.mxu0 0
        %1346 = vmatprep.subr.bf16.mxu0 0
        %1347 = vmatpush1.bf16.msra.mxu0 0
        %1348 = vmatprep.subr.bf16.mxu0 0
        %1349 = vmatpush1.bf16.msra.mxu0 0
        %1350 = vmatprep.subr.bf16.mxu0 0
        %1351 = vmatpush1.bf16.msra.mxu0 0
        %1352 = vmatprep.subr.bf16.mxu0 0
        %1353 = vmatpush1.bf16.msra.mxu0 0
        %1354 = vmatprep.mubr.bf16.mxu0 0
        %1355 = vmatmul.mubr.bf16.gmra.mrb[0].mxu0 %v1316
        %v1356 = vpop.f32.mrb[0].mxu0
        %v1357 = vadd.f32 0.0, %v1356
        %v1358 = vpop.f32.mrb[0].mxu0
        %v1359 = vpop.f32.mrb[0].mxu0
        %v1360 = vpop.f32.mrb[0].mxu0
        %1361 = vdwg.mxu0
        %1362 = vrot.lane.b32.xlu0 %v1186, 64
        %v1363 = vpop.permute.xlu0 %1362
        %v1365 = vsel %vm1288, %v1312, 0
        %v1368 = vsel %vm1318, %v1363, 0
        %1370 = vmatprep.subr.bf16.mxu0 0
        %1371 = vmatpush1.bf16.msra.mxu0 %v1368
        %1372 = vmatprep.subr.bf16.mxu0 0
        %1373 = vmatpush1.bf16.msra.mxu0 0
        %1374 = vmatprep.subr.bf16.mxu0 0
        %1375 = vmatpush1.bf16.msra.mxu0 0
        %1376 = vmatprep.subr.bf16.mxu0 0
        %1377 = vmatpush1.bf16.msra.mxu0 0
        %1378 = vmatprep.subr.bf16.mxu0 0
        %1379 = vmatpush1.bf16.msra.mxu0 0
        %1380 = vmatprep.subr.bf16.mxu0 0
        %1381 = vmatpush1.bf16.msra.mxu0 0
        %1382 = vmatprep.subr.bf16.mxu0 0
        %1383 = vmatpush1.bf16.msra.mxu0 0
        %1384 = vmatprep.subr.bf16.mxu0 0
        %1385 = vmatpush1.bf16.msra.mxu0 0
        %1386 = vmatprep.subr.bf16.mxu0 0
        %1387 = vmatpush1.bf16.msra.mxu0 0
        %1388 = vmatprep.subr.bf16.mxu0 0
        %1389 = vmatpush1.bf16.msra.mxu0 0
        %1390 = vmatprep.subr.bf16.mxu0 0
        %1391 = vmatpush1.bf16.msra.mxu0 0
        %1392 = vmatprep.subr.bf16.mxu0 0
        %1393 = vmatpush1.bf16.msra.mxu0 0
        %1394 = vmatprep.subr.bf16.mxu0 0
        %1395 = vmatpush1.bf16.msra.mxu0 0
        %1396 = vmatprep.subr.bf16.mxu0 0
        %1397 = vmatpush1.bf16.msra.mxu0 0
        %1398 = vmatprep.subr.bf16.mxu0 0
        %1399 = vmatpush1.bf16.msra.mxu0 0
        %1400 = vmatprep.subr.bf16.mxu0 0
        %1401 = vmatpush1.bf16.msra.mxu0 0
        %1402 = vmatprep.mubr.bf16.mxu0 0
        %1403 = vmatmul.mubr.bf16.gmra.mrb[0].mxu0 %v1365
        %v1404 = vpop.f32.mrb[0].mxu0
        %v1405 = vadd.f32 0.0, %v1404
        %v1406 = vpop.f32.mrb[0].mxu0
        %v1407 = vpop.f32.mrb[0].mxu0
        %v1408 = vpop.f32.mrb[0].mxu0
        %1409 = vdwg.mxu0
        %v1410 = vpack.c.bf16 %v1405, %v1357
        %1412 = vrot.lane.b32.xlu0 %v1183, 112
        %v1413 = vpop.permute.xlu0 %1412
        %1414 = vrot.lane.b32.xlu0 %v1185, 80
        %v1415 = vpop.permute.xlu0 %1414
        %v1417 = vsel %vm1190, %v1413, 0
        %v1420 = vsel %vm1190, %v1415, 0
        %1422 = vmatprep.subr.bf16.mxu0 0
        %1423 = vmatpush1.bf16.xpose.msra.mxu0 %v1420
        %1424 = vmatprep.subr.bf16.mxu0 0
        %1425 = vmatpush1.bf16.xpose.msra.mxu0 0
        %1426 = vmatprep.subr.bf16.mxu0 0
        %1427 = vmatpush1.bf16.xpose.msra.mxu0 0
        %1428 = vmatprep.subr.bf16.mxu0 0
        %1429 = vmatpush1.bf16.xpose.msra.mxu0 0
        %1430 = vmatprep.subr.bf16.mxu0 0
        %1431 = vmatpush1.bf16.xpose.msra.mxu0 0
        %1432 = vmatprep.subr.bf16.mxu0 0
        %1433 = vmatpush1.bf16.xpose.msra.mxu0 0
        %1434 = vmatprep.subr.bf16.mxu0 0
        %1435 = vmatpush1.bf16.xpose.msra.mxu0 0
        %1436 = vmatprep.subr.bf16.mxu0 0
        %1437 = vmatpush1.bf16.xpose.msra.mxu0 0
        %1438 = vmatprep.subr.bf16.mxu0 0
        %1439 = vmatpush1.bf16.xpose.msra.mxu0 0
        %1440 = vmatprep.subr.bf16.mxu0 0
        %1441 = vmatpush1.bf16.xpose.msra.mxu0 0
        %1442 = vmatprep.subr.bf16.mxu0 0
        %1443 = vmatpush1.bf16.xpose.msra.mxu0 0
        %1444 = vmatprep.subr.bf16.mxu0 0
        %1445 = vmatpush1.bf16.xpose.msra.mxu0 0
        %1446 = vmatprep.subr.bf16.mxu0 0
        %1447 = vmatpush1.bf16.xpose.msra.mxu0 0
        %1448 = vmatprep.subr.bf16.mxu0 0
        %1449 = vmatpush1.bf16.xpose.msra.mxu0 0
        %1450 = vmatprep.subr.bf16.mxu0 0
        %1451 = vmatpush1.bf16.xpose.msra.mxu0 0
        %1452 = vmatprep.subr.bf16.mxu0 0
        %1453 = vmatpush1.bf16.xpose.msra.mxu0 0
        %1454 = vmatprep.mubr.bf16.mxu0 0
        %1455 = vmatmul.mubr.bf16.gmra.mrb[0].mxu0 %v1417
        %v1456 = vpop.f32.mrb[0].mxu0
        %v1457 = vadd.f32 0.0, %v1456
        %v1458 = vpop.f32.mrb[0].mxu0
        %v1459 = vpop.f32.mrb[0].mxu0
        %v1460 = vpop.f32.mrb[0].mxu0
        %1461 = vdwg.mxu0
        %1463 = vrot.lane.b32.xlu0 %v1184, 112
        %v1464 = vpop.permute.xlu0 %1463
        %1465 = vrot.lane.b32.xlu0 %v1186, 80
        %v1466 = vpop.permute.xlu0 %1465
        %v1468 = vsel %vm1190, %v1464, 0
        %v1471 = vsel %vm1190, %v1466, 0
        %1473 = vmatprep.subr.bf16.mxu0 0
        %1474 = vmatpush1.bf16.xpose.msra.mxu0 %v1471
        %1475 = vmatprep.subr.bf16.mxu0 0
        %1476 = vmatpush1.bf16.xpose.msra.mxu0 0
        %1477 = vmatprep.subr.bf16.mxu0 0
        %1478 = vmatpush1.bf16.xpose.msra.mxu0 0
        %1479 = vmatprep.subr.bf16.mxu0 0
        %1480 = vmatpush1.bf16.xpose.msra.mxu0 0
        %1481 = vmatprep.subr.bf16.mxu0 0
        %1482 = vmatpush1.bf16.xpose.msra.mxu0 0
        %1483 = vmatprep.subr.bf16.mxu0 0
        %1484 = vmatpush1.bf16.xpose.msra.mxu0 0
        %1485 = vmatprep.subr.bf16.mxu0 0
        %1486 = vmatpush1.bf16.xpose.msra.mxu0 0
        %1487 = vmatprep.subr.bf16.mxu0 0
        %1488 = vmatpush1.bf16.xpose.msra.mxu0 0
        %1489 = vmatprep.subr.bf16.mxu0 0
        %1490 = vmatpush1.bf16.xpose.msra.mxu0 0
        %1491 = vmatprep.subr.bf16.mxu0 0
        %1492 = vmatpush1.bf16.xpose.msra.mxu0 0
        %1493 = vmatprep.subr.bf16.mxu0 0
        %1494 = vmatpush1.bf16.xpose.msra.mxu0 0
        %1495 = vmatprep.subr.bf16.mxu0 0
        %1496 = vmatpush1.bf16.xpose.msra.mxu0 0
        %1497 = vmatprep.subr.bf16.mxu0 0
        %1498 = vmatpush1.bf16.xpose.msra.mxu0 0
        %1499 = vmatprep.subr.bf16.mxu0 0
        %1500 = vmatpush1.bf16.xpose.msra.mxu0 0
        %1501 = vmatprep.subr.bf16.mxu0 0
        %1502 = vmatpush1.bf16.xpose.msra.mxu0 0
        %1503 = vmatprep.subr.bf16.mxu0 0
        %1504 = vmatpush1.bf16.xpose.msra.mxu0 0
        %1505 = vmatprep.mubr.bf16.mxu0 0
        %1506 = vmatmul.mubr.bf16.gmra.mrb[0].mxu0 %v1468
        %v1507 = vpop.f32.mrb[0].mxu0
        %v1508 = vadd.f32 0.0, %v1507
        %v1509 = vpop.f32.mrb[0].mxu0
        %v1510 = vpop.f32.mrb[0].mxu0
        %v1511 = vpop.f32.mrb[0].mxu0
        %1512 = vdwg.mxu0
        %v1513 = vsel %vm1175, -1e+18, %v1457
        %v1514 = vsel %vm1176, -1e+18, %v1508
        %v1515 = vsel %vm1288, %v1513, -inf
        %1516 = vmax.xlane.f32.xlu0 %v1515
        %v1517 = vpop.xlane.xlu0 %1516
        %v1518 = vsel %vm1288, %v1514, -inf
        %1519 = vmax.xlane.f32.xlu0 %v1518
        %v1520 = vpop.xlane.xlu0 %1519
        %v1521 = vsub.f32 %v1513, %v1517
        %v1522 = vsub.f32 %v1514, %v1520
        %v1523 = vmul.f32 %v1521, 1.442695
        %v1524 = vpow.pop %v1523
        %v1525 = vmul.f32 %v1522, 1.442695
        %v1526 = vpow.pop %v1525
        %v1527 = vsel %vm1288, %v1524, 0.0
        %1528 = vadd.xlane.f32.xlu0 %v1527
        %v1529 = vpop.xlane.xlu0 %1528
        %v1530 = vsel %vm1288, %v1526, 0.0
        %1531 = vadd.xlane.f32.xlu0 %v1530
        %v1532 = vpop.xlane.xlu0 %1531
        %v1533 = vrcp.pop %v1529
        %v1534 = vrcp.pop %v1532
        %v1535 = vmul.f32 %v1524, %v1533
        %v1536 = vmul.f32 %v1526, %v1534
        %v1537 = vpack.c.bf16 %v1535, %v1535
        %v1538 = vpack.c.bf16 %v1536, %v1536
        %1539 = vrot.lane.b32.xlu0 %v1185, 48
        %v1540 = vpop.permute.xlu0 %1539
        %v1542 = vsel %vm1288, %v1537, 0
        %v1545 = vsel %vm1318, %v1540, 0
        %1547 = vmatprep.subr.bf16.mxu0 0
        %1548 = vmatpush1.bf16.msra.mxu0 %v1545
        %1549 = vmatprep.subr.bf16.mxu0 0
        %1550 = vmatpush1.bf16.msra.mxu0 0
        %1551 = vmatprep.subr.bf16.mxu0 0
        %1552 = vmatpush1.bf16.msra.mxu0 0
        %1553 = vmatprep.subr.bf16.mxu0 0
        %1554 = vmatpush1.bf16.msra.mxu0 0
        %1555 = vmatprep.subr.bf16.mxu0 0
        %1556 = vmatpush1.bf16.msra.mxu0 0
        %1557 = vmatprep.subr.bf16.mxu0 0
        %1558 = vmatpush1.bf16.msra.mxu0 0
        %1559 = vmatprep.subr.bf16.mxu0 0
        %1560 = vmatpush1.bf16.msra.mxu0 0
        %1561 = vmatprep.subr.bf16.mxu0 0
        %1562 = vmatpush1.bf16.msra.mxu0 0
        %1563 = vmatprep.subr.bf16.mxu0 0
        %1564 = vmatpush1.bf16.msra.mxu0 0
        %1565 = vmatprep.subr.bf16.mxu0 0
        %1566 = vmatpush1.bf16.msra.mxu0 0
        %1567 = vmatprep.subr.bf16.mxu0 0
        %1568 = vmatpush1.bf16.msra.mxu0 0
        %1569 = vmatprep.subr.bf16.mxu0 0
        %1570 = vmatpush1.bf16.msra.mxu0 0
        %1571 = vmatprep.subr.bf16.mxu0 0
        %1572 = vmatpush1.bf16.msra.mxu0 0
        %1573 = vmatprep.subr.bf16.mxu0 0
        %1574 = vmatpush1.bf16.msra.mxu0 0
        %1575 = vmatprep.subr.bf16.mxu0 0
        %1576 = vmatpush1.bf16.msra.mxu0 0
        %1577 = vmatprep.subr.bf16.mxu0 0
        %1578 = vmatpush1.bf16.msra.mxu0 0
        %1579 = vmatprep.mubr.bf16.mxu0 0
        %1580 = vmatmul.mubr.bf16.gmra.mrb[0].mxu0 %v1542
        %v1581 = vpop.f32.mrb[0].mxu0
        %v1582 = vadd.f32 0.0, %v1581
        %v1583 = vpop.f32.mrb[0].mxu0
        %v1584 = vpop.f32.mrb[0].mxu0
        %v1585 = vpop.f32.mrb[0].mxu0
        %1586 = vdwg.mxu0
        %1587 = vrot.lane.b32.xlu0 %v1186, 48
        %v1588 = vpop.permute.xlu0 %1587
        %v1590 = vsel %vm1288, %v1538, 0
        %v1593 = vsel %vm1318, %v1588, 0
        %1595 = vmatprep.subr.bf16.mxu0 0
        %1596 = vmatpush1.bf16.msra.mxu0 %v1593
        %1597 = vmatprep.subr.bf16.mxu0 0
        %1598 = vmatpush1.bf16.msra.mxu0 0
        %1599 = vmatprep.subr.bf16.mxu0 0
        %1600 = vmatpush1.bf16.msra.mxu0 0
        %1601 = vmatprep.subr.bf16.mxu0 0
        %1602 = vmatpush1.bf16.msra.mxu0 0
        %1603 = vmatprep.subr.bf16.mxu0 0
        %1604 = vmatpush1.bf16.msra.mxu0 0
        %1605 = vmatprep.subr.bf16.mxu0 0
        %1606 = vmatpush1.bf16.msra.mxu0 0
        %1607 = vmatprep.subr.bf16.mxu0 0
        %1608 = vmatpush1.bf16.msra.mxu0 0
        %1609 = vmatprep.subr.bf16.mxu0 0
        %1610 = vmatpush1.bf16.msra.mxu0 0
        %1611 = vmatprep.subr.bf16.mxu0 0
        %1612 = vmatpush1.bf16.msra.mxu0 0
        %1613 = vmatprep.subr.bf16.mxu0 0
        %1614 = vmatpush1.bf16.msra.mxu0 0
        %1615 = vmatprep.subr.bf16.mxu0 0
        %1616 = vmatpush1.bf16.msra.mxu0 0
        %1617 = vmatprep.subr.bf16.mxu0 0
        %1618 = vmatpush1.bf16.msra.mxu0 0
        %1619 = vmatprep.subr.bf16.mxu0 0
        %1620 = vmatpush1.bf16.msra.mxu0 0
        %1621 = vmatprep.subr.bf16.mxu0 0
        %1622 = vmatpush1.bf16.msra.mxu0 0
        %1623 = vmatprep.subr.bf16.mxu0 0
        %1624 = vmatpush1.bf16.msra.mxu0 0
        %1625 = vmatprep.subr.bf16.mxu0 0
        %1626 = vmatpush1.bf16.msra.mxu0 0
        %1627 = vmatprep.mubr.bf16.mxu0 0
        %1628 = vmatmul.mubr.bf16.gmra.mrb[0].mxu0 %v1590
        %v1629 = vpop.f32.mrb[0].mxu0
        %v1630 = vadd.f32 0.0, %v1629
        %v1631 = vpop.f32.mrb[0].mxu0
        %v1632 = vpop.f32.mrb[0].mxu0
        %v1633 = vpop.f32.mrb[0].mxu0
        %1634 = vdwg.mxu0
        %v1635 = vpack.c.bf16 %v1630, %v1582
        %v1638 = vunpack.c.l.b16 %v1179
        %v1639 = vunpack.c.l.b16 %v1180
        %v1640 = vpack.c.b16 %v1639, %v1638
        %v1643 = vsel %vm1190, %v1635, 0
        %1645 = vmatprep.subr.bf16.mxu0 0
        %1646 = vmatpush1.bf16.msra.mxu0 %v1640
        %1647 = vmatprep.subr.bf16.mxu0 0
        %1648 = vmatpush1.bf16.msra.mxu0 0
        %1649 = vmatprep.subr.bf16.mxu0 0
        %1650 = vmatpush1.bf16.msra.mxu0 0
        %1651 = vmatprep.subr.bf16.mxu0 0
        %1652 = vmatpush1.bf16.msra.mxu0 0
        %1653 = vmatprep.subr.bf16.mxu0 0
        %1654 = vmatpush1.bf16.msra.mxu0 0
        %1655 = vmatprep.subr.bf16.mxu0 0
        %1656 = vmatpush1.bf16.msra.mxu0 0
        %1657 = vmatprep.subr.bf16.mxu0 0
        %1658 = vmatpush1.bf16.msra.mxu0 0
        %1659 = vmatprep.subr.bf16.mxu0 0
        %1660 = vmatpush1.bf16.msra.mxu0 0
        %1661 = vmatprep.subr.bf16.mxu0 0
        %1662 = vmatpush1.bf16.msra.mxu0 0
        %1663 = vmatprep.subr.bf16.mxu0 0
        %1664 = vmatpush1.bf16.msra.mxu0 0
        %1665 = vmatprep.subr.bf16.mxu0 0
        %1666 = vmatpush1.bf16.msra.mxu0 0
        %1667 = vmatprep.subr.bf16.mxu0 0
        %1668 = vmatpush1.bf16.msra.mxu0 0
        %1669 = vmatprep.subr.bf16.mxu0 0
        %1670 = vmatpush1.bf16.msra.mxu0 0
        %1671 = vmatprep.subr.bf16.mxu0 0
        %1672 = vmatpush1.bf16.msra.mxu0 0
        %1673 = vmatprep.subr.bf16.mxu0 0
        %1674 = vmatpush1.bf16.msra.mxu0 0
        %1675 = vmatprep.subr.bf16.mxu0 0
        %1676 = vmatpush1.bf16.msra.mxu0 0
        %1677 = vmatprep.mubr.bf16.mxu0 0
        %1678 = vmatmul.mubr.bf16.gmra.mrb[0].mxu0 %v1643
        %v1679 = vpop.f32.mrb[0].mxu0
        %v1680 = vadd.f32 0.0, %v1679
        %v1681 = vpop.f32.mrb[0].mxu0
        %v1682 = vpop.f32.mrb[0].mxu0
        %v1683 = vadd.f32 0.0, %v1682
        %v1684 = vpop.f32.mrb[0].mxu0
        %1685 = vdwg.mxu0
        %v1688 = vunpack.c.l.b16 %v1177
        %v1689 = vunpack.c.l.b16 %v1178
        %v1690 = vpack.c.b16 %v1689, %v1688
        %v1693 = vsel %vm1190, %v1410, 0
        %1695 = vmatprep.subr.bf16.mxu0 0
        %1696 = vmatpush1.bf16.msra.mxu0 %v1690
        %1697 = vmatprep.subr.bf16.mxu0 0
        %1698 = vmatpush1.bf16.msra.mxu0 0
        %1699 = vmatprep.subr.bf16.mxu0 0
        %1700 = vmatpush1.bf16.msra.mxu0 0
        %1701 = vmatprep.subr.bf16.mxu0 0
        %1702 = vmatpush1.bf16.msra.mxu0 0
        %1703 = vmatprep.subr.bf16.mxu0 0
        %1704 = vmatpush1.bf16.msra.mxu0 0
        %1705 = vmatprep.subr.bf16.mxu0 0
        %1706 = vmatpush1.bf16.msra.mxu0 0
        %1707 = vmatprep.subr.bf16.mxu0 0
        %1708 = vmatpush1.bf16.msra.mxu0 0
        %1709 = vmatprep.subr.bf16.mxu0 0
        %1710 = vmatpush1.bf16.msra.mxu0 0
        %1711 = vmatprep.subr.bf16.mxu0 0
        %1712 = vmatpush1.bf16.msra.mxu0 0
        %1713 = vmatprep.subr.bf16.mxu0 0
        %1714 = vmatpush1.bf16.msra.mxu0 0
        %1715 = vmatprep.subr.bf16.mxu0 0
        %1716 = vmatpush1.bf16.msra.mxu0 0
        %1717 = vmatprep.subr.bf16.mxu0 0
        %1718 = vmatpush1.bf16.msra.mxu0 0
        %1719 = vmatprep.subr.bf16.mxu0 0
        %1720 = vmatpush1.bf16.msra.mxu0 0
        %1721 = vmatprep.subr.bf16.mxu0 0
        %1722 = vmatpush1.bf16.msra.mxu0 0
        %1723 = vmatprep.subr.bf16.mxu0 0
        %1724 = vmatpush1.bf16.msra.mxu0 0
        %1725 = vmatprep.subr.bf16.mxu0 0
        %1726 = vmatpush1.bf16.msra.mxu0 0
        %1727 = vmatprep.mubr.bf16.mxu0 0
        %1728 = vmatmul.mubr.bf16.gmra.mrb[0].mxu0 %v1693
        %v1729 = vpop.f32.mrb[0].mxu0
        %v1730 = vadd.f32 %v1680, %v1729
        %v1731 = vpop.f32.mrb[0].mxu0
        %v1732 = vpop.f32.mrb[0].mxu0
        %v1733 = vadd.f32 %v1683, %v1732
        %v1734 = vpop.f32.mrb[0].mxu0
        %1735 = vdwg.mxu0
        %v1736 = vadd.f32 %v1034, %v1730
        %v1737 = vadd.f32 %v1035, %v1733
        %v1738 = vsel %vm1036, %v1736, 0.0
        %1739 = vadd.xlane.f32.xlu0 %v1738
        %v1740 = vpop.xlane.xlu0 %1739
        %v1741 = vsel %vm1036, %v1737, 0.0
        %1742 = vadd.xlane.f32.xlu0 %v1741
        %v1743 = vpop.xlane.xlu0 %1742
        %v1744 = vmul.f32 %v1740, %v1043
        %v1745 = vmul.f32 %v1743, %v1043
        %v1746 = vsub.f32 %v1736, %v1744
        %v1747 = vsub.f32 %v1737, %v1745
        %v1748 = vmul.f32 %v1746, %v1746
        %v1749 = vmul.f32 %v1747, %v1747
        %v1750 = vsel %vm1036, %v1748, 0.0
        %1751 = vadd.xlane.f32.xlu0 %v1750
        %v1752 = vpop.xlane.xlu0 %1751
        %v1753 = vsel %vm1036, %v1749, 0.0
        %1754 = vadd.xlane.f32.xlu0 %v1753
        %v1755 = vpop.xlane.xlu0 %1754
        %v1756 = vmul.f32 %v1752, %v1056
        %v1757 = vmul.f32 %v1755, %v1056
        %v1758 = vrsqrt.pop %v1756
        %v1759 = vmul.f32 %v1756, %v1758
        %vm1760 = vcmp.eq.f32.partialorder %v1756, inf
        %v1761 = vsel %vm1760, %v1756, %v1759
        %vm1762 = vcmp.eq.f32.partialorder %v1756, 0.0
        %v1763 = vand.u32 %v1756, 2147483648
        %v1764 = vsel %vm1762, %v1763, %v1761
        %v1765 = vrsqrt.pop %v1757
        %v1766 = vmul.f32 %v1757, %v1765
        %vm1767 = vcmp.eq.f32.partialorder %v1757, inf
        %v1768 = vsel %vm1767, %v1757, %v1766
        %vm1769 = vcmp.eq.f32.partialorder %v1757, 0.0
        %v1770 = vand.u32 %v1757, 2147483648
        %v1771 = vsel %vm1769, %v1770, %v1768
        %v1772 = vlaneseq
        %v1773 = vshrl.u32 %v1772, 7
        %v1774 = vsub.s32 1, %v1773
        %v1775 = vrot.slane %v1032, %v1774
        %v1776 = vmul.f32 %v1775, %v1746
        %v1777 = vmul.f32 %v1775, %v1747
        %v1778 = vadd.f32 %v1764, 1e-06
        %v1779 = vadd.f32 %v1771, 1e-06
        %v1780 = vrcp.pop %v1778
        %v1781 = vrcp.pop %v1779
        %v1782 = vmul.f32 %v1776, %v1780
        %v1783 = vmul.f32 %v1777, %v1781
        %v1784 = vlaneseq
        %v1785 = vshrl.u32 %v1784, 7
        %v1786 = vsub.s32 1, %v1785
        %v1787 = vrot.slane %v1033, %v1786
        %v1788 = vadd.f32 %v1782, %v1787
        %v1789 = vadd.f32 %v1783, %v1787
        %v1790 = vld [vmem:[%s927] sm:$0xf]
        %v1791 = vld [vmem:[%s927 + $0x4] sm:$0xf]
        %v1792 = vld [vmem:[%s927 + $0x8] sm:$0xf]
        %v1793 = vld [vmem:[%s927 + $0xc] sm:$0xf]
        %v1794 = vpack.c.bf16 %v1789, %v1788
        %v1799 = vunpack.c.l.b16 %v1790
        %v1800 = vunpack.c.l.b16 %v1791
        %v1801 = vunpack.c.l.b16 %v1792
        %v1802 = vunpack.c.l.b16 %v1793
        %v1803 = vpack.c.b16 %v1800, %v1799
        %v1804 = vpack.c.b16 %v1802, %v1801
        %v1808 = vsel %vm1036, %v1794, 0
        %1810 = vmatprep.subr.bf16.mxu0 0
        %1811 = vmatpush1.bf16.msra.mxu0 %v1803
        %1812 = vmatprep.subr.bf16.mxu0 0
        %1813 = vmatpush1.bf16.msra.mxu0 %v1804
        %1814 = vmatprep.subr.bf16.mxu0 0
        %1815 = vmatpush1.bf16.msra.mxu0 0
        %1816 = vmatprep.subr.bf16.mxu0 0
        %1817 = vmatpush1.bf16.msra.mxu0 0
        %1818 = vmatprep.subr.bf16.mxu0 0
        %1819 = vmatpush1.bf16.msra.mxu0 0
        %1820 = vmatprep.subr.bf16.mxu0 0
        %1821 = vmatpush1.bf16.msra.mxu0 0
        %1822 = vmatprep.subr.bf16.mxu0 0
        %1823 = vmatpush1.bf16.msra.mxu0 0
        %1824 = vmatprep.subr.bf16.mxu0 0
        %1825 = vmatpush1.bf16.msra.mxu0 0
        %1826 = vmatprep.subr.bf16.mxu0 0
        %1827 = vmatpush1.bf16.msra.mxu0 0
        %1828 = vmatprep.subr.bf16.mxu0 0
        %1829 = vmatpush1.bf16.msra.mxu0 0
        %1830 = vmatprep.subr.bf16.mxu0 0
        %1831 = vmatpush1.bf16.msra.mxu0 0
        %1832 = vmatprep.subr.bf16.mxu0 0
        %1833 = vmatpush1.bf16.msra.mxu0 0
        %1834 = vmatprep.subr.bf16.mxu0 0
        %1835 = vmatpush1.bf16.msra.mxu0 0
        %1836 = vmatprep.subr.bf16.mxu0 0
        %1837 = vmatpush1.bf16.msra.mxu0 0
        %1838 = vmatprep.subr.bf16.mxu0 0
        %1839 = vmatpush1.bf16.msra.mxu0 0
        %1840 = vmatprep.subr.bf16.mxu0 0
        %1841 = vmatpush1.bf16.msra.mxu0 0
        %1842 = vmatprep.mubr.bf16.mxu0 0
        %1843 = vmatmul.mubr.bf16.gmra.mrb[0].mxu0 %v1808
        %v1844 = vpop.f32.mrb[0].mxu0
        %v1845 = vadd.f32 0.0, %v1844
        %v1846 = vpop.f32.mrb[0].mxu0
        %v1847 = vpop.f32.mrb[0].mxu0
        %v1848 = vadd.f32 0.0, %v1847
        %v1849 = vpop.f32.mrb[0].mxu0
        %1850 = vdwg.mxu0
        %v1851 = vld [vmem:[%s901] sm:$0xff]
        %v1852 = vld [vmem:[%s901 + $0x8] sm:$0x3]
        %v1853 = vld [vmem:[%s901 + $0x10] sm:$0xff]
        %v1854 = vld [vmem:[%s901 + $0x18] sm:$0x3]
        %v1855 = vld [vmem:[%s932] sm:$0xf]
        %v1856 = vld [vmem:[%s932 + $0x4] sm:$0xf]
        %v1857 = vld [vmem:[%s932 + $0x8] sm:$0xf]
        %v1858 = vld [vmem:[%s932 + $0xc] sm:$0xf]
        %v1859 = vpack.c.bf16 %v1852, %v1851
        %v1860 = vpack.c.bf16 %v1854, %v1853
        %v1865 = vunpack.c.l.b16 %v1855
        %v1866 = vunpack.c.l.b16 %v1856
        %v1867 = vunpack.c.l.b16 %v1857
        %v1868 = vunpack.c.l.b16 %v1858
        %v1869 = vpack.c.b16 %v1866, %v1865
        %v1870 = vpack.c.b16 %v1868, %v1867
        %v1874 = vsel %vm1036, %v1859, 0
        %1876 = vmatprep.subr.bf16.mxu0 0
        %1877 = vmatpush1.bf16.msra.mxu0 %v1869
        %1878 = vmatprep.subr.bf16.mxu0 0
        %1879 = vmatpush1.bf16.msra.mxu0 %v1870
        %1880 = vmatprep.subr.bf16.mxu0 0
        %1881 = vmatpush1.bf16.msra.mxu0 0
        %1882 = vmatprep.subr.bf16.mxu0 0
        %1883 = vmatpush1.bf16.msra.mxu0 0
        %1884 = vmatprep.subr.bf16.mxu0 0
        %1885 = vmatpush1.bf16.msra.mxu0 0
        %1886 = vmatprep.subr.bf16.mxu0 0
        %1887 = vmatpush1.bf16.msra.mxu0 0
        %1888 = vmatprep.subr.bf16.mxu0 0
        %1889 = vmatpush1.bf16.msra.mxu0 0
        %1890 = vmatprep.subr.bf16.mxu0 0
        %1891 = vmatpush1.bf16.msra.mxu0 0
        %1892 = vmatprep.subr.bf16.mxu0 0
        %1893 = vmatpush1.bf16.msra.mxu0 0
        %1894 = vmatprep.subr.bf16.mxu0 0
        %1895 = vmatpush1.bf16.msra.mxu0 0
        %1896 = vmatprep.subr.bf16.mxu0 0
        %1897 = vmatpush1.bf16.msra.mxu0 0
        %1898 = vmatprep.subr.bf16.mxu0 0
        %1899 = vmatpush1.bf16.msra.mxu0 0
        %1900 = vmatprep.subr.bf16.mxu0 0
        %1901 = vmatpush1.bf16.msra.mxu0 0
        %1902 = vmatprep.subr.bf16.mxu0 0
        %1903 = vmatpush1.bf16.msra.mxu0 0
        %1904 = vmatprep.subr.bf16.mxu0 0
        %1905 = vmatpush1.bf16.msra.mxu0 0
        %1906 = vmatprep.subr.bf16.mxu0 0
        %1907 = vmatpush1.bf16.msra.mxu0 0
        %1908 = vmatprep.mubr.bf16.mxu0 0
        %1909 = vmatmul.mubr.bf16.gmra.mrb[0].mxu0 %v1874
        %v1910 = vpop.f32.mrb[0].mxu0
        %v1911 = vadd.f32 0.0, %v1910
        %v1912 = vpop.f32.mrb[0].mxu0
        %v1913 = vpop.f32.mrb[0].mxu0
        %v1914 = vadd.f32 0.0, %v1913
        %v1915 = vpop.f32.mrb[0].mxu0
        %1916 = vdwg.mxu0
        %v1918 = vsel %vm1036, %v1860, 0
        %1920 = vmatprep.subr.bf16.mxu0 0
        %1921 = vmatpush1.bf16.msra.mxu0 %v1869
        %1922 = vmatprep.subr.bf16.mxu0 0
        %1923 = vmatpush1.bf16.msra.mxu0 %v1870
        %1924 = vmatprep.subr.bf16.mxu0 0
        %1925 = vmatpush1.bf16.msra.mxu0 0
        %1926 = vmatprep.subr.bf16.mxu0 0
        %1927 = vmatpush1.bf16.msra.mxu0 0
        %1928 = vmatprep.subr.bf16.mxu0 0
        %1929 = vmatpush1.bf16.msra.mxu0 0
        %1930 = vmatprep.subr.bf16.mxu0 0
        %1931 = vmatpush1.bf16.msra.mxu0 0
        %1932 = vmatprep.subr.bf16.mxu0 0
        %1933 = vmatpush1.bf16.msra.mxu0 0
        %1934 = vmatprep.subr.bf16.mxu0 0
        %1935 = vmatpush1.bf16.msra.mxu0 0
        %1936 = vmatprep.subr.bf16.mxu0 0
        %1937 = vmatpush1.bf16.msra.mxu0 0
        %1938 = vmatprep.subr.bf16.mxu0 0
        %1939 = vmatpush1.bf16.msra.mxu0 0
        %1940 = vmatprep.subr.bf16.mxu0 0
        %1941 = vmatpush1.bf16.msra.mxu0 0
        %1942 = vmatprep.subr.bf16.mxu0 0
        %1943 = vmatpush1.bf16.msra.mxu0 0
        %1944 = vmatprep.subr.bf16.mxu0 0
        %1945 = vmatpush1.bf16.msra.mxu0 0
        %1946 = vmatprep.subr.bf16.mxu0 0
        %1947 = vmatpush1.bf16.msra.mxu0 0
        %1948 = vmatprep.subr.bf16.mxu0 0
        %1949 = vmatpush1.bf16.msra.mxu0 0
        %1950 = vmatprep.subr.bf16.mxu0 0
        %1951 = vmatpush1.bf16.msra.mxu0 0
        %1952 = vmatprep.mubr.bf16.mxu0 0
        %1953 = vmatmul.mubr.bf16.gmra.mrb[0].mxu0 %v1918
        %v1954 = vpop.f32.mrb[0].mxu0
        %v1955 = vadd.f32 0.0, %v1954
        %v1956 = vpop.f32.mrb[0].mxu0
        %v1957 = vpop.f32.mrb[0].mxu0
        %v1958 = vadd.f32 0.0, %v1957
        %v1959 = vpop.f32.mrb[0].mxu0
        %1960 = vdwg.mxu0
        %v1961 = vld [vmem:[%s906] sm:$0x1]
        %v1962 = vld [vmem:[%s906 + $0x1] sm:$0x1]
        %vm1963 = vcmp.gt.f32.partialorder %v1961, 0.0
        %vm1964 = vcmp.gt.f32.partialorder %v1962, 0.0
        %v1965 = vsel %vm1963, 1, 0
        %v1966 = vsel %vm1964, 1, 0
        %v1967 = vlaneseq
        %v1968 = vshrl.u32 %v1967, 7
        %v1969 = vsub.s32 0, %v1968
        %v1970 = vrot.slane %v1965, %v1969
        %v1971 = vlaneseq
        %v1972 = vshrl.u32 %v1971, 7
        %v1973 = vsub.s32 0, %v1972
        %v1974 = vrot.slane %v1966, %v1973
        %vm1975 = vcmp.eq.s32.totalorder %v1970, 1
        %vm1976 = vcmp.eq.s32.totalorder %v1974, 1
        %v1977 = vld [vmem:[%s937] sm:$0xf]
        %v1978 = vld [vmem:[%s937 + $0x4] sm:$0xf]
        %v1979 = vld [vmem:[%s937 + $0x8] sm:$0xf]
        %v1980 = vld [vmem:[%s937 + $0xc] sm:$0xf]
        %v1981 = vmul.f32 %v1845, 0.25
        %v1982 = vmul.f32 %v1848, 0.25
        %v1983 = vpack.c.bf16 %v1981, %v1981
        %v1984 = vpack.c.bf16 %v1982, %v1982
        %v1985 = vpack.c.bf16 %v1914, %v1911
        %v1986 = vpack.c.bf16 %v1958, %v1955
        %v1988 = vsel %vm1190, %v1983, 0
        %v1991 = vsel %vm1190, %v1985, 0
        %1993 = vmatprep.subr.bf16.mxu0 0
        %1994 = vmatpush1.bf16.xpose.msra.mxu0 %v1991
        %1995 = vmatprep.subr.bf16.mxu0 0
        %1996 = vmatpush1.bf16.xpose.msra.mxu0 0
        %1997 = vmatprep.subr.bf16.mxu0 0
        %1998 = vmatpush1.bf16.xpose.msra.mxu0 0
        %1999 = vmatprep.subr.bf16.mxu0 0
        %2000 = vmatpush1.bf16.xpose.msra.mxu0 0
        %2001 = vmatprep.subr.bf16.mxu0 0
        %2002 = vmatpush1.bf16.xpose.msra.mxu0 0
        %2003 = vmatprep.subr.bf16.mxu0 0
        %2004 = vmatpush1.bf16.xpose.msra.mxu0 0
        %2005 = vmatprep.subr.bf16.mxu0 0
        %2006 = vmatpush1.bf16.xpose.msra.mxu0 0
        %2007 = vmatprep.subr.bf16.mxu0 0
        %2008 = vmatpush1.bf16.xpose.msra.mxu0 0
        %2009 = vmatprep.subr.bf16.mxu0 0
        %2010 = vmatpush1.bf16.xpose.msra.mxu0 0
        %2011 = vmatprep.subr.bf16.mxu0 0
        %2012 = vmatpush1.bf16.xpose.msra.mxu0 0
        %2013 = vmatprep.subr.bf16.mxu0 0
        %2014 = vmatpush1.bf16.xpose.msra.mxu0 0
        %2015 = vmatprep.subr.bf16.mxu0 0
        %2016 = vmatpush1.bf16.xpose.msra.mxu0 0
        %2017 = vmatprep.subr.bf16.mxu0 0
        %2018 = vmatpush1.bf16.xpose.msra.mxu0 0
        %2019 = vmatprep.subr.bf16.mxu0 0
        %2020 = vmatpush1.bf16.xpose.msra.mxu0 0
        %2021 = vmatprep.subr.bf16.mxu0 0
        %2022 = vmatpush1.bf16.xpose.msra.mxu0 0
        %2023 = vmatprep.subr.bf16.mxu0 0
        %2024 = vmatpush1.bf16.xpose.msra.mxu0 0
        %2025 = vmatprep.mubr.bf16.mxu0 0
        %2026 = vmatmul.mubr.bf16.gmra.mrb[0].mxu0 %v1988
        %v2027 = vpop.f32.mrb[0].mxu0
        %v2028 = vadd.f32 0.0, %v2027
        %v2029 = vpop.f32.mrb[0].mxu0
        %v2030 = vpop.f32.mrb[0].mxu0
        %v2031 = vpop.f32.mrb[0].mxu0
        %2032 = vdwg.mxu0
        %v2034 = vsel %vm1190, %v1984, 0
        %v2037 = vsel %vm1190, %v1986, 0
        %2039 = vmatprep.subr.bf16.mxu0 0
        %2040 = vmatpush1.bf16.xpose.msra.mxu0 %v2037
        %2041 = vmatprep.subr.bf16.mxu0 0
        %2042 = vmatpush1.bf16.xpose.msra.mxu0 0
        %2043 = vmatprep.subr.bf16.mxu0 0
        %2044 = vmatpush1.bf16.xpose.msra.mxu0 0
        %2045 = vmatprep.subr.bf16.mxu0 0
        %2046 = vmatpush1.bf16.xpose.msra.mxu0 0
        %2047 = vmatprep.subr.bf16.mxu0 0
        %2048 = vmatpush1.bf16.xpose.msra.mxu0 0
        %2049 = vmatprep.subr.bf16.mxu0 0
        %2050 = vmatpush1.bf16.xpose.msra.mxu0 0
        %2051 = vmatprep.subr.bf16.mxu0 0
        %2052 = vmatpush1.bf16.xpose.msra.mxu0 0
        %2053 = vmatprep.subr.bf16.mxu0 0
        %2054 = vmatpush1.bf16.xpose.msra.mxu0 0
        %2055 = vmatprep.subr.bf16.mxu0 0
        %2056 = vmatpush1.bf16.xpose.msra.mxu0 0
        %2057 = vmatprep.subr.bf16.mxu0 0
        %2058 = vmatpush1.bf16.xpose.msra.mxu0 0
        %2059 = vmatprep.subr.bf16.mxu0 0
        %2060 = vmatpush1.bf16.xpose.msra.mxu0 0
        %2061 = vmatprep.subr.bf16.mxu0 0
        %2062 = vmatpush1.bf16.xpose.msra.mxu0 0
        %2063 = vmatprep.subr.bf16.mxu0 0
        %2064 = vmatpush1.bf16.xpose.msra.mxu0 0
        %2065 = vmatprep.subr.bf16.mxu0 0
        %2066 = vmatpush1.bf16.xpose.msra.mxu0 0
        %2067 = vmatprep.subr.bf16.mxu0 0
        %2068 = vmatpush1.bf16.xpose.msra.mxu0 0
        %2069 = vmatprep.subr.bf16.mxu0 0
        %2070 = vmatpush1.bf16.xpose.msra.mxu0 0
        %2071 = vmatprep.mubr.bf16.mxu0 0
        %2072 = vmatmul.mubr.bf16.gmra.mrb[0].mxu0 %v2034
        %v2073 = vpop.f32.mrb[0].mxu0
        %v2074 = vadd.f32 0.0, %v2073
        %v2075 = vpop.f32.mrb[0].mxu0
        %v2076 = vpop.f32.mrb[0].mxu0
        %v2077 = vpop.f32.mrb[0].mxu0
        %2078 = vdwg.mxu0
        %v2079 = vsel %vm1975, -1e+18, %v2028
        %v2080 = vsel %vm1976, -1e+18, %v2074
        %v2081 = vadd.f32 %v2079, 0.0
        %v2082 = vadd.f32 %v2080, 0.0
        %vm2083 = vcmask 80896
        %v2084 = vsel %vm2083, %v2079, -inf
        %2085 = vmax.xlane.f32.xlu0 %v2084
        %v2086 = vpop.xlane.xlu0 %2085
        %v2087 = vsel %vm2083, %v2080, -inf
        %2088 = vmax.xlane.f32.xlu0 %v2087
        %v2089 = vpop.xlane.xlu0 %2088
        %v2090 = vsub.f32 %v2079, %v2086
        %v2091 = vsub.f32 %v2080, %v2089
        %v2092 = vmul.f32 %v2090, 1.442695
        %v2093 = vpow.pop %v2092
        %v2094 = vmul.f32 %v2091, 1.442695
        %v2095 = vpow.pop %v2094
        %v2096 = vsel %vm2083, %v2093, 0.0
        %2097 = vadd.xlane.f32.xlu0 %v2096
        %v2098 = vpop.xlane.xlu0 %2097
        %v2099 = vsel %vm2083, %v2095, 0.0
        %2100 = vadd.xlane.f32.xlu0 %v2099
        %v2101 = vpop.xlane.xlu0 %2100
        %v2102 = vrcp.pop %v2098
        %v2103 = vrcp.pop %v2101
        %v2104 = vmul.f32 %v2093, %v2102
        %v2105 = vmul.f32 %v2095, %v2103
        %v2106 = vpack.c.bf16 %v2104, %v2104
        %v2107 = vpack.c.bf16 %v2105, %v2105
        %2109 = vrot.lane.b32.xlu0 %v1985, 96
        %v2110 = vpop.permute.xlu0 %2109
        %v2112 = vsel %vm2083, %v2106, 0
        %vm2114 = vcmask 1044480
        %v2116 = vsel %vm2114, %v2110, 0
        %2118 = vmatprep.subr.bf16.mxu0 0
        %2119 = vmatpush1.bf16.msra.mxu0 %v2116
        %2120 = vmatprep.subr.bf16.mxu0 0
        %2121 = vmatpush1.bf16.msra.mxu0 0
        %2122 = vmatprep.subr.bf16.mxu0 0
        %2123 = vmatpush1.bf16.msra.mxu0 0
        %2124 = vmatprep.subr.bf16.mxu0 0
        %2125 = vmatpush1.bf16.msra.mxu0 0
        %2126 = vmatprep.subr.bf16.mxu0 0
        %2127 = vmatpush1.bf16.msra.mxu0 0
        %2128 = vmatprep.subr.bf16.mxu0 0
        %2129 = vmatpush1.bf16.msra.mxu0 0
        %2130 = vmatprep.subr.bf16.mxu0 0
        %2131 = vmatpush1.bf16.msra.mxu0 0
        %2132 = vmatprep.subr.bf16.mxu0 0
        %2133 = vmatpush1.bf16.msra.mxu0 0
        %2134 = vmatprep.subr.bf16.mxu0 0
        %2135 = vmatpush1.bf16.msra.mxu0 0
        %2136 = vmatprep.subr.bf16.mxu0 0
        %2137 = vmatpush1.bf16.msra.mxu0 0
        %2138 = vmatprep.subr.bf16.mxu0 0
        %2139 = vmatpush1.bf16.msra.mxu0 0
        %2140 = vmatprep.subr.bf16.mxu0 0
        %2141 = vmatpush1.bf16.msra.mxu0 0
        %2142 = vmatprep.subr.bf16.mxu0 0
        %2143 = vmatpush1.bf16.msra.mxu0 0
        %2144 = vmatprep.subr.bf16.mxu0 0
        %2145 = vmatpush1.bf16.msra.mxu0 0
        %2146 = vmatprep.subr.bf16.mxu0 0
        %2147 = vmatpush1.bf16.msra.mxu0 0
        %2148 = vmatprep.subr.bf16.mxu0 0
        %2149 = vmatpush1.bf16.msra.mxu0 0
        %2150 = vmatprep.mubr.bf16.mxu0 0
        %2151 = vmatmul.mubr.bf16.gmra.mrb[0].mxu0 %v2112
        %v2152 = vpop.f32.mrb[0].mxu0
        %v2153 = vadd.f32 0.0, %v2152
        %v2154 = vpop.f32.mrb[0].mxu0
        %v2155 = vpop.f32.mrb[0].mxu0
        %v2156 = vpop.f32.mrb[0].mxu0
        %2157 = vdwg.mxu0
        %2159 = vrot.lane.b32.xlu0 %v1986, 96
        %v2160 = vpop.permute.xlu0 %2159
        %v2162 = vsel %vm2083, %v2107, 0
        %v2165 = vsel %vm2114, %v2160, 0
        %2167 = vmatprep.subr.bf16.mxu0 0
        %2168 = vmatpush1.bf16.msra.mxu0 %v2165
        %2169 = vmatprep.subr.bf16.mxu0 0
        %2170 = vmatpush1.bf16.msra.mxu0 0
        %2171 = vmatprep.subr.bf16.mxu0 0
        %2172 = vmatpush1.bf16.msra.mxu0 0
        %2173 = vmatprep.subr.bf16.mxu0 0
        %2174 = vmatpush1.bf16.msra.mxu0 0
        %2175 = vmatprep.subr.bf16.mxu0 0
        %2176 = vmatpush1.bf16.msra.mxu0 0
        %2177 = vmatprep.subr.bf16.mxu0 0
        %2178 = vmatpush1.bf16.msra.mxu0 0
        %2179 = vmatprep.subr.bf16.mxu0 0
        %2180 = vmatpush1.bf16.msra.mxu0 0
        %2181 = vmatprep.subr.bf16.mxu0 0
        %2182 = vmatpush1.bf16.msra.mxu0 0
        %2183 = vmatprep.subr.bf16.mxu0 0
        %2184 = vmatpush1.bf16.msra.mxu0 0
        %2185 = vmatprep.subr.bf16.mxu0 0
        %2186 = vmatpush1.bf16.msra.mxu0 0
        %2187 = vmatprep.subr.bf16.mxu0 0
        %2188 = vmatpush1.bf16.msra.mxu0 0
        %2189 = vmatprep.subr.bf16.mxu0 0
        %2190 = vmatpush1.bf16.msra.mxu0 0
        %2191 = vmatprep.subr.bf16.mxu0 0
        %2192 = vmatpush1.bf16.msra.mxu0 0
        %2193 = vmatprep.subr.bf16.mxu0 0
        %2194 = vmatpush1.bf16.msra.mxu0 0
        %2195 = vmatprep.subr.bf16.mxu0 0
        %2196 = vmatpush1.bf16.msra.mxu0 0
        %2197 = vmatprep.subr.bf16.mxu0 0
        %2198 = vmatpush1.bf16.msra.mxu0 0
        %2199 = vmatprep.mubr.bf16.mxu0 0
        %2200 = vmatmul.mubr.bf16.gmra.mrb[0].mxu0 %v2162
        %v2201 = vpop.f32.mrb[0].mxu0
        %v2202 = vadd.f32 0.0, %v2201
        %v2203 = vpop.f32.mrb[0].mxu0
        %v2204 = vpop.f32.mrb[0].mxu0
        %v2205 = vpop.f32.mrb[0].mxu0
        %2206 = vdwg.mxu0
        %v2207 = vpack.c.bf16 %v2202, %v2153
        %2209 = vrot.lane.b32.xlu0 %v1983, 112
        %v2210 = vpop.permute.xlu0 %2209
        %2211 = vrot.lane.b32.xlu0 %v1985, 112
        %v2212 = vpop.permute.xlu0 %2211
        %v2214 = vsel %vm1190, %v2210, 0
        %v2217 = vsel %vm1190, %v2212, 0
        %2219 = vmatprep.subr.bf16.mxu0 0
        %2220 = vmatpush1.bf16.xpose.msra.mxu0 %v2217
        %2221 = vmatprep.subr.bf16.mxu0 0
        %2222 = vmatpush1.bf16.xpose.msra.mxu0 0
        %2223 = vmatprep.subr.bf16.mxu0 0
        %2224 = vmatpush1.bf16.xpose.msra.mxu0 0
        %2225 = vmatprep.subr.bf16.mxu0 0
        %2226 = vmatpush1.bf16.xpose.msra.mxu0 0
        %2227 = vmatprep.subr.bf16.mxu0 0
        %2228 = vmatpush1.bf16.xpose.msra.mxu0 0
        %2229 = vmatprep.subr.bf16.mxu0 0
        %2230 = vmatpush1.bf16.xpose.msra.mxu0 0
        %2231 = vmatprep.subr.bf16.mxu0 0
        %2232 = vmatpush1.bf16.xpose.msra.mxu0 0
        %2233 = vmatprep.subr.bf16.mxu0 0
        %2234 = vmatpush1.bf16.xpose.msra.mxu0 0
        %2235 = vmatprep.subr.bf16.mxu0 0
        %2236 = vmatpush1.bf16.xpose.msra.mxu0 0
        %2237 = vmatprep.subr.bf16.mxu0 0
        %2238 = vmatpush1.bf16.xpose.msra.mxu0 0
        %2239 = vmatprep.subr.bf16.mxu0 0
        %2240 = vmatpush1.bf16.xpose.msra.mxu0 0
        %2241 = vmatprep.subr.bf16.mxu0 0
        %2242 = vmatpush1.bf16.xpose.msra.mxu0 0
        %2243 = vmatprep.subr.bf16.mxu0 0
        %2244 = vmatpush1.bf16.xpose.msra.mxu0 0
        %2245 = vmatprep.subr.bf16.mxu0 0
        %2246 = vmatpush1.bf16.xpose.msra.mxu0 0
        %2247 = vmatprep.subr.bf16.mxu0 0
        %2248 = vmatpush1.bf16.xpose.msra.mxu0 0
        %2249 = vmatprep.subr.bf16.mxu0 0
        %2250 = vmatpush1.bf16.xpose.msra.mxu0 0
        %2251 = vmatprep.mubr.bf16.mxu0 0
        %2252 = vmatmul.mubr.bf16.gmra.mrb[0].mxu0 %v2214
        %v2253 = vpop.f32.mrb[0].mxu0
        %v2254 = vadd.f32 0.0, %v2253
        %v2255 = vpop.f32.mrb[0].mxu0
        %v2256 = vpop.f32.mrb[0].mxu0
        %v2257 = vpop.f32.mrb[0].mxu0
        %2258 = vdwg.mxu0
        %2260 = vrot.lane.b32.xlu0 %v1984, 112
        %v2261 = vpop.permute.xlu0 %2260
        %2262 = vrot.lane.b32.xlu0 %v1986, 112
        %v2263 = vpop.permute.xlu0 %2262
        %v2265 = vsel %vm1190, %v2261, 0
        %v2268 = vsel %vm1190, %v2263, 0
        %2270 = vmatprep.subr.bf16.mxu0 0
        %2271 = vmatpush1.bf16.xpose.msra.mxu0 %v2268
        %2272 = vmatprep.subr.bf16.mxu0 0
        %2273 = vmatpush1.bf16.xpose.msra.mxu0 0
        %2274 = vmatprep.subr.bf16.mxu0 0
        %2275 = vmatpush1.bf16.xpose.msra.mxu0 0
        %2276 = vmatprep.subr.bf16.mxu0 0
        %2277 = vmatpush1.bf16.xpose.msra.mxu0 0
        %2278 = vmatprep.subr.bf16.mxu0 0
        %2279 = vmatpush1.bf16.xpose.msra.mxu0 0
        %2280 = vmatprep.subr.bf16.mxu0 0
        %2281 = vmatpush1.bf16.xpose.msra.mxu0 0
        %2282 = vmatprep.subr.bf16.mxu0 0
        %2283 = vmatpush1.bf16.xpose.msra.mxu0 0
        %2284 = vmatprep.subr.bf16.mxu0 0
        %2285 = vmatpush1.bf16.xpose.msra.mxu0 0
        %2286 = vmatprep.subr.bf16.mxu0 0
        %2287 = vmatpush1.bf16.xpose.msra.mxu0 0
        %2288 = vmatprep.subr.bf16.mxu0 0
        %2289 = vmatpush1.bf16.xpose.msra.mxu0 0
        %2290 = vmatprep.subr.bf16.mxu0 0
        %2291 = vmatpush1.bf16.xpose.msra.mxu0 0
        %2292 = vmatprep.subr.bf16.mxu0 0
        %2293 = vmatpush1.bf16.xpose.msra.mxu0 0
        %2294 = vmatprep.subr.bf16.mxu0 0
        %2295 = vmatpush1.bf16.xpose.msra.mxu0 0
        %2296 = vmatprep.subr.bf16.mxu0 0
        %2297 = vmatpush1.bf16.xpose.msra.mxu0 0
        %2298 = vmatprep.subr.bf16.mxu0 0
        %2299 = vmatpush1.bf16.xpose.msra.mxu0 0
        %2300 = vmatprep.subr.bf16.mxu0 0
        %2301 = vmatpush1.bf16.xpose.msra.mxu0 0
        %2302 = vmatprep.mubr.bf16.mxu0 0
        %2303 = vmatmul.mubr.bf16.gmra.mrb[0].mxu0 %v2265
        %v2304 = vpop.f32.mrb[0].mxu0
        %v2305 = vadd.f32 0.0, %v2304
        %v2306 = vpop.f32.mrb[0].mxu0
        %v2307 = vpop.f32.mrb[0].mxu0
        %v2308 = vpop.f32.mrb[0].mxu0
        %2309 = vdwg.mxu0
        %v2310 = vsel %vm1975, -1e+18, %v2254
        %v2311 = vsel %vm1976, -1e+18, %v2305
        %v2312 = vadd.f32 %v2081, %v2310
        %v2313 = vadd.f32 %v2082, %v2311
        %v2314 = vsel %vm2083, %v2310, -inf
        %2315 = vmax.xlane.f32.xlu0 %v2314
        %v2316 = vpop.xlane.xlu0 %2315
        %v2317 = vsel %vm2083, %v2311, -inf
        %2318 = vmax.xlane.f32.xlu0 %v2317
        %v2319 = vpop.xlane.xlu0 %2318
        %v2320 = vsub.f32 %v2310, %v2316
        %v2321 = vsub.f32 %v2311, %v2319
        %v2322 = vmul.f32 %v2320, 1.442695
        %v2323 = vpow.pop %v2322
        %v2324 = vmul.f32 %v2321, 1.442695
        %v2325 = vpow.pop %v2324
        %v2326 = vsel %vm2083, %v2323, 0.0
        %2327 = vadd.xlane.f32.xlu0 %v2326
        %v2328 = vpop.xlane.xlu0 %2327
        %v2329 = vsel %vm2083, %v2325, 0.0
        %2330 = vadd.xlane.f32.xlu0 %v2329
        %v2331 = vpop.xlane.xlu0 %2330
        %v2332 = vrcp.pop %v2328
        %v2333 = vrcp.pop %v2331
        %v2334 = vmul.f32 %v2323, %v2332
        %v2335 = vmul.f32 %v2325, %v2333
        %v2336 = vpack.c.bf16 %v2334, %v2334
        %v2337 = vpack.c.bf16 %v2335, %v2335
        %2338 = vrot.lane.b32.xlu0 %v1985, 80
        %v2339 = vpop.permute.xlu0 %2338
        %v2341 = vsel %vm2083, %v2336, 0
        %v2344 = vsel %vm2114, %v2339, 0
        %2346 = vmatprep.subr.bf16.mxu0 0
        %2347 = vmatpush1.bf16.msra.mxu0 %v2344
        %2348 = vmatprep.subr.bf16.mxu0 0
        %2349 = vmatpush1.bf16.msra.mxu0 0
        %2350 = vmatprep.subr.bf16.mxu0 0
        %2351 = vmatpush1.bf16.msra.mxu0 0
        %2352 = vmatprep.subr.bf16.mxu0 0
        %2353 = vmatpush1.bf16.msra.mxu0 0
        %2354 = vmatprep.subr.bf16.mxu0 0
        %2355 = vmatpush1.bf16.msra.mxu0 0
        %2356 = vmatprep.subr.bf16.mxu0 0
        %2357 = vmatpush1.bf16.msra.mxu0 0
        %2358 = vmatprep.subr.bf16.mxu0 0
        %2359 = vmatpush1.bf16.msra.mxu0 0
        %2360 = vmatprep.subr.bf16.mxu0 0
        %2361 = vmatpush1.bf16.msra.mxu0 0
        %2362 = vmatprep.subr.bf16.mxu0 0
        %2363 = vmatpush1.bf16.msra.mxu0 0
        %2364 = vmatprep.subr.bf16.mxu0 0
        %2365 = vmatpush1.bf16.msra.mxu0 0
        %2366 = vmatprep.subr.bf16.mxu0 0
        %2367 = vmatpush1.bf16.msra.mxu0 0
        %2368 = vmatprep.subr.bf16.mxu0 0
        %2369 = vmatpush1.bf16.msra.mxu0 0
        %2370 = vmatprep.subr.bf16.mxu0 0
        %2371 = vmatpush1.bf16.msra.mxu0 0
        %2372 = vmatprep.subr.bf16.mxu0 0
        %2373 = vmatpush1.bf16.msra.mxu0 0
        %2374 = vmatprep.subr.bf16.mxu0 0
        %2375 = vmatpush1.bf16.msra.mxu0 0
        %2376 = vmatprep.subr.bf16.mxu0 0
        %2377 = vmatpush1.bf16.msra.mxu0 0
        %2378 = vmatprep.mubr.bf16.mxu0 0
        %2379 = vmatmul.mubr.bf16.gmra.mrb[0].mxu0 %v2341
        %v2380 = vpop.f32.mrb[0].mxu0
        %v2381 = vadd.f32 0.0, %v2380
        %v2382 = vpop.f32.mrb[0].mxu0
        %v2383 = vpop.f32.mrb[0].mxu0
        %v2384 = vpop.f32.mrb[0].mxu0
        %2385 = vdwg.mxu0
        %2386 = vrot.lane.b32.xlu0 %v1986, 80
        %v2387 = vpop.permute.xlu0 %2386
        %v2389 = vsel %vm2083, %v2337, 0
        %v2392 = vsel %vm2114, %v2387, 0
        %2394 = vmatprep.subr.bf16.mxu0 0
        %2395 = vmatpush1.bf16.msra.mxu0 %v2392
        %2396 = vmatprep.subr.bf16.mxu0 0
        %2397 = vmatpush1.bf16.msra.mxu0 0
        %2398 = vmatprep.subr.bf16.mxu0 0
        %2399 = vmatpush1.bf16.msra.mxu0 0
        %2400 = vmatprep.subr.bf16.mxu0 0
        %2401 = vmatpush1.bf16.msra.mxu0 0
        %2402 = vmatprep.subr.bf16.mxu0 0
        %2403 = vmatpush1.bf16.msra.mxu0 0
        %2404 = vmatprep.subr.bf16.mxu0 0
        %2405 = vmatpush1.bf16.msra.mxu0 0
        %2406 = vmatprep.subr.bf16.mxu0 0
        %2407 = vmatpush1.bf16.msra.mxu0 0
        %2408 = vmatprep.subr.bf16.mxu0 0
        %2409 = vmatpush1.bf16.msra.mxu0 0
        %2410 = vmatprep.subr.bf16.mxu0 0
        %2411 = vmatpush1.bf16.msra.mxu0 0
        %2412 = vmatprep.subr.bf16.mxu0 0
        %2413 = vmatpush1.bf16.msra.mxu0 0
        %2414 = vmatprep.subr.bf16.mxu0 0
        %2415 = vmatpush1.bf16.msra.mxu0 0
        %2416 = vmatprep.subr.bf16.mxu0 0
        %2417 = vmatpush1.bf16.msra.mxu0 0
        %2418 = vmatprep.subr.bf16.mxu0 0
        %2419 = vmatpush1.bf16.msra.mxu0 0
        %2420 = vmatprep.subr.bf16.mxu0 0
        %2421 = vmatpush1.bf16.msra.mxu0 0
        %2422 = vmatprep.subr.bf16.mxu0 0
        %2423 = vmatpush1.bf16.msra.mxu0 0
        %2424 = vmatprep.subr.bf16.mxu0 0
        %2425 = vmatpush1.bf16.msra.mxu0 0
        %2426 = vmatprep.mubr.bf16.mxu0 0
        %2427 = vmatmul.mubr.bf16.gmra.mrb[0].mxu0 %v2389
        %v2428 = vpop.f32.mrb[0].mxu0
        %v2429 = vadd.f32 0.0, %v2428
        %v2430 = vpop.f32.mrb[0].mxu0
        %v2431 = vpop.f32.mrb[0].mxu0
        %v2432 = vpop.f32.mrb[0].mxu0
        %2433 = vdwg.mxu0
        %v2434 = vpack.c.bf16 %v2429, %v2381
        %v2437 = vunpack.c.l.b16 %v1979
        %v2438 = vunpack.c.l.b16 %v1980
        %v2439 = vpack.c.b16 %v2438, %v2437
        %v2442 = vsel %vm1190, %v2434, 0
        %2444 = vmatprep.subr.bf16.mxu0 0
        %2445 = vmatpush1.bf16.msra.mxu0 %v2439
        %2446 = vmatprep.subr.bf16.mxu0 0
        %2447 = vmatpush1.bf16.msra.mxu0 0
        %2448 = vmatprep.subr.bf16.mxu0 0
        %2449 = vmatpush1.bf16.msra.mxu0 0
        %2450 = vmatprep.subr.bf16.mxu0 0
        %2451 = vmatpush1.bf16.msra.mxu0 0
        %2452 = vmatprep.subr.bf16.mxu0 0
        %2453 = vmatpush1.bf16.msra.mxu0 0
        %2454 = vmatprep.subr.bf16.mxu0 0
        %2455 = vmatpush1.bf16.msra.mxu0 0
        %2456 = vmatprep.subr.bf16.mxu0 0
        %2457 = vmatpush1.bf16.msra.mxu0 0
        %2458 = vmatprep.subr.bf16.mxu0 0
        %2459 = vmatpush1.bf16.msra.mxu0 0
        %2460 = vmatprep.subr.bf16.mxu0 0
        %2461 = vmatpush1.bf16.msra.mxu0 0
        %2462 = vmatprep.subr.bf16.mxu0 0
        %2463 = vmatpush1.bf16.msra.mxu0 0
        %2464 = vmatprep.subr.bf16.mxu0 0
        %2465 = vmatpush1.bf16.msra.mxu0 0
        %2466 = vmatprep.subr.bf16.mxu0 0
        %2467 = vmatpush1.bf16.msra.mxu0 0
        %2468 = vmatprep.subr.bf16.mxu0 0
        %2469 = vmatpush1.bf16.msra.mxu0 0
        %2470 = vmatprep.subr.bf16.mxu0 0
        %2471 = vmatpush1.bf16.msra.mxu0 0
        %2472 = vmatprep.subr.bf16.mxu0 0
        %2473 = vmatpush1.bf16.msra.mxu0 0
        %2474 = vmatprep.subr.bf16.mxu0 0
        %2475 = vmatpush1.bf16.msra.mxu0 0
        %2476 = vmatprep.mubr.bf16.mxu0 0
        %2477 = vmatmul.mubr.bf16.gmra.mrb[0].mxu0 %v2442
        %v2478 = vpop.f32.mrb[0].mxu0
        %v2479 = vadd.f32 0.0, %v2478
        %v2480 = vpop.f32.mrb[0].mxu0
        %v2481 = vpop.f32.mrb[0].mxu0
        %v2482 = vadd.f32 0.0, %v2481
        %v2483 = vpop.f32.mrb[0].mxu0
        %2484 = vdwg.mxu0
        %v2487 = vunpack.c.l.b16 %v1977
        %v2488 = vunpack.c.l.b16 %v1978
        %v2489 = vpack.c.b16 %v2488, %v2487
        %v2492 = vsel %vm1190, %v2207, 0
        %2494 = vmatprep.subr.bf16.mxu0 0
        %2495 = vmatpush1.bf16.msra.mxu0 %v2489
        %2496 = vmatprep.subr.bf16.mxu0 0
        %2497 = vmatpush1.bf16.msra.mxu0 0
        %2498 = vmatprep.subr.bf16.mxu0 0
        %2499 = vmatpush1.bf16.msra.mxu0 0
        %2500 = vmatprep.subr.bf16.mxu0 0
        %2501 = vmatpush1.bf16.msra.mxu0 0
        %2502 = vmatprep.subr.bf16.mxu0 0
        %2503 = vmatpush1.bf16.msra.mxu0 0
        %2504 = vmatprep.subr.bf16.mxu0 0
        %2505 = vmatpush1.bf16.msra.mxu0 0
        %2506 = vmatprep.subr.bf16.mxu0 0
        %2507 = vmatpush1.bf16.msra.mxu0 0
        %2508 = vmatprep.subr.bf16.mxu0 0
        %2509 = vmatpush1.bf16.msra.mxu0 0
        %2510 = vmatprep.subr.bf16.mxu0 0
        %2511 = vmatpush1.bf16.msra.mxu0 0
        %2512 = vmatprep.subr.bf16.mxu0 0
        %2513 = vmatpush1.bf16.msra.mxu0 0
        %2514 = vmatprep.subr.bf16.mxu0 0
        %2515 = vmatpush1.bf16.msra.mxu0 0
        %2516 = vmatprep.subr.bf16.mxu0 0
        %2517 = vmatpush1.bf16.msra.mxu0 0
        %2518 = vmatprep.subr.bf16.mxu0 0
        %2519 = vmatpush1.bf16.msra.mxu0 0
        %2520 = vmatprep.subr.bf16.mxu0 0
        %2521 = vmatpush1.bf16.msra.mxu0 0
        %2522 = vmatprep.subr.bf16.mxu0 0
        %2523 = vmatpush1.bf16.msra.mxu0 0
        %2524 = vmatprep.subr.bf16.mxu0 0
        %2525 = vmatpush1.bf16.msra.mxu0 0
        %2526 = vmatprep.mubr.bf16.mxu0 0
        %2527 = vmatmul.mubr.bf16.gmra.mrb[0].mxu0 %v2492
        %v2528 = vpop.f32.mrb[0].mxu0
        %v2529 = vadd.f32 %v2479, %v2528
        %v2530 = vpop.f32.mrb[0].mxu0
        %v2531 = vpop.f32.mrb[0].mxu0
        %v2532 = vadd.f32 %v2482, %v2531
        %v2533 = vpop.f32.mrb[0].mxu0
        %2534 = vdwg.mxu0
        %v2535 = vadd.f32 %v1736, %v2529
        %v2536 = vadd.f32 %v1737, %v2532
        %p2537 = scmp.eq.s32.totalorder %s45, 1
        // Predicated region
        $region113: #{decoder_forward.1} parent=95 // pred_check
          %p2538 = pneg %p2537
        $region114: #{decoder_forward.1} parent=95 // pred_check_branch
          %2540 = sbr.rel (%p2538) target = $region116
        $region115: #{decoder_forward.1} parent=95 // pred_region
          %v2541 = vmul.f32 %v2312, 0.5
          %v2542 = vmul.f32 %v2313, 0.5
          %2543 = vst.msk [vmem:[#allocation10] sm:$0xff] %vm2083, %v2541
          %2544 = vst.msk [vmem:[#allocation10 + $0x8] sm:$0xff] %vm2083, %v2542
        $region116: #{decoder_forward.1} parent=95 // pred_fallthru
          _
        %v2545 = vsel %vm1036, %v2535, 0.0
        %2546 = vadd.xlane.f32.xlu0 %v2545
        %v2547 = vpop.xlane.xlu0 %2546
        %v2548 = vsel %vm1036, %v2536, 0.0
        %2549 = vadd.xlane.f32.xlu0 %v2548
        %v2550 = vpop.xlane.xlu0 %2549
        %v2551 = vmul.f32 %v2547, %v1043
        %v2552 = vmul.f32 %v2550, %v1043
        %v2553 = vsub.f32 %v2535, %v2551
        %v2554 = vsub.f32 %v2536, %v2552
        %v2555 = vmul.f32 %v2553, %v2553
        %v2556 = vmul.f32 %v2554, %v2554
        %v2557 = vsel %vm1036, %v2555, 0.0
        %2558 = vadd.xlane.f32.xlu0 %v2557
        %v2559 = vpop.xlane.xlu0 %2558
        %v2560 = vsel %vm1036, %v2556, 0.0
        %2561 = vadd.xlane.f32.xlu0 %v2560
        %v2562 = vpop.xlane.xlu0 %2561
        %v2563 = vmul.f32 %v2559, %v1056
        %v2564 = vmul.f32 %v2562, %v1056
        %v2565 = vrsqrt.pop %v2563
        %v2566 = vmul.f32 %v2563, %v2565
        %vm2567 = vcmp.eq.f32.partialorder %v2563, inf
        %v2568 = vsel %vm2567, %v2563, %v2566
        %vm2569 = vcmp.eq.f32.partialorder %v2563, 0.0
        %v2570 = vand.u32 %v2563, 2147483648
        %v2571 = vsel %vm2569, %v2570, %v2568
        %v2572 = vrsqrt.pop %v2564
        %v2573 = vmul.f32 %v2564, %v2572
        %vm2574 = vcmp.eq.f32.partialorder %v2564, inf
        %v2575 = vsel %vm2574, %v2564, %v2573
        %vm2576 = vcmp.eq.f32.partialorder %v2564, 0.0
        %v2577 = vand.u32 %v2564, 2147483648
        %v2578 = vsel %vm2576, %v2577, %v2575
        %v2579 = vlaneseq
        %v2580 = vshrl.u32 %v2579, 7
        %v2581 = vsub.s32 2, %v2580
        %v2582 = vrot.slane %v1032, %v2581
        %v2583 = vmul.f32 %v2582, %v2553
        %v2584 = vmul.f32 %v2582, %v2554
        %v2585 = vadd.f32 %v2571, 1e-06
        %v2586 = vadd.f32 %v2578, 1e-06
        %v2587 = vrcp.pop %v2585
        %v2588 = vrcp.pop %v2586
        %v2589 = vmul.f32 %v2583, %v2587
        %v2590 = vmul.f32 %v2584, %v2588
        %v2591 = vlaneseq
        %v2592 = vshrl.u32 %v2591, 7
        %v2593 = vsub.s32 2, %v2592
        %v2594 = vrot.slane %v1033, %v2593
        %v2595 = vadd.f32 %v2589, %v2594
        %v2596 = vadd.f32 %v2590, %v2594
        %v2597 = vadd.s32 %v1153, 8
        %vm2598 = vcmp.lt.s32.totalorder %v1153, 0
        %v2599 = vsub.s32 0, %v1153
        %v2600 = vsel %vm2598, %v2599, %v1153
        %v2601 = vshrl.u32 %v2600, 3
        %v2602 = vand.u32 %v2600, 7
        %v2603 = vsub.s32 0, %v2602
        %v2604 = vsel %vm2598, %v2603, %v2602
        %vm2605 = vcmp.lt.s32.totalorder %v2597, 0
        %v2606 = vsub.s32 0, %v2597
        %v2607 = vsel %vm2605, %v2606, %v2597
        %v2608 = vshrl.u32 %v2607, 3
        %v2609 = vand.u32 %v2607, 7
        %v2610 = vsub.s32 0, %v2609
        %v2611 = vsel %vm2605, %v2610, %v2609
        %vm2612 = vcmp.ne.s32.totalorder %v2604, 0
        %vm2613 = vcmp.ne.s32.totalorder %v2611, 0
        %vm2614 = vcmp.lt.s32.totalorder %v2604, 0
        %vm2615 = vcmp.lt.s32.totalorder %v2611, 0
        %vm2616 = vmand %vm2614, %vm2612
        %vm2617 = vmand %vm2615, %vm2613
        %v2618 = vadd.s32 %v2604, 8
        %v2619 = vadd.s32 %v2611, 8
        %v2620 = vsel %vm2616, %v2618, %v2604
        %v2621 = vsel %vm2617, %v2619, %v2611
        %vm2624 = vcmask 1041408
        %v2625 = vrot.slane %v2595, 6
        %v2626 = vrot.slane %v2596, 6
        %v2627 = vsel %vm2624, %v2625, %v2626
        %v2630 = vsel %vm2624, 0.0, %v2625
        %vm2631 = vcmp.lt.s32.totalorder %v2620, 2
        %vm2632 = vcmp.lt.s32.totalorder %v2621, 2
        %v2633 = vsel %vm2631, 1, 0
        %v2634 = vsel %vm2632, 1, 0
        %vm2635 = vcmp.eq.s32.totalorder %v2633, 1
        %vm2636 = vcmp.eq.s32.totalorder %v2634, 1
        %v2637 = vsel %vm2635, 0.0, %v2630
        %v2638 = vsel %vm2636, 0.0, %v2627
        %v2639 = vld [vmem:[%s942] sm:$0xf]
        %v2640 = vld [vmem:[%s942 + $0x4] sm:$0xf]
        %v2641 = vld [vmem:[%s942 + $0x8] sm:$0xf]
        %v2642 = vld [vmem:[%s942 + $0xc] sm:$0xf]
        %v2643 = vpack.c.bf16 %v2638, %v2637
        %vm2644 = vcmask 1040384
        %v2645 = vrot.slane %v2595, 7
        %v2646 = vrot.slane %v2596, 7
        %v2647 = vsel %vm2644, %v2645, %v2646
        %v2650 = vsel %vm2644, 0.0, %v2645
        %vm2651 = vcmp.lt.s32.totalorder %v2620, 1
        %vm2652 = vcmp.lt.s32.totalorder %v2621, 1
        %v2653 = vsel %vm2651, 1, 0
        %v2654 = vsel %vm2652, 1, 0
        %vm2655 = vcmp.eq.s32.totalorder %v2653, 1
        %vm2656 = vcmp.eq.s32.totalorder %v2654, 1
        %v2657 = vsel %vm2655, 0.0, %v2650
        %v2658 = vsel %vm2656, 0.0, %v2647
        %s2659 = scalar_lea.vmem %s942, 16
        %v2660 = vld [vmem:[%s2659] sm:$0xf]
        %v2661 = vld [vmem:[%s2659 + $0x4] sm:$0xf]
        %v2662 = vld [vmem:[%s2659 + $0x8] sm:$0xf]
        %v2663 = vld [vmem:[%s2659 + $0xc] sm:$0xf]
        %v2664 = vpack.c.bf16 %v2658, %v2657
        %v2669 = vunpack.c.l.b16 %v2660
        %v2670 = vunpack.c.l.b16 %v2661
        %v2671 = vunpack.c.l.b16 %v2662
        %v2672 = vunpack.c.l.b16 %v2663
        %v2673 = vpack.c.b16 %v2670, %v2669
        %v2674 = vpack.c.b16 %v2672, %v2671
        %v2678 = vsel %vm1036, %v2664, 0
        %2680 = vmatprep.subr.bf16.mxu0 0
        %2681 = vmatpush1.bf16.msra.mxu0 %v2673
        %2682 = vmatprep.subr.bf16.mxu0 0
        %2683 = vmatpush1.bf16.msra.mxu0 %v2674
        %2684 = vmatprep.subr.bf16.mxu0 0
        %2685 = vmatpush1.bf16.msra.mxu0 0
        %2686 = vmatprep.subr.bf16.mxu0 0
        %2687 = vmatpush1.bf16.msra.mxu0 0
        %2688 = vmatprep.subr.bf16.mxu0 0
        %2689 = vmatpush1.bf16.msra.mxu0 0
        %2690 = vmatprep.subr.bf16.mxu0 0
        %2691 = vmatpush1.bf16.msra.mxu0 0
        %2692 = vmatprep.subr.bf16.mxu0 0
        %2693 = vmatpush1.bf16.msra.mxu0 0
        %2694 = vmatprep.subr.bf16.mxu0 0
        %2695 = vmatpush1.bf16.msra.mxu0 0
        %2696 = vmatprep.subr.bf16.mxu0 0
        %2697 = vmatpush1.bf16.msra.mxu0 0
        %2698 = vmatprep.subr.bf16.mxu0 0
        %2699 = vmatpush1.bf16.msra.mxu0 0
        %2700 = vmatprep.subr.bf16.mxu0 0
        %2701 = vmatpush1.bf16.msra.mxu0 0
        %2702 = vmatprep.subr.bf16.mxu0 0
        %2703 = vmatpush1.bf16.msra.mxu0 0
        %2704 = vmatprep.subr.bf16.mxu0 0
        %2705 = vmatpush1.bf16.msra.mxu0 0
        %2706 = vmatprep.subr.bf16.mxu0 0
        %2707 = vmatpush1.bf16.msra.mxu0 0
        %2708 = vmatprep.subr.bf16.mxu0 0
        %2709 = vmatpush1.bf16.msra.mxu0 0
        %2710 = vmatprep.subr.bf16.mxu0 0
        %2711 = vmatpush1.bf16.msra.mxu0 0
        %2712 = vmatprep.mubr.bf16.mxu0 0
        %2713 = vmatmul.mubr.bf16.gmra.mrb[0].mxu0 %v2678
        %v2714 = vpop.f32.mrb[0].mxu0
        %v2715 = vadd.f32 0.0, %v2714
        %v2716 = vpop.f32.mrb[0].mxu0
        %v2717 = vpop.f32.mrb[0].mxu0
        %v2718 = vadd.f32 0.0, %v2717
        %v2719 = vpop.f32.mrb[0].mxu0
        %2720 = vdwg.mxu0
        %v2725 = vunpack.c.l.b16 %v2639
        %v2726 = vunpack.c.l.b16 %v2640
        %v2727 = vunpack.c.l.b16 %v2641
        %v2728 = vunpack.c.l.b16 %v2642
        %v2729 = vpack.c.b16 %v2726, %v2725
        %v2730 = vpack.c.b16 %v2728, %v2727
        %v2734 = vsel %vm1036, %v2643, 0
        %2736 = vmatprep.subr.bf16.mxu0 0
        %2737 = vmatpush1.bf16.msra.mxu0 %v2729
        %2738 = vmatprep.subr.bf16.mxu0 0
        %2739 = vmatpush1.bf16.msra.mxu0 %v2730
        %2740 = vmatprep.subr.bf16.mxu0 0
        %2741 = vmatpush1.bf16.msra.mxu0 0
        %2742 = vmatprep.subr.bf16.mxu0 0
        %2743 = vmatpush1.bf16.msra.mxu0 0
        %2744 = vmatprep.subr.bf16.mxu0 0
        %2745 = vmatpush1.bf16.msra.mxu0 0
        %2746 = vmatprep.subr.bf16.mxu0 0
        %2747 = vmatpush1.bf16.msra.mxu0 0
        %2748 = vmatprep.subr.bf16.mxu0 0
        %2749 = vmatpush1.bf16.msra.mxu0 0
        %2750 = vmatprep.subr.bf16.mxu0 0
        %2751 = vmatpush1.bf16.msra.mxu0 0
        %2752 = vmatprep.subr.bf16.mxu0 0
        %2753 = vmatpush1.bf16.msra.mxu0 0
        %2754 = vmatprep.subr.bf16.mxu0 0
        %2755 = vmatpush1.bf16.msra.mxu0 0
        %2756 = vmatprep.subr.bf16.mxu0 0
        %2757 = vmatpush1.bf16.msra.mxu0 0
        %2758 = vmatprep.subr.bf16.mxu0 0
        %2759 = vmatpush1.bf16.msra.mxu0 0
        %2760 = vmatprep.subr.bf16.mxu0 0
        %2761 = vmatpush1.bf16.msra.mxu0 0
        %2762 = vmatprep.subr.bf16.mxu0 0
        %2763 = vmatpush1.bf16.msra.mxu0 0
        %2764 = vmatprep.subr.bf16.mxu0 0
        %2765 = vmatpush1.bf16.msra.mxu0 0
        %2766 = vmatprep.subr.bf16.mxu0 0
        %2767 = vmatpush1.bf16.msra.mxu0 0
        %2768 = vmatprep.mubr.bf16.mxu0 0
        %2769 = vmatmul.mubr.bf16.gmra.mrb[0].mxu0 %v2734
        %v2770 = vpop.f32.mrb[0].mxu0
        %v2771 = vadd.f32 %v2715, %v2770
        %v2772 = vpop.f32.mrb[0].mxu0
        %v2773 = vpop.f32.mrb[0].mxu0
        %v2774 = vadd.f32 %v2718, %v2773
        %v2775 = vpop.f32.mrb[0].mxu0
        %2776 = vdwg.mxu0
        %s2777 = scalar_lea.vmem %s942, 32
        %v2778 = vld [vmem:[%s2777] sm:$0xf]
        %v2779 = vld [vmem:[%s2777 + $0x4] sm:$0xf]
        %v2780 = vld [vmem:[%s2777 + $0x8] sm:$0xf]
        %v2781 = vld [vmem:[%s2777 + $0xc] sm:$0xf]
        %v2782 = vpack.c.bf16 %v2596, %v2595
        %v2787 = vunpack.c.l.b16 %v2778
        %v2788 = vunpack.c.l.b16 %v2779
        %v2789 = vunpack.c.l.b16 %v2780
        %v2790 = vunpack.c.l.b16 %v2781
        %v2791 = vpack.c.b16 %v2788, %v2787
        %v2792 = vpack.c.b16 %v2790, %v2789
        %v2796 = vsel %vm1036, %v2782, 0
        %2798 = vmatprep.subr.bf16.mxu0 0
        %2799 = vmatpush1.bf16.msra.mxu0 %v2791
        %2800 = vmatprep.subr.bf16.mxu0 0
        %2801 = vmatpush1.bf16.msra.mxu0 %v2792
        %2802 = vmatprep.subr.bf16.mxu0 0
        %2803 = vmatpush1.bf16.msra.mxu0 0
        %2804 = vmatprep.subr.bf16.mxu0 0
        %2805 = vmatpush1.bf16.msra.mxu0 0
        %2806 = vmatprep.subr.bf16.mxu0 0
        %2807 = vmatpush1.bf16.msra.mxu0 0
        %2808 = vmatprep.subr.bf16.mxu0 0
        %2809 = vmatpush1.bf16.msra.mxu0 0
        %2810 = vmatprep.subr.bf16.mxu0 0
        %2811 = vmatpush1.bf16.msra.mxu0 0
        %2812 = vmatprep.subr.bf16.mxu0 0
        %2813 = vmatpush1.bf16.msra.mxu0 0
        %2814 = vmatprep.subr.bf16.mxu0 0
        %2815 = vmatpush1.bf16.msra.mxu0 0
        %2816 = vmatprep.subr.bf16.mxu0 0
        %2817 = vmatpush1.bf16.msra.mxu0 0
        %2818 = vmatprep.subr.bf16.mxu0 0
        %2819 = vmatpush1.bf16.msra.mxu0 0
        %2820 = vmatprep.subr.bf16.mxu0 0
        %2821 = vmatpush1.bf16.msra.mxu0 0
        %2822 = vmatprep.subr.bf16.mxu0 0
        %2823 = vmatpush1.bf16.msra.mxu0 0
        %2824 = vmatprep.subr.bf16.mxu0 0
        %2825 = vmatpush1.bf16.msra.mxu0 0
        %2826 = vmatprep.subr.bf16.mxu0 0
        %2827 = vmatpush1.bf16.msra.mxu0 0
        %2828 = vmatprep.subr.bf16.mxu0 0
        %2829 = vmatpush1.bf16.msra.mxu0 0
        %2830 = vmatprep.mubr.bf16.mxu0 0
        %2831 = vmatmul.mubr.bf16.gmra.mrb[0].mxu0 %v2796
        %v2832 = vpop.f32.mrb[0].mxu0
        %v2833 = vadd.f32 0.0, %v2832
        %v2834 = vpop.f32.mrb[0].mxu0
        %v2835 = vpop.f32.mrb[0].mxu0
        %v2836 = vadd.f32 0.0, %v2835
        %v2837 = vpop.f32.mrb[0].mxu0
        %2838 = vdwg.mxu0
        %v2839 = vadd.f32 %v2771, %v2833
        %v2840 = vadd.f32 %v2774, %v2836
        %v2841 = vld [vmem:[%s761] sm:$0x1]
        %v2843 = vlaneseq
        %v2844 = vshrl.u32 %v2843, 7
        %v2845 = vsub.s32 0, %v2844
        %v2846 = vrot.slane %v2841, %v2845
        %v2848 = vadd.f32 %v2839, %v2846
        %v2849 = vadd.f32 %v2840, %v2846
        %v2850 = vmax.f32 %v2848, 0.0
        %v2851 = vmax.f32 %v2849, 0.0
        %v2854 = vrot.slane %v2850, 6
        %v2855 = vrot.slane %v2851, 6
        %v2856 = vsel %vm2624, %v2854, %v2855
        %v2859 = vsel %vm2624, 0.0, %v2854
        %v2860 = vsel %vm2635, 0.0, %v2859
        %v2861 = vsel %vm2636, 0.0, %v2856
        %v2862 = vld [vmem:[%s947] sm:$0xf]
        %v2863 = vld [vmem:[%s947 + $0x4] sm:$0xf]
        %v2864 = vld [vmem:[%s947 + $0x8] sm:$0xf]
        %v2865 = vld [vmem:[%s947 + $0xc] sm:$0xf]
        %v2866 = vld [vmem:[%s947 + $0x10] sm:$0xf]
        %v2867 = vld [vmem:[%s947 + $0x14] sm:$0xf]
        %v2868 = vld [vmem:[%s947 + $0x18] sm:$0xf]
        %v2869 = vld [vmem:[%s947 + $0x1c] sm:$0xf]
        %v2870 = vpack.c.bf16 %v2861, %v2860
        %v2871 = vrot.slane %v2850, 7
        %v2872 = vrot.slane %v2851, 7
        %v2873 = vsel %vm2644, %v2871, %v2872
        %v2876 = vsel %vm2644, 0.0, %v2871
        %v2877 = vsel %vm2655, 0.0, %v2876
        %v2878 = vsel %vm2656, 0.0, %v2873
        %s2879 = scalar_lea.vmem %s947, 32
        %v2880 = vld [vmem:[%s2879] sm:$0xf]
        %v2881 = vld [vmem:[%s2879 + $0x4] sm:$0xf]
        %v2882 = vld [vmem:[%s2879 + $0x8] sm:$0xf]
        %v2883 = vld [vmem:[%s2879 + $0xc] sm:$0xf]
        %v2884 = vld [vmem:[%s2879 + $0x10] sm:$0xf]
        %v2885 = vld [vmem:[%s2879 + $0x14] sm:$0xf]
        %v2886 = vld [vmem:[%s2879 + $0x18] sm:$0xf]
        %v2887 = vld [vmem:[%s2879 + $0x1c] sm:$0xf]
        %v2888 = vpack.c.bf16 %v2878, %v2877
        %v2897 = vunpack.c.l.b16 %v2880
        %v2898 = vunpack.c.l.b16 %v2881
        %v2899 = vunpack.c.l.b16 %v2882
        %v2900 = vunpack.c.l.b16 %v2883
        %v2901 = vunpack.c.l.b16 %v2884
        %v2902 = vunpack.c.l.b16 %v2885
        %v2903 = vunpack.c.l.b16 %v2886
        %v2904 = vunpack.c.l.b16 %v2887
        %v2905 = vpack.c.b16 %v2898, %v2897
        %v2906 = vpack.c.b16 %v2900, %v2899
        %v2907 = vpack.c.b16 %v2902, %v2901
        %v2908 = vpack.c.b16 %v2904, %v2903
        %vm2913 = vcmask 523264
        %v2915 = vsel %vm2913, %v2888, 0
        %2917 = vmatprep.subr.bf16.mxu0 0
        %2918 = vmatpush1.bf16.msra.mxu0 %v2905
        %2919 = vmatprep.subr.bf16.mxu0 0
        %2920 = vmatpush1.bf16.msra.mxu0 %v2906
        %2921 = vmatprep.subr.bf16.mxu0 0
        %2922 = vmatpush1.bf16.msra.mxu0 %v2907
        %2923 = vmatprep.subr.bf16.mxu0 0
        %2924 = vmatpush1.bf16.msra.mxu0 %v2908
        %2925 = vmatprep.subr.bf16.mxu0 0
        %2926 = vmatpush1.bf16.msra.mxu0 0
        %2927 = vmatprep.subr.bf16.mxu0 0
        %2928 = vmatpush1.bf16.msra.mxu0 0
        %2929 = vmatprep.subr.bf16.mxu0 0
        %2930 = vmatpush1.bf16.msra.mxu0 0
        %2931 = vmatprep.subr.bf16.mxu0 0
        %2932 = vmatpush1.bf16.msra.mxu0 0
        %2933 = vmatprep.subr.bf16.mxu0 0
        %2934 = vmatpush1.bf16.msra.mxu0 0
        %2935 = vmatprep.subr.bf16.mxu0 0
        %2936 = vmatpush1.bf16.msra.mxu0 0
        %2937 = vmatprep.subr.bf16.mxu0 0
        %2938 = vmatpush1.bf16.msra.mxu0 0
        %2939 = vmatprep.subr.bf16.mxu0 0
        %2940 = vmatpush1.bf16.msra.mxu0 0
        %2941 = vmatprep.subr.bf16.mxu0 0
        %2942 = vmatpush1.bf16.msra.mxu0 0
        %2943 = vmatprep.subr.bf16.mxu0 0
        %2944 = vmatpush1.bf16.msra.mxu0 0
        %2945 = vmatprep.subr.bf16.mxu0 0
        %2946 = vmatpush1.bf16.msra.mxu0 0
        %2947 = vmatprep.subr.bf16.mxu0 0
        %2948 = vmatpush1.bf16.msra.mxu0 0
        %2949 = vmatprep.mubr.bf16.mxu0 0
        %2950 = vmatmul.mubr.bf16.gmra.mrb[0].mxu0 %v2915
        %v2951 = vpop.f32.mrb[0].mxu0
        %v2952 = vadd.f32 0.0, %v2951
        %v2953 = vpop.f32.mrb[0].mxu0
        %v2954 = vpop.f32.mrb[0].mxu0
        %v2955 = vadd.f32 0.0, %v2954
        %v2956 = vpop.f32.mrb[0].mxu0
        %2957 = vdwg.mxu0
        %v2966 = vunpack.c.l.b16 %v2862
        %v2967 = vunpack.c.l.b16 %v2863
        %v2968 = vunpack.c.l.b16 %v2864
        %v2969 = vunpack.c.l.b16 %v2865
        %v2970 = vunpack.c.l.b16 %v2866
        %v2971 = vunpack.c.l.b16 %v2867
        %v2972 = vunpack.c.l.b16 %v2868
        %v2973 = vunpack.c.l.b16 %v2869
        %v2974 = vpack.c.b16 %v2967, %v2966
        %v2975 = vpack.c.b16 %v2969, %v2968
        %v2976 = vpack.c.b16 %v2971, %v2970
        %v2977 = vpack.c.b16 %v2973, %v2972
        %v2983 = vsel %vm2913, %v2870, 0
        %2985 = vmatprep.subr.bf16.mxu0 0
        %2986 = vmatpush1.bf16.msra.mxu0 %v2974
        %2987 = vmatprep.subr.bf16.mxu0 0
        %2988 = vmatpush1.bf16.msra.mxu0 %v2975
        %2989 = vmatprep.subr.bf16.mxu0 0
        %2990 = vmatpush1.bf16.msra.mxu0 %v2976
        %2991 = vmatprep.subr.bf16.mxu0 0
        %2992 = vmatpush1.bf16.msra.mxu0 %v2977
        %2993 = vmatprep.subr.bf16.mxu0 0
        %2994 = vmatpush1.bf16.msra.mxu0 0
        %2995 = vmatprep.subr.bf16.mxu0 0
        %2996 = vmatpush1.bf16.msra.mxu0 0
        %2997 = vmatprep.subr.bf16.mxu0 0
        %2998 = vmatpush1.bf16.msra.mxu0 0
        %2999 = vmatprep.subr.bf16.mxu0 0
        %3000 = vmatpush1.bf16.msra.mxu0 0
        %3001 = vmatprep.subr.bf16.mxu0 0
        %3002 = vmatpush1.bf16.msra.mxu0 0
        %3003 = vmatprep.subr.bf16.mxu0 0
        %3004 = vmatpush1.bf16.msra.mxu0 0
        %3005 = vmatprep.subr.bf16.mxu0 0
        %3006 = vmatpush1.bf16.msra.mxu0 0
        %3007 = vmatprep.subr.bf16.mxu0 0
        %3008 = vmatpush1.bf16.msra.mxu0 0
        %3009 = vmatprep.subr.bf16.mxu0 0
        %3010 = vmatpush1.bf16.msra.mxu0 0
        %3011 = vmatprep.subr.bf16.mxu0 0
        %3012 = vmatpush1.bf16.msra.mxu0 0
        %3013 = vmatprep.subr.bf16.mxu0 0
        %3014 = vmatpush1.bf16.msra.mxu0 0
        %3015 = vmatprep.subr.bf16.mxu0 0
        %3016 = vmatpush1.bf16.msra.mxu0 0
        %3017 = vmatprep.mubr.bf16.mxu0 0
        %3018 = vmatmul.mubr.bf16.gmra.mrb[0].mxu0 %v2983
        %v3019 = vpop.f32.mrb[0].mxu0
        %v3020 = vadd.f32 %v2952, %v3019
        %v3021 = vpop.f32.mrb[0].mxu0
        %v3022 = vpop.f32.mrb[0].mxu0
        %v3023 = vadd.f32 %v2955, %v3022
        %v3024 = vpop.f32.mrb[0].mxu0
        %3025 = vdwg.mxu0
        %s3026 = scalar_lea.vmem %s947, 64
        %v3027 = vld [vmem:[%s3026] sm:$0xf]
        %v3028 = vld [vmem:[%s3026 + $0x4] sm:$0xf]
        %v3029 = vld [vmem:[%s3026 + $0x8] sm:$0xf]
        %v3030 = vld [vmem:[%s3026 + $0xc] sm:$0xf]
        %v3031 = vld [vmem:[%s3026 + $0x10] sm:$0xf]
        %v3032 = vld [vmem:[%s3026 + $0x14] sm:$0xf]
        %v3033 = vld [vmem:[%s3026 + $0x18] sm:$0xf]
        %v3034 = vld [vmem:[%s3026 + $0x1c] sm:$0xf]
        %v3035 = vpack.c.bf16 %v2851, %v2850
        %v3044 = vunpack.c.l.b16 %v3027
        %v3045 = vunpack.c.l.b16 %v3028
        %v3046 = vunpack.c.l.b16 %v3029
        %v3047 = vunpack.c.l.b16 %v3030
        %v3048 = vunpack.c.l.b16 %v3031
        %v3049 = vunpack.c.l.b16 %v3032
        %v3050 = vunpack.c.l.b16 %v3033
        %v3051 = vunpack.c.l.b16 %v3034
        %v3052 = vpack.c.b16 %v3045, %v3044
        %v3053 = vpack.c.b16 %v3047, %v3046
        %v3054 = vpack.c.b16 %v3049, %v3048
        %v3055 = vpack.c.b16 %v3051, %v3050
        %v3061 = vsel %vm2913, %v3035, 0
        %3063 = vmatprep.subr.bf16.mxu0 0
        %3064 = vmatpush1.bf16.msra.mxu0 %v3052
        %3065 = vmatprep.subr.bf16.mxu0 0
        %3066 = vmatpush1.bf16.msra.mxu0 %v3053
        %3067 = vmatprep.subr.bf16.mxu0 0
        %3068 = vmatpush1.bf16.msra.mxu0 %v3054
        %3069 = vmatprep.subr.bf16.mxu0 0
        %3070 = vmatpush1.bf16.msra.mxu0 %v3055
        %3071 = vmatprep.subr.bf16.mxu0 0
        %3072 = vmatpush1.bf16.msra.mxu0 0
        %3073 = vmatprep.subr.bf16.mxu0 0
        %3074 = vmatpush1.bf16.msra.mxu0 0
        %3075 = vmatprep.subr.bf16.mxu0 0
        %3076 = vmatpush1.bf16.msra.mxu0 0
        %3077 = vmatprep.subr.bf16.mxu0 0
        %3078 = vmatpush1.bf16.msra.mxu0 0
        %3079 = vmatprep.subr.bf16.mxu0 0
        %3080 = vmatpush1.bf16.msra.mxu0 0
        %3081 = vmatprep.subr.bf16.mxu0 0
        %3082 = vmatpush1.bf16.msra.mxu0 0
        %3083 = vmatprep.subr.bf16.mxu0 0
        %3084 = vmatpush1.bf16.msra.mxu0 0
        %3085 = vmatprep.subr.bf16.mxu0 0
        %3086 = vmatpush1.bf16.msra.mxu0 0
        %3087 = vmatprep.subr.bf16.mxu0 0
        %3088 = vmatpush1.bf16.msra.mxu0 0
        %3089 = vmatprep.subr.bf16.mxu0 0
        %3090 = vmatpush1.bf16.msra.mxu0 0
        %3091 = vmatprep.subr.bf16.mxu0 0
        %3092 = vmatpush1.bf16.msra.mxu0 0
        %3093 = vmatprep.subr.bf16.mxu0 0
        %3094 = vmatpush1.bf16.msra.mxu0 0
        %3095 = vmatprep.mubr.bf16.mxu0 0
        %3096 = vmatmul.mubr.bf16.gmra.mrb[0].mxu0 %v3061
        %v3097 = vpop.f32.mrb[0].mxu0
        %v3098 = vadd.f32 0.0, %v3097
        %v3099 = vpop.f32.mrb[0].mxu0
        %v3100 = vpop.f32.mrb[0].mxu0
        %v3101 = vadd.f32 0.0, %v3100
        %v3102 = vpop.f32.mrb[0].mxu0
        %3103 = vdwg.mxu0
        %v3104 = vadd.f32 %v3020, %v3098
        %v3105 = vadd.f32 %v3023, %v3101
        %v3106 = vld [vmem:[%s769] sm:$0x1]
        %v3108 = vlaneseq
        %v3109 = vshrl.u32 %v3108, 7
        %v3110 = vsub.s32 0, %v3109
        %v3111 = vrot.slane %v3106, %v3110
        %v3113 = vadd.f32 %v3104, %v3111
        %v3114 = vadd.f32 %v3105, %v3111
        %v3115 = vadd.f32 %v2535, %v3113
        %v3116 = vadd.f32 %v2536, %v3114
        %3117 = vst.msk [vmem:[#allocation2] sm:$0xff] %vm1036, %v3115
        %3118 = vst.msk [vmem:[#allocation2 + $0x8] sm:$0xff] %vm1036, %v3116
        // Predicated region
        $region117: #{decoder_forward.1} parent=95 // pred_check
          %p3119 = pneg %p2537
        $region118: #{decoder_forward.1} parent=95 // pred_check_branch
          %3121 = sbr.rel (%p3119) target = $region120
        $region119: #{decoder_forward.1} parent=95 // pred_region
          %v3122 = vld [vmem:[%s17] sm:$0x1]
          %v3123 = vld [vmem:[#allocation8] sm:$0x1]
          %v3124 = vsel %vm1036, %v3115, 0.0
          %3125 = vadd.xlane.f32.xlu0 %v3124
          %v3126 = vpop.xlane.xlu0 %3125
          %v3127 = vsel %vm1036, %v3116, 0.0
          %3128 = vadd.xlane.f32.xlu0 %v3127
          %v3129 = vpop.xlane.xlu0 %3128
          %v3130 = vmul.f32 %v3126, %v1043
          %v3131 = vmul.f32 %v3129, %v1043
          %v3132 = vsub.f32 %v3115, %v3130
          %v3133 = vsub.f32 %v3116, %v3131
          %v3134 = vmul.f32 %v3132, %v3132
          %v3135 = vmul.f32 %v3133, %v3133
          %v3136 = vsel %vm1036, %v3134, 0.0
          %3137 = vadd.xlane.f32.xlu0 %v3136
          %v3138 = vpop.xlane.xlu0 %3137
          %v3139 = vsel %vm1036, %v3135, 0.0
          %3140 = vadd.xlane.f32.xlu0 %v3139
          %v3141 = vpop.xlane.xlu0 %3140
          %v3142 = vmul.f32 %v3138, %v1056
          %v3143 = vmul.f32 %v3141, %v1056
          %v3144 = vrsqrt.pop %v3142
          %v3145 = vmul.f32 %v3142, %v3144
          %vm3146 = vcmp.eq.f32.partialorder %v3142, inf
          %v3147 = vsel %vm3146, %v3142, %v3145
          %vm3148 = vcmp.eq.f32.partialorder %v3142, 0.0
          %v3149 = vand.u32 %v3142, 2147483648
          %v3150 = vsel %vm3148, %v3149, %v3147
          %v3151 = vrsqrt.pop %v3143
          %v3152 = vmul.f32 %v3143, %v3151
          %vm3153 = vcmp.eq.f32.partialorder %v3143, inf
          %v3154 = vsel %vm3153, %v3143, %v3152
          %vm3155 = vcmp.eq.f32.partialorder %v3143, 0.0
          %v3156 = vand.u32 %v3143, 2147483648
          %v3157 = vsel %vm3155, %v3156, %v3154
          %v3159 = vlaneseq
          %v3160 = vshrl.u32 %v3159, 7
          %v3161 = vsub.s32 0, %v3160
          %v3162 = vrot.slane %v3122, %v3161
          %v3164 = vmul.f32 %v3162, %v3132
          %v3165 = vmul.f32 %v3162, %v3133
          %v3166 = vadd.f32 %v3150, 1e-06
          %v3167 = vadd.f32 %v3157, 1e-06
          %v3168 = vrcp.pop %v3166
          %v3169 = vrcp.pop %v3167
          %v3170 = vmul.f32 %v3164, %v3168
          %v3171 = vmul.f32 %v3165, %v3169
          %v3173 = vlaneseq
          %v3174 = vshrl.u32 %v3173, 7
          %v3175 = vsub.s32 0, %v3174
          %v3176 = vrot.slane %v3123, %v3175
          %v3178 = vadd.f32 %v3170, %v3176
          %v3179 = vadd.f32 %v3171, %v3176
          %3180 = vst.msk [vmem:[#allocation9] sm:$0xff] %vm1036, %v3178
          %3181 = vst.msk [vmem:[#allocation9 + $0x8] sm:$0xff] %vm1036, %v3179
        $region120: #{decoder_forward.1} parent=95 // pred_fallthru
          _
        // Predicated region
        $region121: #{decoder_forward.1} parent=95 // pred_check
          %p3182 = pneg %p544
        $region122: #{decoder_forward.1} parent=95 // pred_check_branch
          %3184 = sbr.rel (%p3182) target = $region124
        $region123: #{decoder_forward.1} parent=95 // pred_region
          %s3185 = smul.u32 2, %s44
          %s3187 = ssub.s32 256, 256
          %3188 = vsyncadd [#allocation5], %s3187
          %s3189 = smul.addr %s3185, 128
          %s3190 = scalar_lea.hbm %s19, %s3189
          %s3191 = sshll.u32 [#allocation9], 4
          %s3192 = int_to_ptr.vmem [resolvable:$true] %s3191
          %3197 = dma.vmem_to_hbm [thread:$0]  %s3192, 256, %s3190, [#allocation5], 128, 128, 8
        $region124: #{decoder_forward.1} parent=95 // pred_fallthru
          _
        // Predicated region
        $region125: #{decoder_forward.1} parent=95 // pred_check
          %p3198 = pneg %p570
        $region126: #{decoder_forward.1} parent=95 // pred_check_branch
          %3200 = sbr.rel (%p3198) target = $region128
        $region127: #{decoder_forward.1} parent=95 // pred_region
          %s3201 = smul.u32 2, %s44
          %s3203 = ssub.s32 256, 256
          %3204 = vsyncadd [#allocation11], %s3203
          %s3205 = smul.addr %s3201, 128
          %s3206 = scalar_lea.hbm %s20, %s3205
          %s3207 = sshll.u32 [#allocation10], 4
          %s3208 = int_to_ptr.vmem [resolvable:$true] %s3207
          %3213 = dma.vmem_to_hbm [thread:$0]  %s3208, 256, %s3206, [#allocation11], 128, 128, 8
        $region128: #{decoder_forward.1} parent=95 // pred_fallthru
          _
        // Predicated region
        $region129: #{decoder_forward.1} parent=95 // pred_check
          %p3214 = pneg %p544
        $region130: #{decoder_forward.1} parent=95 // pred_check_branch
          %3216 = sbr.rel (%p3214) target = $region132
        $region131: #{decoder_forward.1} parent=95 // pred_region
          %3217 = dma.done [#allocation5], 256
        $region132: #{decoder_forward.1} parent=95 // pred_fallthru
          _
        // Predicated region
        $region133: #{decoder_forward.1} parent=95 // pred_check
          %p3218 = pneg %p570
        $region134: #{decoder_forward.1} parent=95 // pred_check_branch
          %3220 = sbr.rel (%p3218) target = $region136
        $region135: #{decoder_forward.1} parent=95 // pred_region
          %3221 = dma.done [#allocation11], 256
        $region136: #{decoder_forward.1} parent=95 // pred_fallthru
          _
      $region96: #{decoder_forward.1} parent=5 // pred_fallthru
        _
      %p3222 = scmp.le.s32.totalorder 2, %s35
      // Predicated region
      $region137: #{decoder_forward.1} parent=5 // pred_check
        %p3223 = pneg %p3222
      $region138: #{decoder_forward.1} parent=5 // pred_check_branch
        %3225 = sbr.rel (%p3223) target = $region140
      $region139: #{decoder_forward.1} parent=5 // pred_region
        %s3226 = ssub.s32 %s35, 2
      $region140: #{decoder_forward.1} parent=5 // pred_fallthru
        _
    $region6: #{decoder_forward.1} parent=1 // loop_footer
      %s39 = sadd.s32 1, %s35
    $region7: #{decoder_forward.1} parent=1 // loop_footer_branch
      %34 = sbr.rel target = $region3
    $region8: #{decoder_forward.1} parent=1 // loop_exit
      _
    %3227 = vsyncpa [#allocation4], 1
    %s3228 = scalar_lea.sflag [#allocation4], 1
    %3229 = vsyncpa %s3228, 1
    %3230 = vsyncpa [#allocation7], 1
    %s3231 = scalar_lea.sflag [#allocation7], 1
    %3232 = vsyncpa %s3231, 1
    %3233 = vsyncpa [#allocation5], 1
    %s3234 = scalar_lea.sflag [#allocation5], 1
    %3235 = vsyncpa %s3234, 1
    %3236 = vsyncpa [#allocation11], 1

</llo_original>
